<compile_context>
chip_gen: v7x
topology: tpu7x:2x2x1
jax: 0.10.0
libtpu: 0.0.40
codegen_flags: <defaults>
</compile_context>

<pallas_src>
import functools

import jax
import jax.numpy as jnp
from jax.experimental import pallas as pl
from jax.experimental.pallas import tpu as pltpu


# ----------------------------------------------------------------------------
# small helpers
# ----------------------------------------------------------------------------
def _round_up(x, m):
    return ((x + m - 1) // m) * m


def _pick_tile(size, cap, quantum):
    """Largest multiple of `quantum` that divides `size` (a multiple of quantum)
    and is <= cap."""
    t = min(cap, size)
    t = (t // quantum) * quantum
    while size % t:
        t -= quantum
    return t


_VMEM_LIMIT = 32 * 1024 * 1024  # safe on v5e/v6e (128 MiB) and v7x (64 MiB)


# ----------------------------------------------------------------------------
# Tiled matmul kernels: o = act(a @ b + bias [+ residual])
# ----------------------------------------------------------------------------
def _mm_kernel(a_ref, b_ref, bias_ref, o_ref, acc_ref, *, act):
    k = pl.program_id(2)

    @pl.when(k == 0)
    def _init():
        acc_ref[...] = jnp.zeros_like(acc_ref)

    acc_ref[...] += jnp.dot(a_ref[...], b_ref[...],
                            preferred_element_type=jnp.float32)

    @pl.when(k == pl.num_programs(2) - 1)
    def _fin():
        acc = acc_ref[...] + bias_ref[...]            # f32 epilogue
        if act == "relu":
            acc = jnp.maximum(acc, 0.0)
        elif act == "sigmoid":
            acc = jax.nn.sigmoid(acc)
        o_ref[...] = acc.astype(o_ref.dtype)


def _mm_res_kernel(a_ref, b_ref, bias_ref, r_ref, o_ref, acc_ref, *, act):
    k = pl.program_id(2)

    @pl.when(k == 0)
    def _init():
        acc_ref[...] = jnp.zeros_like(acc_ref)

    acc_ref[...] += jnp.dot(a_ref[...], b_ref[...],
                            preferred_element_type=jnp.float32)

    @pl.when(k == pl.num_programs(2) - 1)
    def _fin():
        acc = acc_ref[...] + bias_ref[...] + r_ref[...].astype(jnp.float32)
        if act == "relu":
            acc = jnp.maximum(acc, 0.0)
        elif act == "sigmoid":
            acc = jax.nn.sigmoid(acc)
        o_ref[...] = acc.astype(o_ref.dtype)


def matmul_bias_act(a, b, bias, act="none", residual=None,
                    out_dtype=jnp.bfloat16):
    """act((M,K) @ (K,N) + bias [+ residual]) with lane-dense padded tiling."""
    M, K = a.shape
    K2, N = b.shape
    assert K == K2

    Mp = _round_up(M, 8)
    Np = _round_up(N, 128)
    Kp = _round_up(K, 128)
    TM = _pick_tile(Mp, 256, 8)
    TN = _pick_tile(Np, 256, 128)
    TK = _pick_tile(Kp, 512, 128)

    a_p = jnp.pad(a.astype(jnp.bfloat16), ((0, Mp - M), (0, Kp - K)))
    b_p = jnp.pad(b.astype(jnp.bfloat16), ((0, Kp - K), (0, Np - N)))
    bias_p = jnp.pad(bias.astype(jnp.float32).reshape(1, -1),
                     ((0, 0), (0, Np - N)))

    in_specs = [
        pl.BlockSpec((TM, TK), lambda i, j, k: (i, k)),
        pl.BlockSpec((TK, TN), lambda i, j, k: (k, j)),
        pl.BlockSpec((1, TN), lambda i, j, k: (0, j)),
    ]
    args = [a_p, b_p, bias_p]
    if residual is not None:
        r_p = jnp.pad(residual.astype(jnp.bfloat16),
                      ((0, Mp - M), (0, Np - N)))
        in_specs.append(pl.BlockSpec((TM, TN), lambda i, j, k: (i, j)))
        args.append(r_p)
        kern = functools.partial(_mm_res_kernel, act=act)
    else:
        kern = functools.partial(_mm_kernel, act=act)

    out = pl.pallas_call(
        kern,
        out_shape=jax.ShapeDtypeStruct((Mp, Np), out_dtype),
        grid=(Mp // TM, Np // TN, Kp // TK),
        in_specs=in_specs,
        out_specs=pl.BlockSpec((TM, TN), lambda i, j, k: (i, j)),
        scratch_shapes=[pltpu.VMEM((TM, TN), jnp.float32)],
        compiler_params=pltpu.CompilerParams(
            dimension_semantics=("parallel", "parallel", "arbitrary"),
            vmem_limit_bytes=_VMEM_LIMIT),
    )(*args)
    return out[:M, :N]


# ----------------------------------------------------------------------------
# Fused quantize_conv (1x1) + vector quantizer kernel (row-tiled)
# ----------------------------------------------------------------------------
def _vq_kernel(h_ref, wq_ref, bq_ref, cb_ref, csq_ref, zq_ref, sse_ref,
               *, n_valid):
    r = pl.program_id(0)
    tr = h_ref.shape[0]

    # fused 1x1 quantize_conv: z = h @ Wq + bq  (bf16 MXU, f32 accumulate)
    z = jnp.dot(h_ref[...], wq_ref[...],
                preferred_element_type=jnp.float32) + bq_ref[...]     # (tr, Dp)

    e = cb_ref[...]                                                   # (Kp, Dp) f32
    # distance proxy ||e||^2 - 2 z.e  (||z||^2 constant per row -> argmin safe)
    scores = jnp.dot(z, e.T, preferred_element_type=jnp.float32)      # (tr, Kp)
    dist = csq_ref[...] - 2.0 * scores                                # (tr, Kp)

    k_iota = jax.lax.broadcasted_iota(jnp.int32, dist.shape, 1)
    min_d = jnp.min(dist, axis=1, keepdims=True)
    idx = jnp.min(jnp.where(dist <= min_d, k_iota, dist.shape[1]), axis=1)
    onehot = (k_iota == idx[:, None]).astype(jnp.float32)             # (tr, Kp)
    zq = jnp.dot(onehot, e, preferred_element_type=jnp.float32)       # (tr, Dp)

    zq_ref[...] = zq.astype(zq_ref.dtype)

    # masked commitment SSE (padded rows / padded dims contribute zero)
    row = r * tr + jax.lax.broadcasted_iota(jnp.int32, (tr, 1), 0)
    valid = (row < n_valid).astype(jnp.float32)
    partial = jnp.sum(((zq - z) ** 2) * valid)

    @pl.when(r == 0)
    def _init():
        sse_ref[...] = jnp.zeros_like(sse_ref)

    sse_ref[...] += jnp.reshape(partial, (1, 1))


def vq_quantize_fused(h_flat, wq, bq, codebook):
    """h_flat: (N, 4*n_hid); wq: (4*n_hid, D); bq: (D,); codebook: (n_embed, D)."""
    Nr, Cin = h_flat.shape
    D = wq.shape[1]
    n_embed = codebook.shape[0]

    Cp = _round_up(Cin, 128)
    Dp = _round_up(D, 128)
    Kp = _round_up(n_embed, 128)
    Nrp = _round_up(Nr, 8)
    TR = _pick_tile(Nrp, 256, 8)

    h_p = jnp.pad(h_flat.astype(jnp.bfloat16), ((0, Nrp - Nr), (0, Cp - Cin)))
    wq_p = jnp.pad(wq.astype(jnp.bfloat16), ((0, Cp - Cin), (0, Dp - D)))
    bq_p = jnp.pad(bq.astype(jnp.float32).reshape(1, -1),
                   ((0, 0), (0, Dp - D)))
    cb_p = jnp.pad(codebook.astype(jnp.float32),
                   ((0, Kp - n_embed), (0, Dp - D)))
    if Kp > n_embed:  # sentinel rows -> enormous distance, never selected
        cb_p = cb_p.at[n_embed:, :].set(1e4)
    cb_sq = jnp.sum(cb_p * cb_p, axis=1).reshape(1, Kp)               # (1, Kp)

    zq_p, sse = pl.pallas_call(
        functools.partial(_vq_kernel, n_valid=Nr),
        out_shape=(jax.ShapeDtypeStruct((Nrp, Dp), jnp.bfloat16),
                   jax.ShapeDtypeStruct((1, 1), jnp.float32)),
        grid=(Nrp // TR,),
        in_specs=[
            pl.BlockSpec((TR, Cp), lambda r: (r, 0)),
            pl.BlockSpec((Cp, Dp), lambda r: (0, 0)),
            pl.BlockSpec((1, Dp), lambda r: (0, 0)),
            pl.BlockSpec((Kp, Dp), lambda r: (0, 0)),
            pl.BlockSpec((1, Kp), lambda r: (0, 0)),
        ],
        out_specs=(
            pl.BlockSpec((TR, Dp), lambda r: (r, 0)),
            pl.BlockSpec((1, 1), lambda r: (0, 0)),
        ),
        compiler_params=pltpu.CompilerParams(
            dimension_semantics=("arbitrary",),
            vmem_limit_bytes=_VMEM_LIMIT),
    )(h_p, wq_p, bq_p, cb_p, cb_sq)

    zq = zq_p[:Nr, :D]
    diff = sse[0, 0] / (Nr * D)          # mean((zq - z)^2)
    return zq, diff


# ----------------------------------------------------------------------------
# Conv helpers (im2col glue in plain JAX, matmul in Pallas)
# ----------------------------------------------------------------------------
def _im2col(x, kh, kw, stride, pad):
    """x: (B,H,W,C) -> patches (B*Ho*Wo, kh*kw*C), ordering (kh, kw, C)."""
    if pad:
        x = jnp.pad(x, ((0, 0), (pad, pad), (pad, pad), (0, 0)))
    B, Hp, Wp, C = x.shape
    Ho = (Hp - kh) // stride + 1
    Wo = (Wp - kw) // stride + 1
    cols = []
    for i in range(kh):
        for j in range(kw):
            cols.append(x[:, i:i + stride * Ho:stride,
                          j:j + stride * Wo:stride, :])
    patches = jnp.concatenate(cols, axis=-1)
    return patches.reshape(B * Ho * Wo, kh * kw * C), (B, Ho, Wo)


def conv2d(x, w, b, *, stride, pad, act="none", residual=None):
    """x: NHWC; w: PyTorch conv weight (Cout, Cin, kh, kw); b: (Cout,)."""
    Cout, Cin, kh, kw = w.shape
    if kh == 1 and kw == 1 and stride == 1 and pad == 0:
        B, Ho, Wo, C = x.shape
        patches = x.reshape(B * Ho * Wo, C)
    else:
        patches, (B, Ho, Wo) = _im2col(x, kh, kw, stride, pad)
    wm = jnp.transpose(w, (2, 3, 1, 0)).reshape(kh * kw * Cin, Cout)
    res_flat = None
    if residual is not None:
        res_flat = residual.reshape(B * Ho * Wo, Cout)
    out = matmul_bias_act(patches, wm, b, act=act, residual=res_flat)
    return out.reshape(B, Ho, Wo, Cout)


def conv_transpose2d(x, w, b, *, act="none"):
    """ConvTranspose2d(k=4, stride=2, pad=1) via sub-pixel decomposition.

    w: PyTorch shape (Cin, Cout, 4, 4).  Output y[:, 2m+ph, 2n+pw, :] is a
    stride-1 2x2 conv of x with the (ph, pw) sub-kernel -> no dilated zeros.
    """
    Cin, Cout, _, _ = w.shape
    B, H, W, _ = x.shape
    sel = {0: [3, 1], 1: [2, 0]}   # kernel taps, earlier-input tap first
    phases = {}
    for ph in (0, 1):
        for pw in (0, 1):
            wk = w[:, :, sel[ph], :][:, :, :, sel[pw]]        # (Cin,Cout,2,2)
            wk = jnp.transpose(wk, (1, 0, 2, 3))              # (Cout,Cin,2,2)
            xp = jnp.pad(x, ((0, 0), (1 - ph, ph), (1 - pw, pw), (0, 0)))
            phases[(ph, pw)] = conv2d(xp, wk, b, stride=1, pad=0, act=act)
    top = jnp.stack([phases[(0, 0)], phases[(0, 1)]], axis=3).reshape(
        B, H, 2 * W, Cout)
    bot = jnp.stack([phases[(1, 0)], phases[(1, 1)]], axis=3).reshape(
        B, H, 2 * W, Cout)
    return jnp.stack([top, bot], axis=2).reshape(B, 2 * H, 2 * W, Cout)


# ----------------------------------------------------------------------------
# Parameters (deterministic init; shapes follow the PyTorch module)
# ----------------------------------------------------------------------------
def init_params(key, n_hid, embedding_dim, n_embed):
    def nrm(k, shape, scale=0.1):
        return scale * jax.random.normal(k, shape, dtype=jnp.float32)

    ks = jax.random.split(key, 32)
    p = {}
    # Encoder: 3 -> n_hid -> 2n_hid -> 4n_hid (4x downsample) + 2 residual blocks
    p["e_c1_w"] = nrm(ks[0], (n_hid, 3, 4, 4));              p["e_c1_b"] = jnp.zeros((n_hid,))
    p["e_c2_w"] = nrm(ks[1], (2 * n_hid, n_hid, 4, 4));      p["e_c2_b"] = jnp.zeros((2 * n_hid,))
    p["e_c3_w"] = nrm(ks[2], (4 * n_hid, 2 * n_hid, 3, 3));  p["e_c3_b"] = jnp.zeros((4 * n_hid,))
    for g in range(2):
        p[f"e_r{g}_w1"] = nrm(ks[3 + 2 * g], (n_hid, 4 * n_hid, 3, 3))
        p[f"e_r{g}_b1"] = jnp.zeros((n_hid,))
        p[f"e_r{g}_w2"] = nrm(ks[4 + 2 * g], (4 * n_hid, n_hid, 1, 1))
        p[f"e_r{g}_b2"] = jnp.zeros((4 * n_hid,))
    # quantize_conv: Conv2d(4*n_hid, embedding_dim, 1)  (fused into VQ kernel)
    p["q_w"] = nrm(ks[8], (embedding_dim, 4 * n_hid, 1, 1))
    p["q_b"] = jnp.zeros((embedding_dim,))
    # VectorQuantizer codebook: (n_embed, embedding_dim)
    p["codebook"] = nrm(ks[9], (n_embed, embedding_dim), scale=1.0)
    # Decoder: embedding_dim -> 4n_hid (+ 2 res blocks) -> 2n_hid -> 3 (4x up)
    p["d_c1_w"] = nrm(ks[10], (4 * n_hid, embedding_dim, 3, 3)); p["d_c1_b"] = jnp.zeros((4 * n_hid,))
    for g in range(2):
        p[f"d_r{g}_w1"] = nrm(ks[11 + 2 * g], (n_hid, 4 * n_hid, 3, 3))
        p[f"d_r{g}_b1"] = jnp.zeros((n_hid,))
        p[f"d_r{g}_w2"] = nrm(ks[12 + 2 * g], (4 * n_hid, n_hid, 1, 1))
        p[f"d_r{g}_b2"] = jnp.zeros((4 * n_hid,))
    p["d_t1_w"] = nrm(ks[15], (4 * n_hid, 2 * n_hid, 4, 4)); p["d_t1_b"] = jnp.zeros((2 * n_hid,))
    p["d_t2_w"] = nrm(ks[16], (2 * n_hid, 3, 4, 4));         p["d_t2_b"] = jnp.zeros((3,))
    return p


# ----------------------------------------------------------------------------
# Model forward (matches VQVAE.forward: returns (sigmoid(decoder(quant)), diff))
# ----------------------------------------------------------------------------
def _resblock(h, w1, b1, w2, b2):
    t = conv2d(h, w1, b1, stride=1, pad=1, act="relu")
    # residual add fused into the 1x1-conv epilogue
    return conv2d(t, w2, b2, stride=1, pad=0, act="none", residual=h)


def vqvae_forward(x_nchw, p):
    x = jnp.transpose(x_nchw, (0, 2, 3, 1)).astype(jnp.bfloat16)       # NHWC

    # ---- Encoder ----
    h = conv2d(x, p["e_c1_w"], p["e_c1_b"], stride=2, pad=1, act="relu")
    h = conv2d(h, p["e_c2_w"], p["e_c2_b"], stride=2, pad=1, act="relu")
    h = conv2d(h, p["e_c3_w"], p["e_c3_b"], stride=1, pad=1, act="relu")
    for g in range(2):
        h = _resblock(h, p[f"e_r{g}_w1"], p[f"e_r{g}_b1"],
                      p[f"e_r{g}_w2"], p[f"e_r{g}_b2"])

    # ---- quantize_conv (1x1) fused into the vector-quantizer kernel ----
    B, Hl, Wl, C = h.shape
    h_flat = h.reshape(B * Hl * Wl, C)
    wq = p["q_w"][:, :, 0, 0].T                                        # (4n_hid, D)
    zq_flat, diff = vq_quantize_fused(h_flat, wq, p["q_b"], p["codebook"])
    quant = zq_flat.reshape(B, Hl, Wl, -1)                             # (B,Hl,Wl,D)

    # ---- Decoder + sigmoid ----
    d = conv2d(quant, p["d_c1_w"], p["d_c1_b"], stride=1, pad=1, act="relu")
    for g in range(2):
        d = _resblock(d, p[f"d_r{g}_w1"], p[f"d_r{g}_b1"],
                      p[f"d_r{g}_w2"], p[f"d_r{g}_b2"])
    d = conv_transpose2d(d, p["d_t1_w"], p["d_t1_b"], act="relu")
    d = conv_transpose2d(d, p["d_t2_w"], p["d_t2_b"], act="sigmoid")   # fused sigmoid

    recon = jnp.transpose(d, (0, 3, 1, 2)).astype(jnp.float32)         # NCHW
    return recon, diff.astype(jnp.float32).reshape(1)                  # diff.unsqueeze(0)


# ----------------------------------------------------------------------------
if __name__ == "__main__":
    n_hid, embedding_dim, n_embed = 16, 32, 64
    key = jax.random.PRNGKey(0)
    k_par, k_x = jax.random.split(key)
    params = init_params(k_par, n_hid, embedding_dim, n_embed)

    x = jax.random.normal(k_x, (2, 3, 16, 16), dtype=jnp.float32)      # NCHW like PyTorch

    recon, diff = jax.jit(vqvae_forward)(x, params)
    jax.block_until_ready((recon, diff))

    assert recon.shape == (2, 3, 16, 16), recon.shape
    assert diff.shape == (1,), diff.shape
    assert bool(jnp.all(jnp.isfinite(recon))) and bool(jnp.all(jnp.isfinite(diff)))
    print("KERNEL_OK")
</pallas_src>

<mosaic_0001>
module attributes {stable_mosaic.version = 11 : i64} {
  func.func @_mm_kernel(%arg0: i32, %arg1: i32, %arg2: i32, %arg3: memref<128x128xbf16, #tpu.memory_space<vmem>>, %arg4: memref<128x128xbf16, #tpu.memory_space<vmem>>, %arg5: memref<1x128xf32, #tpu.memory_space<vmem>>, %arg6: memref<128x128xbf16, #tpu.memory_space<vmem>>, %arg7: memref<128x128xf32, #tpu.memory_space<vmem>>) attributes {dimension_semantics = [#tpu.dimension_semantics<parallel>, #tpu.dimension_semantics<parallel>, #tpu.dimension_semantics<arbitrary>], iteration_bounds = array<i64: 1, 1, 1>, scalar_prefetch = 0 : i64, scratch_operands = 1 : i64, tpu.core_type = #tpu.core_type<tc>, window_params = [{transform_indices = @transform_0, window_bounds = array<i64: 128, 128>}, {transform_indices = @transform_1, window_bounds = array<i64: 128, 128>}, {transform_indices = @transform_2, window_bounds = array<i64: 1, 128>}, {transform_indices = @transform_3, window_bounds = array<i64: 128, 128>}]} {
    %c0_i32 = arith.constant 0 : i32
    %0 = arith.cmpi eq, %arg2, %c0_i32 : i32
    %1 = arith.extui %0 : i1 to i32
    %c0_i32_0 = arith.constant 0 : i32
    %2 = arith.cmpi ne, %1, %c0_i32_0 : i32
    scf.if %2 {
      %cst_10 = arith.constant 0.000000e+00 : f32
      %12 = vector.broadcast %cst_10 : f32 to vector<128x128xf32>
      %c0_11 = arith.constant 0 : index
      %c0_12 = arith.constant 0 : index
      %13 = vector.load %arg7[%c0_11, %c0_12] : memref<128x128xf32, #tpu.memory_space<vmem>>, vector<128x128xf32>
      tpu.vector_store %arg7[%c0_11, %c0_12], %12 {strides = array<i32>} : memref<128x128xf32, #tpu.memory_space<vmem>>, vector<128x128xf32>,
    } else {
    }
    %c0 = arith.constant 0 : index
    %c0_1 = arith.constant 0 : index
    %3 = vector.load %arg7[%c0, %c0_1] : memref<128x128xf32, #tpu.memory_space<vmem>>, vector<128x128xf32>
    %c0_2 = arith.constant 0 : index
    %c0_3 = arith.constant 0 : index
    %4 = vector.load %arg3[%c0_2, %c0_3] : memref<128x128xbf16, #tpu.memory_space<vmem>>, vector<128x128xbf16>
    %c0_4 = arith.constant 0 : index
    %c0_5 = arith.constant 0 : index
    %5 = vector.load %arg4[%c0_4, %c0_5] : memref<128x128xbf16, #tpu.memory_space<vmem>>, vector<128x128xbf16>
    %cst = arith.constant dense<0.000000e+00> : vector<128x128xf32>
    %6 = tpu.matmul %4, %5, %cst {dimension_numbers = #tpu.dot_dimension_numbers<[1], [0], [0], [1], [0, 0, 1, 1], [], []>} : vector<128x128xbf16>, vector<128x128xbf16>, vector<128x128xf32> -> vector<128x128xf32>
    %7 = arith.addf %3, %6 : vector<128x128xf32>
    %c0_6 = arith.constant 0 : index
    %c0_7 = arith.constant 0 : index
    %8 = vector.load %arg7[%c0_6, %c0_7] : memref<128x128xf32, #tpu.memory_space<vmem>>, vector<128x128xf32>
    tpu.vector_store %arg7[%c0_6, %c0_7], %7 {strides = array<i32>} : memref<128x128xf32, #tpu.memory_space<vmem>>, vector<128x128xf32>,
    %c0_i32_8 = arith.constant 0 : i32
    %9 = arith.cmpi eq, %arg2, %c0_i32_8 : i32
    %10 = arith.extui %9 : i1 to i32
    %c0_i32_9 = arith.constant 0 : i32
    %11 = arith.cmpi ne, %10, %c0_i32_9 : i32
    scf.if %11 {
      %c0_10 = arith.constant 0 : index
      %c0_11 = arith.constant 0 : index
      %12 = vector.load %arg7[%c0_10, %c0_11] : memref<128x128xf32, #tpu.memory_space<vmem>>, vector<128x128xf32>
      %c0_12 = arith.constant 0 : index
      %c0_13 = arith.constant 0 : index
      %13 = vector.load %arg5[%c0_12, %c0_13] : memref<1x128xf32, #tpu.memory_space<vmem>>, vector<1x128xf32>
      %14 = vector.broadcast %13 : vector<1x128xf32> to vector<128x128xf32>
      %15 = arith.addf %12, %14 : vector<128x128xf32>
      %cst_14 = arith.constant 0.000000e+00 : f32
      %16 = vector.broadcast %cst_14 : f32 to vector<128x128xf32>
      %17 = arith.maximumf %15, %16 : vector<128x128xf32>
      %18 = arith.truncf %17 : vector<128x128xf32> to vector<128x128xbf16>
      %c0_15 = arith.constant 0 : index
      %c0_16 = arith.constant 0 : index
      %19 = vector.load %arg6[%c0_15, %c0_16] : memref<128x128xbf16, #tpu.memory_space<vmem>>, vector<128x128xbf16>
      tpu.vector_store %arg6[%c0_15, %c0_16], %18 {strides = array<i32>} : memref<128x128xbf16, #tpu.memory_space<vmem>>, vector<128x128xbf16>,
    } else {
    }
    return
  }
  func.func @transform_0(%arg0: i32, %arg1: i32, %arg2: i32) -> (i32, i32) {
    %c0_i32 = arith.constant 0 : i32
    return %arg0, %arg2 : i32, i32
  }
  func.func @transform_1(%arg0: i32, %arg1: i32, %arg2: i32) -> (i32, i32) {
    %c0_i32 = arith.constant 0 : i32
    return %arg2, %arg1 : i32, i32
  }
  func.func @transform_2(%arg0: i32, %arg1: i32, %arg2: i32) -> (i32, i32) {
    %c0_i32 = arith.constant 0 : i32
    %c0_i32_0 = arith.constant 0 : i32
    return %c0_i32, %arg1 : i32, i32
  }
  func.func @transform_3(%arg0: i32, %arg1: i32, %arg2: i32) -> (i32, i32) {
    %c0_i32 = arith.constant 0 : i32
    return %arg0, %arg1 : i32, i32
  }
}

module attributes {stable_mosaic.version = 11 : i64} {
  func.func @_mm_kernel(%arg0: i32, %arg1: i32, %arg2: i32, %arg3: memref<32x256xbf16, #tpu.memory_space<vmem>>, %arg4: memref<256x128xbf16, #tpu.memory_space<vmem>>, %arg5: memref<1x128xf32, #tpu.memory_space<vmem>>, %arg6: memref<32x128xbf16, #tpu.memory_space<vmem>>, %arg7: memref<32x128xf32, #tpu.memory_space<vmem>>) attributes {dimension_semantics = [#tpu.dimension_semantics<parallel>, #tpu.dimension_semantics<parallel>, #tpu.dimension_semantics<arbitrary>], iteration_bounds = array<i64: 1, 1, 1>, scalar_prefetch = 0 : i64, scratch_operands = 1 : i64, tpu.core_type = #tpu.core_type<tc>, window_params = [{transform_indices = @transform_0, window_bounds = array<i64: 32, 256>}, {transform_indices = @transform_1, window_bounds = array<i64: 256, 128>}, {transform_indices = @transform_2, window_bounds = array<i64: 1, 128>}, {transform_indices = @transform_3, window_bounds = array<i64: 32, 128>}]} {
    %c0_i32 = arith.constant 0 : i32
    %0 = arith.cmpi eq, %arg2, %c0_i32 : i32
    %1 = arith.extui %0 : i1 to i32
    %c0_i32_0 = arith.constant 0 : i32
    %2 = arith.cmpi ne, %1, %c0_i32_0 : i32
    scf.if %2 {
      %cst_10 = arith.constant 0.000000e+00 : f32
      %12 = vector.broadcast %cst_10 : f32 to vector<32x128xf32>
      %c0_11 = arith.constant 0 : index
      %c0_12 = arith.constant 0 : index
      %13 = vector.load %arg7[%c0_11, %c0_12] : memref<32x128xf32, #tpu.memory_space<vmem>>, vector<32x128xf32>
      tpu.vector_store %arg7[%c0_11, %c0_12], %12 {strides = array<i32>} : memref<32x128xf32, #tpu.memory_space<vmem>>, vector<32x128xf32>,
    } else {
    }
    %c0 = arith.constant 0 : index
    %c0_1 = arith.constant 0 : index
    %3 = vector.load %arg7[%c0, %c0_1] : memref<32x128xf32, #tpu.memory_space<vmem>>, vector<32x128xf32>
    %c0_2 = arith.constant 0 : index
    %c0_3 = arith.constant 0 : index
    %4 = vector.load %arg3[%c0_2, %c0_3] : memref<32x256xbf16, #tpu.memory_space<vmem>>, vector<32x256xbf16>
    %c0_4 = arith.constant 0 : index
    %c0_5 = arith.constant 0 : index
    %5 = vector.load %arg4[%c0_4, %c0_5] : memref<256x128xbf16, #tpu.memory_space<vmem>>, vector<256x128xbf16>
    %cst = arith.constant dense<0.000000e+00> : vector<32x128xf32>
    %6 = tpu.matmul %4, %5, %cst {dimension_numbers = #tpu.dot_dimension_numbers<[1], [0], [0], [1], [0, 0, 1, 1], [], []>} : vector<32x256xbf16>, vector<256x128xbf16>, vector<32x128xf32> -> vector<32x128xf32>
    %7 = arith.addf %3, %6 : vector<32x128xf32>
    %c0_6 = arith.constant 0 : index
    %c0_7 = arith.constant 0 : index
    %8 = vector.load %arg7[%c0_6, %c0_7] : memref<32x128xf32, #tpu.memory_space<vmem>>, vector<32x128xf32>
    tpu.vector_store %arg7[%c0_6, %c0_7], %7 {strides = array<i32>} : memref<32x128xf32, #tpu.memory_space<vmem>>, vector<32x128xf32>,
    %c0_i32_8 = arith.constant 0 : i32
    %9 = arith.cmpi eq, %arg2, %c0_i32_8 : i32
    %10 = arith.extui %9 : i1 to i32
    %c0_i32_9 = arith.constant 0 : i32
    %11 = arith.cmpi ne, %10, %c0_i32_9 : i32
    scf.if %11 {
      %c0_10 = arith.constant 0 : index
      %c0_11 = arith.constant 0 : index
      %12 = vector.load %arg7[%c0_10, %c0_11] : memref<32x128xf32, #tpu.memory_space<vmem>>, vector<32x128xf32>
      %c0_12 = arith.constant 0 : index
      %c0_13 = arith.constant 0 : index
      %13 = vector.load %arg5[%c0_12, %c0_13] : memref<1x128xf32, #tpu.memory_space<vmem>>, vector<1x128xf32>
      %14 = vector.broadcast %13 : vector<1x128xf32> to vector<32x128xf32>
      %15 = arith.addf %12, %14 : vector<32x128xf32>
      %cst_14 = arith.constant 0.000000e+00 : f32
      %16 = vector.broadcast %cst_14 : f32 to vector<32x128xf32>
      %17 = arith.maximumf %15, %16 : vector<32x128xf32>
      %18 = arith.truncf %17 : vector<32x128xf32> to vector<32x128xbf16>
      %c0_15 = arith.constant 0 : index
      %c0_16 = arith.constant 0 : index
      %19 = vector.load %arg6[%c0_15, %c0_16] : memref<32x128xbf16, #tpu.memory_space<vmem>>, vector<32x128xbf16>
      tpu.vector_store %arg6[%c0_15, %c0_16], %18 {strides = array<i32>} : memref<32x128xbf16, #tpu.memory_space<vmem>>, vector<32x128xbf16>,
    } else {
    }
    return
  }
  func.func @transform_0(%arg0: i32, %arg1: i32, %arg2: i32) -> (i32, i32) {
    %c0_i32 = arith.constant 0 : i32
    return %arg0, %arg2 : i32, i32
  }
  func.func @transform_1(%arg0: i32, %arg1: i32, %arg2: i32) -> (i32, i32) {
    %c0_i32 = arith.constant 0 : i32
    return %arg2, %arg1 : i32, i32
  }
  func.func @transform_2(%arg0: i32, %arg1: i32, %arg2: i32) -> (i32, i32) {
    %c0_i32 = arith.constant 0 : i32
    %c0_i32_0 = arith.constant 0 : i32
    return %c0_i32, %arg1 : i32, i32
  }
  func.func @transform_3(%arg0: i32, %arg1: i32, %arg2: i32) -> (i32, i32) {
    %c0_i32 = arith.constant 0 : i32
    return %arg0, %arg1 : i32, i32
  }
}

module attributes {stable_mosaic.version = 11 : i64} {
  func.func @_mm_kernel(%arg0: i32, %arg1: i32, %arg2: i32, %arg3: memref<32x384xbf16, #tpu.memory_space<vmem>>, %arg4: memref<384x128xbf16, #tpu.memory_space<vmem>>, %arg5: memref<1x128xf32, #tpu.memory_space<vmem>>, %arg6: memref<32x128xbf16, #tpu.memory_space<vmem>>, %arg7: memref<32x128xf32, #tpu.memory_space<vmem>>) attributes {dimension_semantics = [#tpu.dimension_semantics<parallel>, #tpu.dimension_semantics<parallel>, #tpu.dimension_semantics<arbitrary>], iteration_bounds = array<i64: 1, 1, 1>, scalar_prefetch = 0 : i64, scratch_operands = 1 : i64, tpu.core_type = #tpu.core_type<tc>, window_params = [{transform_indices = @transform_0, window_bounds = array<i64: 32, 384>}, {transform_indices = @transform_1, window_bounds = array<i64: 384, 128>}, {transform_indices = @transform_2, window_bounds = array<i64: 1, 128>}, {transform_indices = @transform_3, window_bounds = array<i64: 32, 128>}]} {
    %c0_i32 = arith.constant 0 : i32
    %0 = arith.cmpi eq, %arg2, %c0_i32 : i32
    %1 = arith.extui %0 : i1 to i32
    %c0_i32_0 = arith.constant 0 : i32
    %2 = arith.cmpi ne, %1, %c0_i32_0 : i32
    scf.if %2 {
      %cst_10 = arith.constant 0.000000e+00 : f32
      %12 = vector.broadcast %cst_10 : f32 to vector<32x128xf32>
      %c0_11 = arith.constant 0 : index
      %c0_12 = arith.constant 0 : index
      %13 = vector.load %arg7[%c0_11, %c0_12] : memref<32x128xf32, #tpu.memory_space<vmem>>, vector<32x128xf32>
      tpu.vector_store %arg7[%c0_11, %c0_12], %12 {strides = array<i32>} : memref<32x128xf32, #tpu.memory_space<vmem>>, vector<32x128xf32>,
    } else {
    }
    %c0 = arith.constant 0 : index
    %c0_1 = arith.constant 0 : index
    %3 = vector.load %arg7[%c0, %c0_1] : memref<32x128xf32, #tpu.memory_space<vmem>>, vector<32x128xf32>
    %c0_2 = arith.constant 0 : index
    %c0_3 = arith.constant 0 : index
    %4 = vector.load %arg3[%c0_2, %c0_3] : memref<32x384xbf16, #tpu.memory_space<vmem>>, vector<32x384xbf16>
    %c0_4 = arith.constant 0 : index
    %c0_5 = arith.constant 0 : index
    %5 = vector.load %arg4[%c0_4, %c0_5] : memref<384x128xbf16, #tpu.memory_space<vmem>>, vector<384x128xbf16>
    %cst = arith.constant dense<0.000000e+00> : vector<32x128xf32>
    %6 = tpu.matmul %4, %5, %cst {dimension_numbers = #tpu.dot_dimension_numbers<[1], [0], [0], [1], [0, 0, 1, 1], [], []>} : vector<32x384xbf16>, vector<384x128xbf16>, vector<32x128xf32> -> vector<32x128xf32>
    %7 = arith.addf %3, %6 : vector<32x128xf32>
    %c0_6 = arith.constant 0 : index
    %c0_7 = arith.constant 0 : index
    %8 = vector.load %arg7[%c0_6, %c0_7] : memref<32x128xf32, #tpu.memory_space<vmem>>, vector<32x128xf32>
    tpu.vector_store %arg7[%c0_6, %c0_7], %7 {strides = array<i32>} : memref<32x128xf32, #tpu.memory_space<vmem>>, vector<32x128xf32>,
    %c0_i32_8 = arith.constant 0 : i32
    %9 = arith.cmpi eq, %arg2, %c0_i32_8 : i32
    %10 = arith.extui %9 : i1 to i32
    %c0_i32_9 = arith.constant 0 : i32
    %11 = arith.cmpi ne, %10, %c0_i32_9 : i32
    scf.if %11 {
      %c0_10 = arith.constant 0 : index
      %c0_11 = arith.constant 0 : index
      %12 = vector.load %arg7[%c0_10, %c0_11] : memref<32x128xf32, #tpu.memory_space<vmem>>, vector<32x128xf32>
      %c0_12 = arith.constant 0 : index
      %c0_13 = arith.constant 0 : index
      %13 = vector.load %arg5[%c0_12, %c0_13] : memref<1x128xf32, #tpu.memory_space<vmem>>, vector<1x128xf32>
      %14 = vector.broadcast %13 : vector<1x128xf32> to vector<32x128xf32>
      %15 = arith.addf %12, %14 : vector<32x128xf32>
      %cst_14 = arith.constant 0.000000e+00 : f32
      %16 = vector.broadcast %cst_14 : f32 to vector<32x128xf32>
      %17 = arith.maximumf %15, %16 : vector<32x128xf32>
      %18 = arith.truncf %17 : vector<32x128xf32> to vector<32x128xbf16>
      %c0_15 = arith.constant 0 : index
      %c0_16 = arith.constant 0 : index
      %19 = vector.load %arg6[%c0_15, %c0_16] : memref<32x128xbf16, #tpu.memory_space<vmem>>, vector<32x128xbf16>
      tpu.vector_store %arg6[%c0_15, %c0_16], %18 {strides = array<i32>} : memref<32x128xbf16, #tpu.memory_space<vmem>>, vector<32x128xbf16>,
    } else {
    }
    return
  }
  func.func @transform_0(%arg0: i32, %arg1: i32, %arg2: i32) -> (i32, i32) {
    %c0_i32 = arith.constant 0 : i32
    return %arg0, %arg2 : i32, i32
  }
  func.func @transform_1(%arg0: i32, %arg1: i32, %arg2: i32) -> (i32, i32) {
    %c0_i32 = arith.constant 0 : i32
    return %arg2, %arg1 : i32, i32
  }
  func.func @transform_2(%arg0: i32, %arg1: i32, %arg2: i32) -> (i32, i32) {
    %c0_i32 = arith.constant 0 : i32
    %c0_i32_0 = arith.constant 0 : i32
    return %c0_i32, %arg1 : i32, i32
  }
  func.func @transform_3(%arg0: i32, %arg1: i32, %arg2: i32) -> (i32, i32) {
    %c0_i32 = arith.constant 0 : i32
    return %arg0, %arg1 : i32, i32
  }
}

module attributes {stable_mosaic.version = 11 : i64} {
  func.func @_mm_kernel(%arg0: i32, %arg1: i32, %arg2: i32, %arg3: memref<32x128xbf16, #tpu.memory_space<vmem>>, %arg4: memref<128x128xbf16, #tpu.memory_space<vmem>>, %arg5: memref<1x128xf32, #tpu.memory_space<vmem>>, %arg6: memref<32x128xbf16, #tpu.memory_space<vmem>>, %arg7: memref<32x128xf32, #tpu.memory_space<vmem>>) attributes {dimension_semantics = [#tpu.dimension_semantics<parallel>, #tpu.dimension_semantics<parallel>, #tpu.dimension_semantics<arbitrary>], iteration_bounds = array<i64: 1, 1, 5>, scalar_prefetch = 0 : i64, scratch_operands = 1 : i64, tpu.core_type = #tpu.core_type<tc>, window_params = [{transform_indices = @transform_0, window_bounds = array<i64: 32, 128>}, {transform_indices = @transform_1, window_bounds = array<i64: 128, 128>}, {transform_indices = @transform_2, window_bounds = array<i64: 1, 128>}, {transform_indices = @transform_3, window_bounds = array<i64: 32, 128>}]} {
    %c0_i32 = arith.constant 0 : i32
    %0 = arith.cmpi eq, %arg2, %c0_i32 : i32
    %1 = arith.extui %0 : i1 to i32
    %c0_i32_0 = arith.constant 0 : i32
    %2 = arith.cmpi ne, %1, %c0_i32_0 : i32
    scf.if %2 {
      %cst_9 = arith.constant 0.000000e+00 : f32
      %12 = vector.broadcast %cst_9 : f32 to vector<32x128xf32>
      %c0_10 = arith.constant 0 : index
      %c0_11 = arith.constant 0 : index
      %13 = vector.load %arg7[%c0_10, %c0_11] : memref<32x128xf32, #tpu.memory_space<vmem>>, vector<32x128xf32>
      tpu.vector_store %arg7[%c0_10, %c0_11], %12 {strides = array<i32>} : memref<32x128xf32, #tpu.memory_space<vmem>>, vector<32x128xf32>,
    } else {
    }
    %c0 = arith.constant 0 : index
    %c0_1 = arith.constant 0 : index
    %3 = vector.load %arg7[%c0, %c0_1] : memref<32x128xf32, #tpu.memory_space<vmem>>, vector<32x128xf32>
    %c0_2 = arith.constant 0 : index
    %c0_3 = arith.constant 0 : index
    %4 = vector.load %arg3[%c0_2, %c0_3] : memref<32x128xbf16, #tpu.memory_space<vmem>>, vector<32x128xbf16>
    %c0_4 = arith.constant 0 : index
    %c0_5 = arith.constant 0 : index
    %5 = vector.load %arg4[%c0_4, %c0_5] : memref<128x128xbf16, #tpu.memory_space<vmem>>, vector<128x128xbf16>
    %cst = arith.constant dense<0.000000e+00> : vector<32x128xf32>
    %6 = tpu.matmul %4, %5, %cst {dimension_numbers = #tpu.dot_dimension_numbers<[1], [0], [0], [1], [0, 0, 1, 1], [], []>} : vector<32x128xbf16>, vector<128x128xbf16>, vector<32x128xf32> -> vector<32x128xf32>
    %7 = arith.addf %3, %6 : vector<32x128xf32>
    %c0_6 = arith.constant 0 : index
    %c0_7 = arith.constant 0 : index
    %8 = vector.load %arg7[%c0_6, %c0_7] : memref<32x128xf32, #tpu.memory_space<vmem>>, vector<32x128xf32>
    tpu.vector_store %arg7[%c0_6, %c0_7], %7 {strides = array<i32>} : memref<32x128xf32, #tpu.memory_space<vmem>>, vector<32x128xf32>,
    %c4_i32 = arith.constant 4 : i32
    %9 = arith.cmpi eq, %arg2, %c4_i32 : i32
    %10 = arith.extui %9 : i1 to i32
    %c0_i32_8 = arith.constant 0 : i32
    %11 = arith.cmpi ne, %10, %c0_i32_8 : i32
    scf.if %11 {
      %c0_9 = arith.constant 0 : index
      %c0_10 = arith.constant 0 : index
      %12 = vector.load %arg7[%c0_9, %c0_10] : memref<32x128xf32, #tpu.memory_space<vmem>>, vector<32x128xf32>
      %c0_11 = arith.constant 0 : index
      %c0_12 = arith.constant 0 : index
      %13 = vector.load %arg5[%c0_11, %c0_12] : memref<1x128xf32, #tpu.memory_space<vmem>>, vector<1x128xf32>
      %14 = vector.broadcast %13 : vector<1x128xf32> to vector<32x128xf32>
      %15 = arith.addf %12, %14 : vector<32x128xf32>
      %cst_13 = arith.constant 0.000000e+00 : f32
      %16 = vector.broadcast %cst_13 : f32 to vector<32x128xf32>
      %17 = arith.maximumf %15, %16 : vector<32x128xf32>
      %18 = arith.truncf %17 : vector<32x128xf32> to vector<32x128xbf16>
      %c0_14 = arith.constant 0 : index
      %c0_15 = arith.constant 0 : index
      %19 = vector.load %arg6[%c0_14, %c0_15] : memref<32x128xbf16, #tpu.memory_space<vmem>>, vector<32x128xbf16>
      tpu.vector_store %arg6[%c0_14, %c0_15], %18 {strides = array<i32>} : memref<32x128xbf16, #tpu.memory_space<vmem>>, vector<32x128xbf16>,
    } else {
    }
    return
  }
  func.func @transform_0(%arg0: i32, %arg1: i32, %arg2: i32) -> (i32, i32) {
    %c0_i32 = arith.constant 0 : i32
    return %arg0, %arg2 : i32, i32
  }
  func.func @transform_1(%arg0: i32, %arg1: i32, %arg2: i32) -> (i32, i32) {
    %c0_i32 = arith.constant 0 : i32
    return %arg2, %arg1 : i32, i32
  }
  func.func @transform_2(%arg0: i32, %arg1: i32, %arg2: i32) -> (i32, i32) {
    %c0_i32 = arith.constant 0 : i32
    %c0_i32_0 = arith.constant 0 : i32
    return %c0_i32, %arg1 : i32, i32
  }
  func.func @transform_3(%arg0: i32, %arg1: i32, %arg2: i32) -> (i32, i32) {
    %c0_i32 = arith.constant 0 : i32
    return %arg0, %arg1 : i32, i32
  }
}

module attributes {stable_mosaic.version = 11 : i64} {
  func.func @_mm_res_kernel(%arg0: i32, %arg1: i32, %arg2: i32, %arg3: memref<32x128xbf16, #tpu.memory_space<vmem>>, %arg4: memref<128x128xbf16, #tpu.memory_space<vmem>>, %arg5: memref<1x128xf32, #tpu.memory_space<vmem>>, %arg6: memref<32x128xbf16, #tpu.memory_space<vmem>>, %arg7: memref<32x128xbf16, #tpu.memory_space<vmem>>, %arg8: memref<32x128xf32, #tpu.memory_space<vmem>>) attributes {dimension_semantics = [#tpu.dimension_semantics<parallel>, #tpu.dimension_semantics<parallel>, #tpu.dimension_semantics<arbitrary>], iteration_bounds = array<i64: 1, 1, 1>, scalar_prefetch = 0 : i64, scratch_operands = 1 : i64, tpu.core_type = #tpu.core_type<tc>, window_params = [{transform_indices = @transform_0, window_bounds = array<i64: 32, 128>}, {transform_indices = @transform_1, window_bounds = array<i64: 128, 128>}, {transform_indices = @transform_2, window_bounds = array<i64: 1, 128>}, {transform_indices = @transform_3, window_bounds = array<i64: 32, 128>}, {transform_indices = @transform_4, window_bounds = array<i64: 32, 128>}]} {
    %c0_i32 = arith.constant 0 : i32
    %0 = arith.cmpi eq, %arg2, %c0_i32 : i32
    %1 = arith.extui %0 : i1 to i32
    %c0_i32_0 = arith.constant 0 : i32
    %2 = arith.cmpi ne, %1, %c0_i32_0 : i32
    scf.if %2 {
      %cst_10 = arith.constant 0.000000e+00 : f32
      %12 = vector.broadcast %cst_10 : f32 to vector<32x128xf32>
      %c0_11 = arith.constant 0 : index
      %c0_12 = arith.constant 0 : index
      %13 = vector.load %arg8[%c0_11, %c0_12] : memref<32x128xf32, #tpu.memory_space<vmem>>, vector<32x128xf32>
      tpu.vector_store %arg8[%c0_11, %c0_12], %12 {strides = array<i32>} : memref<32x128xf32, #tpu.memory_space<vmem>>, vector<32x128xf32>,
    } else {
    }
    %c0 = arith.constant 0 : index
    %c0_1 = arith.constant 0 : index
    %3 = vector.load %arg8[%c0, %c0_1] : memref<32x128xf32, #tpu.memory_space<vmem>>, vector<32x128xf32>
    %c0_2 = arith.constant 0 : index
    %c0_3 = arith.constant 0 : index
    %4 = vector.load %arg3[%c0_2, %c0_3] : memref<32x128xbf16, #tpu.memory_space<vmem>>, vector<32x128xbf16>
    %c0_4 = arith.constant 0 : index
    %c0_5 = arith.constant 0 : index
    %5 = vector.load %arg4[%c0_4, %c0_5] : memref<128x128xbf16, #tpu.memory_space<vmem>>, vector<128x128xbf16>
    %cst = arith.constant dense<0.000000e+00> : vector<32x128xf32>
    %6 = tpu.matmul %4, %5, %cst {dimension_numbers = #tpu.dot_dimension_numbers<[1], [0], [0], [1], [0, 0, 1, 1], [], []>} : vector<32x128xbf16>, vector<128x128xbf16>, vector<32x128xf32> -> vector<32x128xf32>
    %7 = arith.addf %3, %6 : vector<32x128xf32>
    %c0_6 = arith.constant 0 : index
    %c0_7 = arith.constant 0 : index
    %8 = vector.load %arg8[%c0_6, %c0_7] : memref<32x128xf32, #tpu.memory_space<vmem>>, vector<32x128xf32>
    tpu.vector_store %arg8[%c0_6, %c0_7], %7 {strides = array<i32>} : memref<32x128xf32, #tpu.memory_space<vmem>>, vector<32x128xf32>,
    %c0_i32_8 = arith.constant 0 : i32
    %9 = arith.cmpi eq, %arg2, %c0_i32_8 : i32
    %10 = arith.extui %9 : i1 to i32
    %c0_i32_9 = arith.constant 0 : i32
    %11 = arith.cmpi ne, %10, %c0_i32_9 : i32
    scf.if %11 {
      %c0_10 = arith.constant 0 : index
      %c0_11 = arith.constant 0 : index
      %12 = vector.load %arg8[%c0_10, %c0_11] : memref<32x128xf32, #tpu.memory_space<vmem>>, vector<32x128xf32>
      %c0_12 = arith.constant 0 : index
      %c0_13 = arith.constant 0 : index
      %13 = vector.load %arg5[%c0_12, %c0_13] : memref<1x128xf32, #tpu.memory_space<vmem>>, vector<1x128xf32>
      %14 = vector.broadcast %13 : vector<1x128xf32> to vector<32x128xf32>
      %15 = arith.addf %12, %14 : vector<32x128xf32>
      %c0_14 = arith.constant 0 : index
      %c0_15 = arith.constant 0 : index
      %16 = vector.load %arg6[%c0_14, %c0_15] : memref<32x128xbf16, #tpu.memory_space<vmem>>, vector<32x128xbf16>
      %17 = arith.extf %16 : vector<32x128xbf16> to vector<32x128xf32>
      %18 = arith.addf %15, %17 : vector<32x128xf32>
      %19 = arith.truncf %18 : vector<32x128xf32> to vector<32x128xbf16>
      %c0_16 = arith.constant 0 : index
      %c0_17 = arith.constant 0 : index
      %20 = vector.load %arg7[%c0_16, %c0_17] : memref<32x128xbf16, #tpu.memory_space<vmem>>, vector<32x128xbf16>
      tpu.vector_store %arg7[%c0_16, %c0_17], %19 {strides = array<i32>} : memref<32x128xbf16, #tpu.memory_space<vmem>>, vector<32x128xbf16>,
    } else {
    }
    return
  }
  func.func @transform_0(%arg0: i32, %arg1: i32, %arg2: i32) -> (i32, i32) {
    %c0_i32 = arith.constant 0 : i32
    return %arg0, %arg2 : i32, i32
  }
  func.func @transform_1(%arg0: i32, %arg1: i32, %arg2: i32) -> (i32, i32) {
    %c0_i32 = arith.constant 0 : i32
    return %arg2, %arg1 : i32, i32
  }
  func.func @transform_2(%arg0: i32, %arg1: i32, %arg2: i32) -> (i32, i32) {
    %c0_i32 = arith.constant 0 : i32
    %c0_i32_0 = arith.constant 0 : i32
    return %c0_i32, %arg1 : i32, i32
  }
  func.func @transform_3(%arg0: i32, %arg1: i32, %arg2: i32) -> (i32, i32) {
    %c0_i32 = arith.constant 0 : i32
    return %arg0, %arg1 : i32, i32
  }
  func.func @transform_4(%arg0: i32, %arg1: i32, %arg2: i32) -> (i32, i32) {
    %c0_i32 = arith.constant 0 : i32
    return %arg0, %arg1 : i32, i32
  }
}

module attributes {stable_mosaic.version = 11 : i64} {
  func.func @_vq_kernel(%arg0: i32, %arg1: memref<32x128xbf16, #tpu.memory_space<vmem>>, %arg2: memref<128x128xbf16, #tpu.memory_space<vmem>>, %arg3: memref<1x128xf32, #tpu.memory_space<vmem>>, %arg4: memref<128x128xf32, #tpu.memory_space<vmem>>, %arg5: memref<1x128xf32, #tpu.memory_space<vmem>>, %arg6: memref<32x128xbf16, #tpu.memory_space<vmem>>, %arg7: memref<1x1xf32, #tpu.memory_space<vmem>>) attributes {dimension_semantics = [#tpu.dimension_semantics<arbitrary>], iteration_bounds = array<i64: 1>, scalar_prefetch = 0 : i64, scratch_operands = 0 : i64, tpu.core_type = #tpu.core_type<tc>, window_params = [{transform_indices = @transform_0, window_bounds = array<i64: 32, 128>}, {pipeline_mode = #tpu.pipeline_mode<synchronous>, transform_indices = @transform_1, window_bounds = array<i64: 128, 128>}, {pipeline_mode = #tpu.pipeline_mode<synchronous>, transform_indices = @transform_2, window_bounds = array<i64: 1, 128>}, {pipeline_mode = #tpu.pipeline_mode<synchronous>, transform_indices = @transform_3, window_bounds = array<i64: 128, 128>}, {pipeline_mode = #tpu.pipeline_mode<synchronous>, transform_indices = @transform_4, window_bounds = array<i64: 1, 128>}, {transform_indices = @transform_5, window_bounds = array<i64: 32, 128>}, {pipeline_mode = #tpu.pipeline_mode<synchronous>, transform_indices = @transform_6, window_bounds = array<i64: 1, 1>}]} {
    %c0 = arith.constant 0 : index
    %c0_0 = arith.constant 0 : index
    %0 = vector.load %arg1[%c0, %c0_0] : memref<32x128xbf16, #tpu.memory_space<vmem>>, vector<32x128xbf16>
    %c0_1 = arith.constant 0 : index
    %c0_2 = arith.constant 0 : index
    %1 = vector.load %arg2[%c0_1, %c0_2] : memref<128x128xbf16, #tpu.memory_space<vmem>>, vector<128x128xbf16>
    %cst = arith.constant dense<0.000000e+00> : vector<32x128xf32>
    %2 = tpu.matmul %0, %1, %cst {dimension_numbers = #tpu.dot_dimension_numbers<[1], [0], [0], [1], [0, 0, 1, 1], [], []>} : vector<32x128xbf16>, vector<128x128xbf16>, vector<32x128xf32> -> vector<32x128xf32>
    %c0_3 = arith.constant 0 : index
    %c0_4 = arith.constant 0 : index
    %3 = vector.load %arg3[%c0_3, %c0_4] : memref<1x128xf32, #tpu.memory_space<vmem>>, vector<1x128xf32>
    %4 = vector.broadcast %3 : vector<1x128xf32> to vector<32x128xf32>
    %5 = arith.addf %2, %4 : vector<32x128xf32>
    %c0_5 = arith.constant 0 : index
    %c0_6 = arith.constant 0 : index
    %6 = vector.load %arg4[%c0_5, %c0_6] : memref<128x128xf32, #tpu.memory_space<vmem>>, vector<128x128xf32>
    %7 = tpu.transpose %6, [1, 0] : vector<128x128xf32> -> vector<128x128xf32>
    %cst_7 = arith.constant dense<0.000000e+00> : vector<32x128xf32>
    %8 = tpu.matmul %5, %7, %cst_7 {dimension_numbers = #tpu.dot_dimension_numbers<[1], [0], [0], [1], [0, 0, 1, 1], [], []>} : vector<32x128xf32>, vector<128x128xf32>, vector<32x128xf32> -> vector<32x128xf32>
    %c0_8 = arith.constant 0 : index
    %c0_9 = arith.constant 0 : index
    %9 = vector.load %arg5[%c0_8, %c0_9] : memref<1x128xf32, #tpu.memory_space<vmem>>, vector<1x128xf32>
    %cst_10 = arith.constant 2.000000e+00 : f32
    %10 = vector.broadcast %cst_10 : f32 to vector<32x128xf32>
    %11 = arith.mulf %10, %8 : vector<32x128xf32>
    %12 = vector.broadcast %9 : vector<1x128xf32> to vector<32x128xf32>
    %13 = arith.subf %12, %11 : vector<32x128xf32>
    %14 = tpu.iota {dimensions = array<i32: 1>} : vector<32x128xi32>
    %cst_11 = arith.constant dense<0x7F800000> : vector<32xf32>
    %15 = vector.multi_reduction <minimumf>, %13, %cst_11 [1] : vector<32x128xf32> to vector<32xf32>
    %16 = vector.shape_cast %15 : vector<32xf32> to vector<32x1xf32>
    %17 = vector.broadcast %16 : vector<32x1xf32> to vector<32x128xf32>
    %18 = arith.cmpf ole, %13, %17 : vector<32x128xf32>
    %c128_i32 = arith.constant 128 : i32
    %19 = vector.broadcast %c128_i32 : i32 to vector<32x128xi32>
    %20 = arith.select %18, %14, %19 : vector<32x128xi1>, vector<32x128xi32>
    %cst_12 = arith.constant dense<2147483647> : vector<32xi32>
    %21 = vector.multi_reduction <minsi>, %20, %cst_12 [1] : vector<32x128xi32> to vector<32xi32>
    %22 = vector.shape_cast %21 : vector<32xi32> to vector<32x1xi32>
    %23 = vector.broadcast %22 : vector<32x1xi32> to vector<32x128xi32>
    %24 = arith.cmpi eq, %14, %23 : vector<32x128xi32>
    %25 = arith.extui %24 : vector<32x128xi1> to vector<32x128xi32>
    %26 = arith.sitofp %25 : vector<32x128xi32> to vector<32x128xf32>
    %cst_13 = arith.constant dense<0.000000e+00> : vector<32x128xf32>
    %27 = tpu.matmul %26, %6, %cst_13 {dimension_numbers = #tpu.dot_dimension_numbers<[1], [0], [0], [1], [0, 0, 1, 1], [], []>} : vector<32x128xf32>, vector<128x128xf32>, vector<32x128xf32> -> vector<32x128xf32>
    %28 = arith.truncf %27 : vector<32x128xf32> to vector<32x128xbf16>
    %c0_14 = arith.constant 0 : index
    %c0_15 = arith.constant 0 : index
    %29 = vector.load %arg6[%c0_14, %c0_15] : memref<32x128xbf16, #tpu.memory_space<vmem>>, vector<32x128xbf16>
    tpu.vector_store %arg6[%c0_14, %c0_15], %28 {strides = array<i32>} : memref<32x128xbf16, #tpu.memory_space<vmem>>, vector<32x128xbf16>,
    %c32_i32 = arith.constant 32 : i32
    %30 = arith.muli %arg0, %c32_i32 : i32
    %31 = tpu.iota {dimensions = array<i32: 0>} : vector<32x1xi32>
    %32 = vector.broadcast %30 : i32 to vector<32x1xi32>
    %33 = arith.addi %32, %31 : vector<32x1xi32>
    %c32_i32_16 = arith.constant 32 : i32
    %34 = vector.broadcast %c32_i32_16 : i32 to vector<32x1xi32>
    %35 = arith.cmpi slt, %33, %34 : vector<32x1xi32>
    %36 = arith.extui %35 : vector<32x1xi1> to vector<32x1xi32>
    %37 = arith.sitofp %36 : vector<32x1xi32> to vector<32x1xf32>
    %38 = arith.subf %27, %5 : vector<32x128xf32>
    %39 = arith.mulf %38, %38 : vector<32x128xf32>
    %40 = vector.broadcast %37 : vector<32x1xf32> to vector<32x128xf32>
    %41 = arith.mulf %39, %40 : vector<32x128xf32>
    %42 = vector.shape_cast %41 : vector<32x128xf32> to vector<1x32x128xf32>
    %cst_17 = arith.constant dense<0.000000e+00> : vector<1xf32>
    %43 = vector.multi_reduction <add>, %42, %cst_17 [1, 2] : vector<1x32x128xf32> to vector<1xf32>
    %44 = vector.shape_cast %43 : vector<1xf32> to vector<1x1x1xf32>
    %45 = vector.extract %44[0, 0, 0] : f32 from vector<1x1x1xf32>
    %c0_i32 = arith.constant 0 : i32
    %46 = arith.cmpi eq, %arg0, %c0_i32 : i32
    %47 = arith.extui %46 : i1 to i32
    %c0_i32_18 = arith.constant 0 : i32
    %48 = arith.cmpi ne, %47, %c0_i32_18 : i32
    scf.if %48 {
      %cst_23 = arith.constant 0.000000e+00 : f32
      %53 = vector.broadcast %cst_23 : f32 to vector<1x1xf32>
      %c0_24 = arith.constant 0 : index
      %c0_25 = arith.constant 0 : index
      %54 = vector.load %arg7[%c0_24, %c0_25] : memref<1x1xf32, #tpu.memory_space<vmem>>, vector<1x1xf32>
      tpu.vector_store %arg7[%c0_24, %c0_25], %53 {strides = array<i32>} : memref<1x1xf32, #tpu.memory_space<vmem>>, vector<1x1xf32>,
    } else {
    }
    %c0_19 = arith.constant 0 : index
    %c0_20 = arith.constant 0 : index
    %49 = vector.load %arg7[%c0_19, %c0_20] : memref<1x1xf32, #tpu.memory_space<vmem>>, vector<1x1xf32>
    %50 = vector.broadcast %45 : f32 to vector<1x1xf32>
    %51 = arith.addf %49, %50 : vector<1x1xf32>
    %c0_21 = arith.constant 0 : index
    %c0_22 = arith.constant 0 : index
    %52 = vector.load %arg7[%c0_21, %c0_22] : memref<1x1xf32, #tpu.memory_space<vmem>>, vector<1x1xf32>
    tpu.vector_store %arg7[%c0_21, %c0_22], %51 {strides = array<i32>} : memref<1x1xf32, #tpu.memory_space<vmem>>, vector<1x1xf32>,
    return
  }
  func.func @transform_0(%arg0: i32) -> (i32, i32) {
    %c0_i32 = arith.constant 0 : i32
    %c0_i32_0 = arith.constant 0 : i32
    return %arg0, %c0_i32 : i32, i32
  }
  func.func @transform_1(%arg0: i32) -> (i32, i32) {
    %c0_i32 = arith.constant 0 : i32
    %c0_i32_0 = arith.constant 0 : i32
    %c0_i32_1 = arith.constant 0 : i32
    return %c0_i32, %c0_i32_0 : i32, i32
  }
  func.func @transform_2(%arg0: i32) -> (i32, i32) {
    %c0_i32 = arith.constant 0 : i32
    %c0_i32_0 = arith.constant 0 : i32
    %c0_i32_1 = arith.constant 0 : i32
    return %c0_i32, %c0_i32_0 : i32, i32
  }
  func.func @transform_3(%arg0: i32) -> (i32, i32) {
    %c0_i32 = arith.constant 0 : i32
    %c0_i32_0 = arith.constant 0 : i32
    %c0_i32_1 = arith.constant 0 : i32
    return %c0_i32, %c0_i32_0 : i32, i32
  }
  func.func @transform_4(%arg0: i32) -> (i32, i32) {
    %c0_i32 = arith.constant 0 : i32
    %c0_i32_0 = arith.constant 0 : i32
    %c0_i32_1 = arith.constant 0 : i32
    return %c0_i32, %c0_i32_0 : i32, i32
  }
  func.func @transform_5(%arg0: i32) -> (i32, i32) {
    %c0_i32 = arith.constant 0 : i32
    %c0_i32_0 = arith.constant 0 : i32
    return %arg0, %c0_i32 : i32, i32
  }
  func.func @transform_6(%arg0: i32) -> (i32, i32) {
    %c0_i32 = arith.constant 0 : i32
    %c0_i32_0 = arith.constant 0 : i32
    %c0_i32_1 = arith.constant 0 : i32
    return %c0_i32, %c0_i32_0 : i32, i32
  }
}

module attributes {stable_mosaic.version = 11 : i64} {
  func.func @_mm_kernel(%arg0: i32, %arg1: i32, %arg2: i32, %arg3: memref<128x128xbf16, #tpu.memory_space<vmem>>, %arg4: memref<128x128xbf16, #tpu.memory_space<vmem>>, %arg5: memref<1x128xf32, #tpu.memory_space<vmem>>, %arg6: memref<128x128xbf16, #tpu.memory_space<vmem>>, %arg7: memref<128x128xf32, #tpu.memory_space<vmem>>) attributes {dimension_semantics = [#tpu.dimension_semantics<parallel>, #tpu.dimension_semantics<parallel>, #tpu.dimension_semantics<arbitrary>], iteration_bounds = array<i64: 1, 1, 1>, scalar_prefetch = 0 : i64, scratch_operands = 1 : i64, tpu.core_type = #tpu.core_type<tc>, window_params = [{transform_indices = @transform_0, window_bounds = array<i64: 128, 128>}, {transform_indices = @transform_1, window_bounds = array<i64: 128, 128>}, {transform_indices = @transform_2, window_bounds = array<i64: 1, 128>}, {transform_indices = @transform_3, window_bounds = array<i64: 128, 128>}]} {
    %c0_i32 = arith.constant 0 : i32
    %0 = arith.cmpi eq, %arg2, %c0_i32 : i32
    %1 = arith.extui %0 : i1 to i32
    %c0_i32_0 = arith.constant 0 : i32
    %2 = arith.cmpi ne, %1, %c0_i32_0 : i32
    scf.if %2 {
      %cst_10 = arith.constant 0.000000e+00 : f32
      %12 = vector.broadcast %cst_10 : f32 to vector<128x128xf32>
      %c0_11 = arith.constant 0 : index
      %c0_12 = arith.constant 0 : index
      %13 = vector.load %arg7[%c0_11, %c0_12] : memref<128x128xf32, #tpu.memory_space<vmem>>, vector<128x128xf32>
      tpu.vector_store %arg7[%c0_11, %c0_12], %12 {strides = array<i32>} : memref<128x128xf32, #tpu.memory_space<vmem>>, vector<128x128xf32>,
    } else {
    }
    %c0 = arith.constant 0 : index
    %c0_1 = arith.constant 0 : index
    %3 = vector.load %arg7[%c0, %c0_1] : memref<128x128xf32, #tpu.memory_space<vmem>>, vector<128x128xf32>
    %c0_2 = arith.constant 0 : index
    %c0_3 = arith.constant 0 : index
    %4 = vector.load %arg3[%c0_2, %c0_3] : memref<128x128xbf16, #tpu.memory_space<vmem>>, vector<128x128xbf16>
    %c0_4 = arith.constant 0 : index
    %c0_5 = arith.constant 0 : index
    %5 = vector.load %arg4[%c0_4, %c0_5] : memref<128x128xbf16, #tpu.memory_space<vmem>>, vector<128x128xbf16>
    %cst = arith.constant dense<0.000000e+00> : vector<128x128xf32>
    %6 = tpu.matmul %4, %5, %cst {dimension_numbers = #tpu.dot_dimension_numbers<[1], [0], [0], [1], [0, 0, 1, 1], [], []>} : vector<128x128xbf16>, vector<128x128xbf16>, vector<128x128xf32> -> vector<128x128xf32>
    %7 = arith.addf %3, %6 : vector<128x128xf32>
    %c0_6 = arith.constant 0 : index
    %c0_7 = arith.constant 0 : index
    %8 = vector.load %arg7[%c0_6, %c0_7] : memref<128x128xf32, #tpu.memory_space<vmem>>, vector<128x128xf32>
    tpu.vector_store %arg7[%c0_6, %c0_7], %7 {strides = array<i32>} : memref<128x128xf32, #tpu.memory_space<vmem>>, vector<128x128xf32>,
    %c0_i32_8 = arith.constant 0 : i32
    %9 = arith.cmpi eq, %arg2, %c0_i32_8 : i32
    %10 = arith.extui %9 : i1 to i32
    %c0_i32_9 = arith.constant 0 : i32
    %11 = arith.cmpi ne, %10, %c0_i32_9 : i32
    scf.if %11 {
      %c0_10 = arith.constant 0 : index
      %c0_11 = arith.constant 0 : index
      %12 = vector.load %arg7[%c0_10, %c0_11] : memref<128x128xf32, #tpu.memory_space<vmem>>, vector<128x128xf32>
      %c0_12 = arith.constant 0 : index
      %c0_13 = arith.constant 0 : index
      %13 = vector.load %arg5[%c0_12, %c0_13] : memref<1x128xf32, #tpu.memory_space<vmem>>, vector<1x128xf32>
      %14 = vector.broadcast %13 : vector<1x128xf32> to vector<128x128xf32>
      %15 = arith.addf %12, %14 : vector<128x128xf32>
      %16 = arith.negf %15 : vector<128x128xf32>
      %17 = math.exp %16 : vector<128x128xf32>
      %cst_14 = arith.constant 1.000000e+00 : f32
      %18 = vector.broadcast %cst_14 : f32 to vector<128x128xf32>
      %19 = arith.addf %18, %17 : vector<128x128xf32>
      %20 = arith.divf %18, %19 : vector<128x128xf32>
      %21 = arith.truncf %20 : vector<128x128xf32> to vector<128x128xbf16>
      %c0_15 = arith.constant 0 : index
      %c0_16 = arith.constant 0 : index
      %22 = vector.load %arg6[%c0_15, %c0_16] : memref<128x128xbf16, #tpu.memory_space<vmem>>, vector<128x128xbf16>
      tpu.vector_store %arg6[%c0_15, %c0_16], %21 {strides = array<i32>} : memref<128x128xbf16, #tpu.memory_space<vmem>>, vector<128x128xbf16>,
    } else {
    }
    return
  }
  func.func @transform_0(%arg0: i32, %arg1: i32, %arg2: i32) -> (i32, i32) {
    %c0_i32 = arith.constant 0 : i32
    return %arg0, %arg2 : i32, i32
  }
  func.func @transform_1(%arg0: i32, %arg1: i32, %arg2: i32) -> (i32, i32) {
    %c0_i32 = arith.constant 0 : i32
    return %arg2, %arg1 : i32, i32
  }
  func.func @transform_2(%arg0: i32, %arg1: i32, %arg2: i32) -> (i32, i32) {
    %c0_i32 = arith.constant 0 : i32
    %c0_i32_0 = arith.constant 0 : i32
    return %c0_i32, %arg1 : i32, i32
  }
  func.func @transform_3(%arg0: i32, %arg1: i32, %arg2: i32) -> (i32, i32) {
    %c0_i32 = arith.constant 0 : i32
    return %arg0, %arg1 : i32, i32
  }
}

</mosaic_0001>

<llo_original>
// kernel: vqvae_forward.21
$region0: #{vqvae_forward.21}
  #allocation0 [shape = 'u32[]', space=smem, size = 0x4, offset = 0x4, fixed_abs, tag = 'smem constant byte address 0x4 - core index']
  #allocation1 [shape = 'u32[144,128]{1,0:T(1,128)}', space=vmem, size = 0x12000, scoped, tag = 'internal scratch']
  #allocation2 [shape = 'f32[128,128]{1,0:T(8,128)}', space=vmem, size = 0x10000, scoped, tag = 'scratch operand']
  %s0 = inlined_call_operand.vmem [shape: bf16[128,128], index: 0, kind: input, shape index: {}]
  %s1 = inlined_call_operand.vmem [shape: bf16[128,128], index: 1, kind: input, shape index: {}]
  %s2 = inlined_call_operand.vmem [shape: f32[1,128], index: 2, kind: input, shape index: {}]
  %s3 = inlined_call_operand.vmem [shape: bf16[128,128], index: 3, kind: output, shape index: {}]
  %s4 = sld [smem:[#allocation0]]
  $region30: #{vqvae_forward.21} parent=0
    _
  %s6 = ssub.s32 1, %s4
  %s7 = scalar_select 0, %s6, %s4
  // Predicated region
  $region2: #{vqvae_forward.21} parent=0 // pred_check
    _
  $region3: #{vqvae_forward.21} parent=0 // pred_check_branch
    %9 = sbr.rel (0) target = $region5
  $region4: #{vqvae_forward.21} parent=0 // pred_region
    _
  $region5: #{vqvae_forward.21} parent=0 // pred_fallthru
    _
  // Predicated region
  $region6: #{vqvae_forward.21} parent=0 // pred_check
    _
  $region7: #{vqvae_forward.21} parent=0 // pred_check_branch
    %11 = sbr.rel (0) target = $region9
  $region8: #{vqvae_forward.21} parent=0 // pred_region
    _
  $region9: #{vqvae_forward.21} parent=0 // pred_fallthru
    _
  // Predicated region
  $region10: #{vqvae_forward.21} parent=0 // pred_check
    _
  $region11: #{vqvae_forward.21} parent=0 // pred_check_branch
    %13 = sbr.rel (0) target = $region13
  $region12: #{vqvae_forward.21} parent=0 // pred_region
    _
  $region13: #{vqvae_forward.21} parent=0 // pred_fallthru
    _
  %p15 = scmp.eq.s32.totalorder 0, 0
  // Predicated region
  $region14: #{vqvae_forward.21} parent=0 // pred_check
    %p16 = pneg %p15
  $region15: #{vqvae_forward.21} parent=0 // pred_check_branch
    %18 = sbr.rel (%p16) target = $region17
  $region16: #{vqvae_forward.21} parent=0 // pred_region
    %19 = vst [vmem:[#allocation2] sm:$0xff] 0.0
    %20 = vst [vmem:[#allocation2 + $0x8] sm:$0xff] 0.0
    %21 = vst [vmem:[#allocation2 + $0x10] sm:$0xff] 0.0
    %22 = vst [vmem:[#allocation2 + $0x18] sm:$0xff] 0.0
    %23 = vst [vmem:[#allocation2 + $0x20] sm:$0xff] 0.0
    %24 = vst [vmem:[#allocation2 + $0x28] sm:$0xff] 0.0
    %25 = vst [vmem:[#allocation2 + $0x30] sm:$0xff] 0.0
    %26 = vst [vmem:[#allocation2 + $0x38] sm:$0xff] 0.0
    %27 = vst [vmem:[#allocation2 + $0x40] sm:$0xff] 0.0
    %28 = vst [vmem:[#allocation2 + $0x48] sm:$0xff] 0.0
    %29 = vst [vmem:[#allocation2 + $0x50] sm:$0xff] 0.0
    %30 = vst [vmem:[#allocation2 + $0x58] sm:$0xff] 0.0
    %31 = vst [vmem:[#allocation2 + $0x60] sm:$0xff] 0.0
    %32 = vst [vmem:[#allocation2 + $0x68] sm:$0xff] 0.0
    %33 = vst [vmem:[#allocation2 + $0x70] sm:$0xff] 0.0
    %34 = vst [vmem:[#allocation2 + $0x78] sm:$0xff] 0.0
  $region17: #{vqvae_forward.21} parent=0 // pred_fallthru
    _
  %v35 = vld [vmem:[#allocation2] sm:$0xff]
  %v36 = vld [vmem:[#allocation2 + $0x8] sm:$0xff]
  %v37 = vld [vmem:[#allocation2 + $0x10] sm:$0xff]
  %v38 = vld [vmem:[#allocation2 + $0x18] sm:$0xff]
  %v39 = vld [vmem:[#allocation2 + $0x20] sm:$0xff]
  %v40 = vld [vmem:[#allocation2 + $0x28] sm:$0xff]
  %v41 = vld [vmem:[#allocation2 + $0x30] sm:$0xff]
  %v42 = vld [vmem:[#allocation2 + $0x38] sm:$0xff]
  %v43 = vld [vmem:[#allocation2 + $0x40] sm:$0xff]
  %v44 = vld [vmem:[#allocation2 + $0x48] sm:$0xff]
  %v45 = vld [vmem:[#allocation2 + $0x50] sm:$0xff]
  %v46 = vld [vmem:[#allocation2 + $0x58] sm:$0xff]
  %v47 = vld [vmem:[#allocation2 + $0x60] sm:$0xff]
  %v48 = vld [vmem:[#allocation2 + $0x68] sm:$0xff]
  %v49 = vld [vmem:[#allocation2 + $0x70] sm:$0xff]
  %v50 = vld [vmem:[#allocation2 + $0x78] sm:$0xff]
  %v51 = vld [vmem:[%s0] sm:$0xf]
  %v52 = vld [vmem:[%s0 + $0x4] sm:$0xf]
  %v53 = vld [vmem:[%s0 + $0x8] sm:$0xf]
  %v54 = vld [vmem:[%s0 + $0xc] sm:$0xf]
  %v55 = vld [vmem:[%s0 + $0x10] sm:$0xf]
  %v56 = vld [vmem:[%s0 + $0x14] sm:$0xf]
  %v57 = vld [vmem:[%s0 + $0x18] sm:$0xf]
  %v58 = vld [vmem:[%s0 + $0x1c] sm:$0xf]
  %v59 = vld [vmem:[%s0 + $0x20] sm:$0xf]
  %v60 = vld [vmem:[%s0 + $0x24] sm:$0xf]
  %v61 = vld [vmem:[%s0 + $0x28] sm:$0xf]
  %v62 = vld [vmem:[%s0 + $0x2c] sm:$0xf]
  %v63 = vld [vmem:[%s0 + $0x30] sm:$0xf]
  %v64 = vld [vmem:[%s0 + $0x34] sm:$0xf]
  %v65 = vld [vmem:[%s0 + $0x38] sm:$0xf]
  %v66 = vld [vmem:[%s0 + $0x3c] sm:$0xf]
  %v67 = vld [vmem:[%s1] sm:$0xf]
  %v68 = vld [vmem:[%s1 + $0x4] sm:$0xf]
  %v69 = vld [vmem:[%s1 + $0x8] sm:$0xf]
  %v70 = vld [vmem:[%s1 + $0xc] sm:$0xf]
  %v71 = vld [vmem:[%s1 + $0x10] sm:$0xf]
  %v72 = vld [vmem:[%s1 + $0x14] sm:$0xf]
  %v73 = vld [vmem:[%s1 + $0x18] sm:$0xf]
  %v74 = vld [vmem:[%s1 + $0x1c] sm:$0xf]
  %v75 = vld [vmem:[%s1 + $0x20] sm:$0xf]
  %v76 = vld [vmem:[%s1 + $0x24] sm:$0xf]
  %v77 = vld [vmem:[%s1 + $0x28] sm:$0xf]
  %v78 = vld [vmem:[%s1 + $0x2c] sm:$0xf]
  %v79 = vld [vmem:[%s1 + $0x30] sm:$0xf]
  %v80 = vld [vmem:[%s1 + $0x34] sm:$0xf]
  %v81 = vld [vmem:[%s1 + $0x38] sm:$0xf]
  %v82 = vld [vmem:[%s1 + $0x3c] sm:$0xf]
  %v99 = vunpack.c.l.b16 %v51
  %v100 = vunpack.c.l.b16 %v52
  %v101 = vunpack.c.l.b16 %v53
  %v102 = vunpack.c.l.b16 %v54
  %v103 = vunpack.c.l.b16 %v55
  %v104 = vunpack.c.l.b16 %v56
  %v105 = vunpack.c.l.b16 %v57
  %v106 = vunpack.c.l.b16 %v58
  %v107 = vunpack.c.l.b16 %v59
  %v108 = vunpack.c.l.b16 %v60
  %v109 = vunpack.c.l.b16 %v61
  %v110 = vunpack.c.l.b16 %v62
  %v111 = vunpack.c.l.b16 %v63
  %v112 = vunpack.c.l.b16 %v64
  %v113 = vunpack.c.l.b16 %v65
  %v114 = vunpack.c.l.b16 %v66
  %v115 = vpack.c.b16 %v100, %v99
  %v116 = vpack.c.b16 %v102, %v101
  %v117 = vpack.c.b16 %v104, %v103
  %v118 = vpack.c.b16 %v106, %v105
  %v119 = vpack.c.b16 %v108, %v107
  %v120 = vpack.c.b16 %v110, %v109
  %v121 = vpack.c.b16 %v112, %v111
  %v122 = vpack.c.b16 %v114, %v113
  %v147 = vunpack.c.l.b16 %v67
  %v148 = vunpack.c.l.b16 %v68
  %v149 = vunpack.c.l.b16 %v69
  %v150 = vunpack.c.l.b16 %v70
  %v151 = vunpack.c.l.b16 %v71
  %v152 = vunpack.c.l.b16 %v72
  %v153 = vunpack.c.l.b16 %v73
  %v154 = vunpack.c.l.b16 %v74
  %v155 = vunpack.c.l.b16 %v75
  %v156 = vunpack.c.l.b16 %v76
  %v157 = vunpack.c.l.b16 %v77
  %v158 = vunpack.c.l.b16 %v78
  %v159 = vunpack.c.l.b16 %v79
  %v160 = vunpack.c.l.b16 %v80
  %v161 = vunpack.c.l.b16 %v81
  %v162 = vunpack.c.l.b16 %v82
  %v163 = vpack.c.b16 %v148, %v147
  %v164 = vpack.c.b16 %v150, %v149
  %v165 = vpack.c.b16 %v152, %v151
  %v166 = vpack.c.b16 %v154, %v153
  %v167 = vpack.c.b16 %v156, %v155
  %v168 = vpack.c.b16 %v158, %v157
  %v169 = vpack.c.b16 %v160, %v159
  %v170 = vpack.c.b16 %v162, %v161
  %179 = vmatprep.subr.bf16.mxu0 0
  %180 = vmatpush1.bf16.msra.mxu0 %v163
  %181 = vmatprep.subr.bf16.mxu0 0
  %182 = vmatpush1.bf16.msra.mxu0 %v164
  %183 = vmatprep.subr.bf16.mxu0 0
  %184 = vmatpush1.bf16.msra.mxu0 %v165
  %185 = vmatprep.subr.bf16.mxu0 0
  %186 = vmatpush1.bf16.msra.mxu0 %v166
  %187 = vmatprep.subr.bf16.mxu0 0
  %188 = vmatpush1.bf16.msra.mxu0 %v167
  %189 = vmatprep.subr.bf16.mxu0 0
  %190 = vmatpush1.bf16.msra.mxu0 %v168
  %191 = vmatprep.subr.bf16.mxu0 0
  %192 = vmatpush1.bf16.msra.mxu0 %v169
  %193 = vmatprep.subr.bf16.mxu0 0
  %194 = vmatpush1.bf16.msra.mxu0 %v170
  %195 = vmatprep.subr.bf16.mxu0 0
  %196 = vmatpush1.bf16.msra.mxu0 0
  %197 = vmatprep.subr.bf16.mxu0 0
  %198 = vmatpush1.bf16.msra.mxu0 0
  %199 = vmatprep.subr.bf16.mxu0 0
  %200 = vmatpush1.bf16.msra.mxu0 0
  %201 = vmatprep.subr.bf16.mxu0 0
  %202 = vmatpush1.bf16.msra.mxu0 0
  %203 = vmatprep.subr.bf16.mxu0 0
  %204 = vmatpush1.bf16.msra.mxu0 0
  %205 = vmatprep.subr.bf16.mxu0 0
  %206 = vmatpush1.bf16.msra.mxu0 0
  %207 = vmatprep.subr.bf16.mxu0 0
  %208 = vmatpush1.bf16.msra.mxu0 0
  %209 = vmatprep.subr.bf16.mxu0 0
  %210 = vmatpush1.bf16.msra.mxu0 0
  %211 = vmatprep.mubr.bf16.mxu0 0
  %212 = vmatmul.mubr.bf16.gmra.mrb[0].mxu0 %v115
  %v213 = vpop.f32.mrb[0].mxu0
  %v214 = vadd.f32 0.0, %v213
  %v215 = vpop.f32.mrb[0].mxu0
  %v216 = vpop.f32.mrb[0].mxu0
  %v217 = vadd.f32 0.0, %v216
  %v218 = vpop.f32.mrb[0].mxu0
  %219 = vmatprep.mubr.bf16.mxu0 0
  %220 = vmatmul.mubr.bf16.gmra.mrb[0].mxu0 %v116
  %v221 = vpop.f32.mrb[0].mxu0
  %v222 = vadd.f32 0.0, %v221
  %v223 = vpop.f32.mrb[0].mxu0
  %v224 = vpop.f32.mrb[0].mxu0
  %v225 = vadd.f32 0.0, %v224
  %v226 = vpop.f32.mrb[0].mxu0
  %227 = vmatprep.mubr.bf16.mxu0 0
  %228 = vmatmul.mubr.bf16.gmra.mrb[0].mxu0 %v117
  %v229 = vpop.f32.mrb[0].mxu0
  %v230 = vadd.f32 0.0, %v229
  %v231 = vpop.f32.mrb[0].mxu0
  %v232 = vpop.f32.mrb[0].mxu0
  %v233 = vadd.f32 0.0, %v232
  %v234 = vpop.f32.mrb[0].mxu0
  %235 = vmatprep.mubr.bf16.mxu0 0
  %236 = vmatmul.mubr.bf16.gmra.mrb[0].mxu0 %v118
  %v237 = vpop.f32.mrb[0].mxu0
  %v238 = vadd.f32 0.0, %v237
  %v239 = vpop.f32.mrb[0].mxu0
  %v240 = vpop.f32.mrb[0].mxu0
  %v241 = vadd.f32 0.0, %v240
  %v242 = vpop.f32.mrb[0].mxu0
  %243 = vmatprep.mubr.bf16.mxu0 0
  %244 = vmatmul.mubr.bf16.gmra.mrb[0].mxu0 %v119
  %v245 = vpop.f32.mrb[0].mxu0
  %v246 = vadd.f32 0.0, %v245
  %v247 = vpop.f32.mrb[0].mxu0
  %v248 = vpop.f32.mrb[0].mxu0
  %v249 = vadd.f32 0.0, %v248
  %v250 = vpop.f32.mrb[0].mxu0
  %251 = vmatprep.mubr.bf16.mxu0 0
  %252 = vmatmul.mubr.bf16.gmra.mrb[0].mxu0 %v120
  %v253 = vpop.f32.mrb[0].mxu0
  %v254 = vadd.f32 0.0, %v253
  %v255 = vpop.f32.mrb[0].mxu0
  %v256 = vpop.f32.mrb[0].mxu0
  %v257 = vadd.f32 0.0, %v256
  %v258 = vpop.f32.mrb[0].mxu0
  %259 = vmatprep.mubr.bf16.mxu0 0
  %260 = vmatmul.mubr.bf16.gmra.mrb[0].mxu0 %v121
  %v261 = vpop.f32.mrb[0].mxu0
  %v262 = vadd.f32 0.0, %v261
  %v263 = vpop.f32.mrb[0].mxu0
  %v264 = vpop.f32.mrb[0].mxu0
  %v265 = vadd.f32 0.0, %v264
  %v266 = vpop.f32.mrb[0].mxu0
  %267 = vmatprep.mubr.bf16.mxu0 0
  %268 = vmatmul.mubr.bf16.gmra.mrb[0].mxu0 %v122
  %v269 = vpop.f32.mrb[0].mxu0
  %v270 = vadd.f32 0.0, %v269
  %v271 = vpop.f32.mrb[0].mxu0
  %v272 = vpop.f32.mrb[0].mxu0
  %v273 = vadd.f32 0.0, %v272
  %v274 = vpop.f32.mrb[0].mxu0
  %275 = vdwg.mxu0
  %v276 = vadd.f32 %v35, %v214
  %v277 = vadd.f32 %v36, %v217
  %v278 = vadd.f32 %v37, %v222
  %v279 = vadd.f32 %v38, %v225
  %v280 = vadd.f32 %v39, %v230
  %v281 = vadd.f32 %v40, %v233
  %v282 = vadd.f32 %v41, %v238
  %v283 = vadd.f32 %v42, %v241
  %v284 = vadd.f32 %v43, %v246
  %v285 = vadd.f32 %v44, %v249
  %v286 = vadd.f32 %v45, %v254
  %v287 = vadd.f32 %v46, %v257
  %v288 = vadd.f32 %v47, %v262
  %v289 = vadd.f32 %v48, %v265
  %v290 = vadd.f32 %v49, %v270
  %v291 = vadd.f32 %v50, %v273
  %292 = vst [vmem:[#allocation2] sm:$0xff] %v276
  %293 = vst [vmem:[#allocation2 + $0x8] sm:$0xff] %v277
  %294 = vst [vmem:[#allocation2 + $0x10] sm:$0xff] %v278
  %295 = vst [vmem:[#allocation2 + $0x18] sm:$0xff] %v279
  %296 = vst [vmem:[#allocation2 + $0x20] sm:$0xff] %v280
  %297 = vst [vmem:[#allocation2 + $0x28] sm:$0xff] %v281
  %298 = vst [vmem:[#allocation2 + $0x30] sm:$0xff] %v282
  %299 = vst [vmem:[#allocation2 + $0x38] sm:$0xff] %v283
  %300 = vst [vmem:[#allocation2 + $0x40] sm:$0xff] %v284
  %301 = vst [vmem:[#allocation2 + $0x48] sm:$0xff] %v285
  %302 = vst [vmem:[#allocation2 + $0x50] sm:$0xff] %v286
  %303 = vst [vmem:[#allocation2 + $0x58] sm:$0xff] %v287
  %304 = vst [vmem:[#allocation2 + $0x60] sm:$0xff] %v288
  %305 = vst [vmem:[#allocation2 + $0x68] sm:$0xff] %v289
  %306 = vst [vmem:[#allocation2 + $0x70] sm:$0xff] %v290
  %307 = vst [vmem:[#allocation2 + $0x78] sm:$0xff] %v291
  // Predicated region
  $region18: #{vqvae_forward.21} parent=0 // pred_check
    %p308 = pneg %p15
  $region19: #{vqvae_forward.21} parent=0 // pred_check_branch
    %310 = sbr.rel (%p308) target = $region21
  $region20: #{vqvae_forward.21} parent=0 // pred_region
    %v311 = vld [vmem:[#allocation2] sm:$0xff]
    %v312 = vld [vmem:[#allocation2 + $0x8] sm:$0xff]
    %v313 = vld [vmem:[#allocation2 + $0x10] sm:$0xff]
    %v314 = vld [vmem:[#allocation2 + $0x18] sm:$0xff]
    %v315 = vld [vmem:[#allocation2 + $0x20] sm:$0xff]
    %v316 = vld [vmem:[#allocation2 + $0x28] sm:$0xff]
    %v317 = vld [vmem:[#allocation2 + $0x30] sm:$0xff]
    %v318 = vld [vmem:[#allocation2 + $0x38] sm:$0xff]
    %v319 = vld [vmem:[#allocation2 + $0x40] sm:$0xff]
    %v320 = vld [vmem:[#allocation2 + $0x48] sm:$0xff]
    %v321 = vld [vmem:[#allocation2 + $0x50] sm:$0xff]
    %v322 = vld [vmem:[#allocation2 + $0x58] sm:$0xff]
    %v323 = vld [vmem:[#allocation2 + $0x60] sm:$0xff]
    %v324 = vld [vmem:[#allocation2 + $0x68] sm:$0xff]
    %v325 = vld [vmem:[#allocation2 + $0x70] sm:$0xff]
    %v326 = vld [vmem:[#allocation2 + $0x78] sm:$0xff]
    %v327 = vld [vmem:[%s2] sm:$0x1]
    %v329 = vlaneseq
    %v330 = vshrl.u32 %v329, 7
    %v331 = vsub.s32 0, %v330
    %v332 = vrot.slane %v327, %v331
    %v334 = vadd.f32 %v311, %v332
    %v335 = vadd.f32 %v312, %v332
    %v336 = vadd.f32 %v313, %v332
    %v337 = vadd.f32 %v314, %v332
    %v338 = vadd.f32 %v315, %v332
    %v339 = vadd.f32 %v316, %v332
    %v340 = vadd.f32 %v317, %v332
    %v341 = vadd.f32 %v318, %v332
    %v342 = vadd.f32 %v319, %v332
    %v343 = vadd.f32 %v320, %v332
    %v344 = vadd.f32 %v321, %v332
    %v345 = vadd.f32 %v322, %v332
    %v346 = vadd.f32 %v323, %v332
    %v347 = vadd.f32 %v324, %v332
    %v348 = vadd.f32 %v325, %v332
    %v349 = vadd.f32 %v326, %v332
    %v350 = vmax.f32 %v334, 0.0
    %v351 = vmax.f32 %v335, 0.0
    %v352 = vmax.f32 %v336, 0.0
    %v353 = vmax.f32 %v337, 0.0
    %v354 = vmax.f32 %v338, 0.0
    %v355 = vmax.f32 %v339, 0.0
    %v356 = vmax.f32 %v340, 0.0
    %v357 = vmax.f32 %v341, 0.0
    %v358 = vmax.f32 %v342, 0.0
    %v359 = vmax.f32 %v343, 0.0
    %v360 = vmax.f32 %v344, 0.0
    %v361 = vmax.f32 %v345, 0.0
    %v362 = vmax.f32 %v346, 0.0
    %v363 = vmax.f32 %v347, 0.0
    %v364 = vmax.f32 %v348, 0.0
    %v365 = vmax.f32 %v349, 0.0
    %v366 = vpack.c.bf16 %v351, %v350
    %v367 = vpack.c.bf16 %v353, %v352
    %v368 = vpack.c.bf16 %v355, %v354
    %v369 = vpack.c.bf16 %v357, %v356
    %v370 = vpack.c.bf16 %v359, %v358
    %v371 = vpack.c.bf16 %v361, %v360
    %v372 = vpack.c.bf16 %v363, %v362
    %v373 = vpack.c.bf16 %v365, %v364
    %v382 = vunpack.c.l.b16 %v366
    %v383 = vunpack.c.h.b16 %v366
    %v384 = vunpack.c.l.b16 %v367
    %v385 = vunpack.c.h.b16 %v367
    %v386 = vunpack.c.l.b16 %v368
    %v387 = vunpack.c.h.b16 %v368
    %v388 = vunpack.c.l.b16 %v369
    %v389 = vunpack.c.h.b16 %v369
    %v390 = vunpack.c.l.b16 %v370
    %v391 = vunpack.c.h.b16 %v370
    %v392 = vunpack.c.l.b16 %v371
    %v393 = vunpack.c.h.b16 %v371
    %v394 = vunpack.c.l.b16 %v372
    %v395 = vunpack.c.h.b16 %v372
    %v396 = vunpack.c.l.b16 %v373
    %v397 = vunpack.c.h.b16 %v373
    %v398 = vpack.c.b16 %v382, %v382
    %v399 = vpack.c.b16 %v383, %v383
    %v400 = vpack.c.b16 %v384, %v384
    %v401 = vpack.c.b16 %v385, %v385
    %v402 = vpack.c.b16 %v386, %v386
    %v403 = vpack.c.b16 %v387, %v387
    %v404 = vpack.c.b16 %v388, %v388
    %v405 = vpack.c.b16 %v389, %v389
    %v406 = vpack.c.b16 %v390, %v390
    %v407 = vpack.c.b16 %v391, %v391
    %v408 = vpack.c.b16 %v392, %v392
    %v409 = vpack.c.b16 %v393, %v393
    %v410 = vpack.c.b16 %v394, %v394
    %v411 = vpack.c.b16 %v395, %v395
    %v412 = vpack.c.b16 %v396, %v396
    %v413 = vpack.c.b16 %v397, %v397
    %430 = vst [vmem:[%s3] sm:$0xf] %v398
    %431 = vst [vmem:[%s3 + $0x4] sm:$0xf] %v399
    %432 = vst [vmem:[%s3 + $0x8] sm:$0xf] %v400
    %433 = vst [vmem:[%s3 + $0xc] sm:$0xf] %v401
    %434 = vst [vmem:[%s3 + $0x10] sm:$0xf] %v402
    %435 = vst [vmem:[%s3 + $0x14] sm:$0xf] %v403
    %436 = vst [vmem:[%s3 + $0x18] sm:$0xf] %v404
    %437 = vst [vmem:[%s3 + $0x1c] sm:$0xf] %v405
    %438 = vst [vmem:[%s3 + $0x20] sm:$0xf] %v406
    %439 = vst [vmem:[%s3 + $0x24] sm:$0xf] %v407
    %440 = vst [vmem:[%s3 + $0x28] sm:$0xf] %v408
    %441 = vst [vmem:[%s3 + $0x2c] sm:$0xf] %v409
    %442 = vst [vmem:[%s3 + $0x30] sm:$0xf] %v410
    %443 = vst [vmem:[%s3 + $0x34] sm:$0xf] %v411
    %444 = vst [vmem:[%s3 + $0x38] sm:$0xf] %v412
    %445 = vst [vmem:[%s3 + $0x3c] sm:$0xf] %v413
  $region21: #{vqvae_forward.21} parent=0 // pred_fallthru
    _
  // Predicated region
  $region22: #{vqvae_forward.21} parent=0 // pred_check
    _
  $region23: #{vqvae_forward.21} parent=0 // pred_check_branch
    %447 = sbr.rel (0) target = $region25
  $region24: #{vqvae_forward.21} parent=0 // pred_region
    _
  $region25: #{vqvae_forward.21} parent=0 // pred_fallthru
    _
  // Predicated region
  $region26: #{vqvae_forward.21} parent=0 // pred_check
    _
  $region27: #{vqvae_forward.21} parent=0 // pred_check_branch
    %449 = sbr.rel (0) target = $region29
  $region28: #{vqvae_forward.21} parent=0 // pred_region
    _
  $region29: #{vqvae_forward.21} parent=0 // pred_fallthru
    _

// kernel: vqvae_forward.22
$region0: #{vqvae_forward.22}
  #allocation0 [shape = 'u32[]', space=smem, size = 0x4, offset = 0x4, fixed_abs, tag = 'smem constant byte address 0x4 - core index']
  #allocation1 [shape = 'u32[144,128]{1,0:T(1,128)}', space=vmem, size = 0x12000, scoped, tag = 'internal scratch']
  #allocation2 [shape = 'f32[32,128]{1,0:T(8,128)}', space=vmem, size = 0x4000, scoped, tag = 'scratch operand']
  %s0 = inlined_call_operand.vmem [shape: bf16[32,256], index: 0, kind: input, shape index: {}]
  %s1 = inlined_call_operand.vmem [shape: bf16[256,128], index: 1, kind: input, shape index: {}]
  %s2 = inlined_call_operand.vmem [shape: f32[1,128], index: 2, kind: input, shape index: {}]
  %s3 = inlined_call_operand.vmem [shape: bf16[32,128], index: 3, kind: output, shape index: {}]
  %s4 = sld [smem:[#allocation0]]
  $region30: #{vqvae_forward.22} parent=0
    _
  %s6 = ssub.s32 1, %s4
  %s7 = scalar_select 0, %s6, %s4
  // Predicated region
  $region2: #{vqvae_forward.22} parent=0 // pred_check
    _
  $region3: #{vqvae_forward.22} parent=0 // pred_check_branch
    %9 = sbr.rel (0) target = $region5
  $region4: #{vqvae_forward.22} parent=0 // pred_region
    _
  $region5: #{vqvae_forward.22} parent=0 // pred_fallthru
    _
  // Predicated region
  $region6: #{vqvae_forward.22} parent=0 // pred_check
    _
  $region7: #{vqvae_forward.22} parent=0 // pred_check_branch
    %11 = sbr.rel (0) target = $region9
  $region8: #{vqvae_forward.22} parent=0 // pred_region
    _
  $region9: #{vqvae_forward.22} parent=0 // pred_fallthru
    _
  // Predicated region
  $region10: #{vqvae_forward.22} parent=0 // pred_check
    _
  $region11: #{vqvae_forward.22} parent=0 // pred_check_branch
    %13 = sbr.rel (0) target = $region13
  $region12: #{vqvae_forward.22} parent=0 // pred_region
    _
  $region13: #{vqvae_forward.22} parent=0 // pred_fallthru
    _
  %p15 = scmp.eq.s32.totalorder 0, 0
  // Predicated region
  $region14: #{vqvae_forward.22} parent=0 // pred_check
    %p16 = pneg %p15
  $region15: #{vqvae_forward.22} parent=0 // pred_check_branch
    %18 = sbr.rel (%p16) target = $region17
  $region16: #{vqvae_forward.22} parent=0 // pred_region
    %19 = vst [vmem:[#allocation2] sm:$0xff] 0.0
    %20 = vst [vmem:[#allocation2 + $0x8] sm:$0xff] 0.0
    %21 = vst [vmem:[#allocation2 + $0x10] sm:$0xff] 0.0
    %22 = vst [vmem:[#allocation2 + $0x18] sm:$0xff] 0.0
  $region17: #{vqvae_forward.22} parent=0 // pred_fallthru
    _
  %v23 = vld [vmem:[#allocation2] sm:$0xff]
  %v24 = vld [vmem:[#allocation2 + $0x8] sm:$0xff]
  %v25 = vld [vmem:[#allocation2 + $0x10] sm:$0xff]
  %v26 = vld [vmem:[#allocation2 + $0x18] sm:$0xff]
  %v27 = vld [vmem:[%s0] sm:$0xff]
  %v28 = vld [vmem:[%s0 + $0x8] sm:$0xff]
  %v29 = vld [vmem:[%s0 + $0x10] sm:$0xff]
  %v30 = vld [vmem:[%s0 + $0x18] sm:$0xff]
  %v31 = vld [vmem:[%s1] sm:$0xf]
  %v32 = vld [vmem:[%s1 + $0x4] sm:$0xf]
  %v33 = vld [vmem:[%s1 + $0x8] sm:$0xf]
  %v34 = vld [vmem:[%s1 + $0xc] sm:$0xf]
  %v35 = vld [vmem:[%s1 + $0x10] sm:$0xf]
  %v36 = vld [vmem:[%s1 + $0x14] sm:$0xf]
  %v37 = vld [vmem:[%s1 + $0x18] sm:$0xf]
  %v38 = vld [vmem:[%s1 + $0x1c] sm:$0xf]
  %v39 = vld [vmem:[%s1 + $0x20] sm:$0xf]
  %v40 = vld [vmem:[%s1 + $0x24] sm:$0xf]
  %v41 = vld [vmem:[%s1 + $0x28] sm:$0xf]
  %v42 = vld [vmem:[%s1 + $0x2c] sm:$0xf]
  %v43 = vld [vmem:[%s1 + $0x30] sm:$0xf]
  %v44 = vld [vmem:[%s1 + $0x34] sm:$0xf]
  %v45 = vld [vmem:[%s1 + $0x38] sm:$0xf]
  %v46 = vld [vmem:[%s1 + $0x3c] sm:$0xf]
  %v47 = vld [vmem:[%s1 + $0x40] sm:$0xf]
  %v48 = vld [vmem:[%s1 + $0x44] sm:$0xf]
  %v49 = vld [vmem:[%s1 + $0x48] sm:$0xf]
  %v50 = vld [vmem:[%s1 + $0x4c] sm:$0xf]
  %v51 = vld [vmem:[%s1 + $0x50] sm:$0xf]
  %v52 = vld [vmem:[%s1 + $0x54] sm:$0xf]
  %v53 = vld [vmem:[%s1 + $0x58] sm:$0xf]
  %v54 = vld [vmem:[%s1 + $0x5c] sm:$0xf]
  %v55 = vld [vmem:[%s1 + $0x60] sm:$0xf]
  %v56 = vld [vmem:[%s1 + $0x64] sm:$0xf]
  %v57 = vld [vmem:[%s1 + $0x68] sm:$0xf]
  %v58 = vld [vmem:[%s1 + $0x6c] sm:$0xf]
  %v59 = vld [vmem:[%s1 + $0x70] sm:$0xf]
  %v60 = vld [vmem:[%s1 + $0x74] sm:$0xf]
  %v61 = vld [vmem:[%s1 + $0x78] sm:$0xf]
  %v62 = vld [vmem:[%s1 + $0x7c] sm:$0xf]
  %v67 = vunpack.c.l.b16 %v27
  %v68 = vunpack.c.h.b16 %v27
  %v69 = vunpack.c.l.b16 %v28
  %v70 = vunpack.c.h.b16 %v28
  %v71 = vunpack.c.l.b16 %v29
  %v72 = vunpack.c.h.b16 %v29
  %v73 = vunpack.c.l.b16 %v30
  %v74 = vunpack.c.h.b16 %v30
  %v75 = vpack.c.b16 %v69, %v67
  %v76 = vpack.c.b16 %v70, %v68
  %v77 = vpack.c.b16 %v73, %v71
  %v78 = vpack.c.b16 %v74, %v72
  %v115 = vunpack.c.l.b16 %v31
  %v116 = vunpack.c.l.b16 %v32
  %v117 = vunpack.c.l.b16 %v33
  %v118 = vunpack.c.l.b16 %v34
  %v119 = vunpack.c.l.b16 %v35
  %v120 = vunpack.c.l.b16 %v36
  %v121 = vunpack.c.l.b16 %v37
  %v122 = vunpack.c.l.b16 %v38
  %v123 = vunpack.c.l.b16 %v39
  %v124 = vunpack.c.l.b16 %v40
  %v125 = vunpack.c.l.b16 %v41
  %v126 = vunpack.c.l.b16 %v42
  %v127 = vunpack.c.l.b16 %v43
  %v128 = vunpack.c.l.b16 %v44
  %v129 = vunpack.c.l.b16 %v45
  %v130 = vunpack.c.l.b16 %v46
  %v131 = vunpack.c.l.b16 %v47
  %v132 = vunpack.c.l.b16 %v48
  %v133 = vunpack.c.l.b16 %v49
  %v134 = vunpack.c.l.b16 %v50
  %v135 = vunpack.c.l.b16 %v51
  %v136 = vunpack.c.l.b16 %v52
  %v137 = vunpack.c.l.b16 %v53
  %v138 = vunpack.c.l.b16 %v54
  %v139 = vunpack.c.l.b16 %v55
  %v140 = vunpack.c.l.b16 %v56
  %v141 = vunpack.c.l.b16 %v57
  %v142 = vunpack.c.l.b16 %v58
  %v143 = vunpack.c.l.b16 %v59
  %v144 = vunpack.c.l.b16 %v60
  %v145 = vunpack.c.l.b16 %v61
  %v146 = vunpack.c.l.b16 %v62
  %v147 = vpack.c.b16 %v116, %v115
  %v148 = vpack.c.b16 %v118, %v117
  %v149 = vpack.c.b16 %v120, %v119
  %v150 = vpack.c.b16 %v122, %v121
  %v151 = vpack.c.b16 %v124, %v123
  %v152 = vpack.c.b16 %v126, %v125
  %v153 = vpack.c.b16 %v128, %v127
  %v154 = vpack.c.b16 %v130, %v129
  %v155 = vpack.c.b16 %v132, %v131
  %v156 = vpack.c.b16 %v134, %v133
  %v157 = vpack.c.b16 %v136, %v135
  %v158 = vpack.c.b16 %v138, %v137
  %v159 = vpack.c.b16 %v140, %v139
  %v160 = vpack.c.b16 %v142, %v141
  %v161 = vpack.c.b16 %v144, %v143
  %v162 = vpack.c.b16 %v146, %v145
  %179 = vmatprep.subr.bf16.mxu0 0
  %180 = vmatpush1.bf16.msra.mxu0 %v147
  %181 = vmatprep.subr.bf16.mxu0 0
  %182 = vmatpush1.bf16.msra.mxu0 %v148
  %183 = vmatprep.subr.bf16.mxu0 0
  %184 = vmatpush1.bf16.msra.mxu0 %v149
  %185 = vmatprep.subr.bf16.mxu0 0
  %186 = vmatpush1.bf16.msra.mxu0 %v150
  %187 = vmatprep.subr.bf16.mxu0 0
  %188 = vmatpush1.bf16.msra.mxu0 %v151
  %189 = vmatprep.subr.bf16.mxu0 0
  %190 = vmatpush1.bf16.msra.mxu0 %v152
  %191 = vmatprep.subr.bf16.mxu0 0
  %192 = vmatpush1.bf16.msra.mxu0 %v153
  %193 = vmatprep.subr.bf16.mxu0 0
  %194 = vmatpush1.bf16.msra.mxu0 %v154
  %195 = vmatprep.subr.bf16.mxu0 0
  %196 = vmatpush1.bf16.msra.mxu0 %v155
  %197 = vmatprep.subr.bf16.mxu0 0
  %198 = vmatpush1.bf16.msra.mxu0 %v156
  %199 = vmatprep.subr.bf16.mxu0 0
  %200 = vmatpush1.bf16.msra.mxu0 %v157
  %201 = vmatprep.subr.bf16.mxu0 0
  %202 = vmatpush1.bf16.msra.mxu0 %v158
  %203 = vmatprep.subr.bf16.mxu0 0
  %204 = vmatpush1.bf16.msra.mxu0 %v159
  %205 = vmatprep.subr.bf16.mxu0 0
  %206 = vmatpush1.bf16.msra.mxu0 %v160
  %207 = vmatprep.subr.bf16.mxu0 0
  %208 = vmatpush1.bf16.msra.mxu0 %v161
  %209 = vmatprep.subr.bf16.mxu0 0
  %210 = vmatpush1.bf16.msra.mxu0 %v162
  %211 = vmatprep.mubr.bf16.mxu0 %v76
  %212 = vmatmul.mubr.bf16.gmra.mrb[0].mxu0 %v75
  %v213 = vpop.f32.mrb[0].mxu0
  %v214 = vadd.f32 0.0, %v213
  %v215 = vpop.f32.mrb[0].mxu0
  %v216 = vpop.f32.mrb[0].mxu0
  %v217 = vadd.f32 0.0, %v216
  %v218 = vpop.f32.mrb[0].mxu0
  %219 = vmatprep.mubr.bf16.mxu0 %v78
  %220 = vmatmul.mubr.bf16.gmra.mrb[0].mxu0 %v77
  %v221 = vpop.f32.mrb[0].mxu0
  %v222 = vadd.f32 0.0, %v221
  %v223 = vpop.f32.mrb[0].mxu0
  %v224 = vpop.f32.mrb[0].mxu0
  %v225 = vadd.f32 0.0, %v224
  %v226 = vpop.f32.mrb[0].mxu0
  %227 = vdwg.mxu0
  %v228 = vadd.f32 %v23, %v214
  %v229 = vadd.f32 %v24, %v217
  %v230 = vadd.f32 %v25, %v222
  %v231 = vadd.f32 %v26, %v225
  %232 = vst [vmem:[#allocation2] sm:$0xff] %v228
  %233 = vst [vmem:[#allocation2 + $0x8] sm:$0xff] %v229
  %234 = vst [vmem:[#allocation2 + $0x10] sm:$0xff] %v230
  %235 = vst [vmem:[#allocation2 + $0x18] sm:$0xff] %v231
  // Predicated region
  $region18: #{vqvae_forward.22} parent=0 // pred_check
    %p236 = pneg %p15
  $region19: #{vqvae_forward.22} parent=0 // pred_check_branch
    %238 = sbr.rel (%p236) target = $region21
  $region20: #{vqvae_forward.22} parent=0 // pred_region
    %v239 = vld [vmem:[#allocation2] sm:$0xff]
    %v240 = vld [vmem:[#allocation2 + $0x8] sm:$0xff]
    %v241 = vld [vmem:[#allocation2 + $0x10] sm:$0xff]
    %v242 = vld [vmem:[#allocation2 + $0x18] sm:$0xff]
    %v243 = vld [vmem:[%s2] sm:$0x1]
    %v245 = vlaneseq
    %v246 = vshrl.u32 %v245, 7
    %v247 = vsub.s32 0, %v246
    %v248 = vrot.slane %v243, %v247
    %v250 = vadd.f32 %v239, %v248
    %v251 = vadd.f32 %v240, %v248
    %v252 = vadd.f32 %v241, %v248
    %v253 = vadd.f32 %v242, %v248
    %v254 = vmax.f32 %v250, 0.0
    %v255 = vmax.f32 %v251, 0.0
    %v256 = vmax.f32 %v252, 0.0
    %v257 = vmax.f32 %v253, 0.0
    %v258 = vpack.c.bf16 %v255, %v254
    %v259 = vpack.c.bf16 %v257, %v256
    %v262 = vunpack.c.l.b16 %v258
    %v263 = vunpack.c.h.b16 %v258
    %v264 = vunpack.c.l.b16 %v259
    %v265 = vunpack.c.h.b16 %v259
    %v266 = vpack.c.b16 %v262, %v262
    %v267 = vpack.c.b16 %v263, %v263
    %v268 = vpack.c.b16 %v264, %v264
    %v269 = vpack.c.b16 %v265, %v265
    %274 = vst [vmem:[%s3] sm:$0xf] %v266
    %275 = vst [vmem:[%s3 + $0x4] sm:$0xf] %v267
    %276 = vst [vmem:[%s3 + $0x8] sm:$0xf] %v268
    %277 = vst [vmem:[%s3 + $0xc] sm:$0xf] %v269
  $region21: #{vqvae_forward.22} parent=0 // pred_fallthru
    _
  // Predicated region
  $region22: #{vqvae_forward.22} parent=0 // pred_check
    _
  $region23: #{vqvae_forward.22} parent=0 // pred_check_branch
    %279 = sbr.rel (0) target = $region25
  $region24: #{vqvae_forward.22} parent=0 // pred_region
    _
  $region25: #{vqvae_forward.22} parent=0 // pred_fallthru
    _
  // Predicated region
  $region26: #{vqvae_forward.22} parent=0 // pred_check
    _
  $region27: #{vqvae_forward.22} parent=0 // pred_check_branch
    %281 = sbr.rel (0) target = $region29
  $region28: #{vqvae_forward.22} parent=0 // pred_region
    _
  $region29: #{vqvae_forward.22} parent=0 // pred_fallthru
    _

// kernel: vqvae_forward.23
$region0: #{vqvae_forward.23}
  #allocation0 [shape = 'u32[]', space=smem, size = 0x4, offset = 0x4, fixed_abs, tag = 'smem constant byte address 0x4 - core index']
  #allocation1 [shape = 'u32[144,128]{1,0:T(1,128)}', space=vmem, size = 0x12000, scoped, tag = 'internal scratch']
  #allocation2 [shape = 'f32[32,128]{1,0:T(8,128)}', space=vmem, size = 0x4000, scoped, tag = 'scratch operand']
  %s0 = inlined_call_operand.vmem [shape: bf16[32,384], index: 0, kind: input, shape index: {}]
  %s1 = inlined_call_operand.vmem [shape: bf16[384,128], index: 1, kind: input, shape index: {}]
  %s2 = inlined_call_operand.vmem [shape: f32[1,128], index: 2, kind: input, shape index: {}]
  %s3 = inlined_call_operand.vmem [shape: bf16[32,128], index: 3, kind: output, shape index: {}]
  %s4 = sld [smem:[#allocation0]]
  $region30: #{vqvae_forward.23} parent=0
    _
  %s6 = ssub.s32 1, %s4
  %s7 = scalar_select 0, %s6, %s4
  // Predicated region
  $region2: #{vqvae_forward.23} parent=0 // pred_check
    _
  $region3: #{vqvae_forward.23} parent=0 // pred_check_branch
    %9 = sbr.rel (0) target = $region5
  $region4: #{vqvae_forward.23} parent=0 // pred_region
    _
  $region5: #{vqvae_forward.23} parent=0 // pred_fallthru
    _
  // Predicated region
  $region6: #{vqvae_forward.23} parent=0 // pred_check
    _
  $region7: #{vqvae_forward.23} parent=0 // pred_check_branch
    %11 = sbr.rel (0) target = $region9
  $region8: #{vqvae_forward.23} parent=0 // pred_region
    _
  $region9: #{vqvae_forward.23} parent=0 // pred_fallthru
    _
  // Predicated region
  $region10: #{vqvae_forward.23} parent=0 // pred_check
    _
  $region11: #{vqvae_forward.23} parent=0 // pred_check_branch
    %13 = sbr.rel (0) target = $region13
  $region12: #{vqvae_forward.23} parent=0 // pred_region
    _
  $region13: #{vqvae_forward.23} parent=0 // pred_fallthru
    _
  %p15 = scmp.eq.s32.totalorder 0, 0
  // Predicated region
  $region14: #{vqvae_forward.23} parent=0 // pred_check
    %p16 = pneg %p15
  $region15: #{vqvae_forward.23} parent=0 // pred_check_branch
    %18 = sbr.rel (%p16) target = $region17
  $region16: #{vqvae_forward.23} parent=0 // pred_region
    %19 = vst [vmem:[#allocation2] sm:$0xff] 0.0
    %20 = vst [vmem:[#allocation2 + $0x8] sm:$0xff] 0.0
    %21 = vst [vmem:[#allocation2 + $0x10] sm:$0xff] 0.0
    %22 = vst [vmem:[#allocation2 + $0x18] sm:$0xff] 0.0
  $region17: #{vqvae_forward.23} parent=0 // pred_fallthru
    _
  %v23 = vld [vmem:[#allocation2] sm:$0xff]
  %v24 = vld [vmem:[#allocation2 + $0x8] sm:$0xff]
  %v25 = vld [vmem:[#allocation2 + $0x10] sm:$0xff]
  %v26 = vld [vmem:[#allocation2 + $0x18] sm:$0xff]
  %v27 = vld [vmem:[%s0] sm:$0xff]
  %v28 = vld [vmem:[%s0 + $0x8] sm:$0xf]
  %v29 = vld [vmem:[%s0 + $0xc] sm:$0xff]
  %v30 = vld [vmem:[%s0 + $0x14] sm:$0xf]
  %v31 = vld [vmem:[%s0 + $0x18] sm:$0xff]
  %v32 = vld [vmem:[%s0 + $0x20] sm:$0xf]
  %v33 = vld [vmem:[%s0 + $0x24] sm:$0xff]
  %v34 = vld [vmem:[%s0 + $0x2c] sm:$0xf]
  %v35 = vld [vmem:[%s1] sm:$0xf]
  %v36 = vld [vmem:[%s1 + $0x4] sm:$0xf]
  %v37 = vld [vmem:[%s1 + $0x8] sm:$0xf]
  %v38 = vld [vmem:[%s1 + $0xc] sm:$0xf]
  %v39 = vld [vmem:[%s1 + $0x10] sm:$0xf]
  %v40 = vld [vmem:[%s1 + $0x14] sm:$0xf]
  %v41 = vld [vmem:[%s1 + $0x18] sm:$0xf]
  %v42 = vld [vmem:[%s1 + $0x1c] sm:$0xf]
  %v43 = vld [vmem:[%s1 + $0x20] sm:$0xf]
  %v44 = vld [vmem:[%s1 + $0x24] sm:$0xf]
  %v45 = vld [vmem:[%s1 + $0x28] sm:$0xf]
  %v46 = vld [vmem:[%s1 + $0x2c] sm:$0xf]
  %v47 = vld [vmem:[%s1 + $0x30] sm:$0xf]
  %v48 = vld [vmem:[%s1 + $0x34] sm:$0xf]
  %v49 = vld [vmem:[%s1 + $0x38] sm:$0xf]
  %v50 = vld [vmem:[%s1 + $0x3c] sm:$0xf]
  %v51 = vld [vmem:[%s1 + $0x40] sm:$0xf]
  %v52 = vld [vmem:[%s1 + $0x44] sm:$0xf]
  %v53 = vld [vmem:[%s1 + $0x48] sm:$0xf]
  %v54 = vld [vmem:[%s1 + $0x4c] sm:$0xf]
  %v55 = vld [vmem:[%s1 + $0x50] sm:$0xf]
  %v56 = vld [vmem:[%s1 + $0x54] sm:$0xf]
  %v57 = vld [vmem:[%s1 + $0x58] sm:$0xf]
  %v58 = vld [vmem:[%s1 + $0x5c] sm:$0xf]
  %v59 = vld [vmem:[%s1 + $0x60] sm:$0xf]
  %v60 = vld [vmem:[%s1 + $0x64] sm:$0xf]
  %v61 = vld [vmem:[%s1 + $0x68] sm:$0xf]
  %v62 = vld [vmem:[%s1 + $0x6c] sm:$0xf]
  %v63 = vld [vmem:[%s1 + $0x70] sm:$0xf]
  %v64 = vld [vmem:[%s1 + $0x74] sm:$0xf]
  %v65 = vld [vmem:[%s1 + $0x78] sm:$0xf]
  %v66 = vld [vmem:[%s1 + $0x7c] sm:$0xf]
  %v67 = vld [vmem:[%s1 + $0x80] sm:$0xf]
  %v68 = vld [vmem:[%s1 + $0x84] sm:$0xf]
  %v69 = vld [vmem:[%s1 + $0x88] sm:$0xf]
  %v70 = vld [vmem:[%s1 + $0x8c] sm:$0xf]
  %v71 = vld [vmem:[%s1 + $0x90] sm:$0xf]
  %v72 = vld [vmem:[%s1 + $0x94] sm:$0xf]
  %v73 = vld [vmem:[%s1 + $0x98] sm:$0xf]
  %v74 = vld [vmem:[%s1 + $0x9c] sm:$0xf]
  %v75 = vld [vmem:[%s1 + $0xa0] sm:$0xf]
  %v76 = vld [vmem:[%s1 + $0xa4] sm:$0xf]
  %v77 = vld [vmem:[%s1 + $0xa8] sm:$0xf]
  %v78 = vld [vmem:[%s1 + $0xac] sm:$0xf]
  %v79 = vld [vmem:[%s1 + $0xb0] sm:$0xf]
  %v80 = vld [vmem:[%s1 + $0xb4] sm:$0xf]
  %v81 = vld [vmem:[%s1 + $0xb8] sm:$0xf]
  %v82 = vld [vmem:[%s1 + $0xbc] sm:$0xf]
  %v91 = vunpack.c.l.b16 %v27
  %v92 = vunpack.c.h.b16 %v27
  %v93 = vunpack.c.l.b16 %v28
  %v94 = vunpack.c.l.b16 %v29
  %v95 = vunpack.c.h.b16 %v29
  %v96 = vunpack.c.l.b16 %v30
  %v97 = vunpack.c.l.b16 %v31
  %v98 = vunpack.c.h.b16 %v31
  %v99 = vunpack.c.l.b16 %v32
  %v100 = vunpack.c.l.b16 %v33
  %v101 = vunpack.c.h.b16 %v33
  %v102 = vunpack.c.l.b16 %v34
  %v103 = vpack.c.b16 %v94, %v91
  %v104 = vpack.c.b16 %v95, %v92
  %v105 = vpack.c.b16 %v96, %v93
  %v106 = vpack.c.b16 %v100, %v97
  %v107 = vpack.c.b16 %v101, %v98
  %v108 = vpack.c.b16 %v102, %v99
  %v163 = vunpack.c.l.b16 %v35
  %v164 = vunpack.c.l.b16 %v36
  %v165 = vunpack.c.l.b16 %v37
  %v166 = vunpack.c.l.b16 %v38
  %v167 = vunpack.c.l.b16 %v39
  %v168 = vunpack.c.l.b16 %v40
  %v169 = vunpack.c.l.b16 %v41
  %v170 = vunpack.c.l.b16 %v42
  %v171 = vunpack.c.l.b16 %v43
  %v172 = vunpack.c.l.b16 %v44
  %v173 = vunpack.c.l.b16 %v45
  %v174 = vunpack.c.l.b16 %v46
  %v175 = vunpack.c.l.b16 %v47
  %v176 = vunpack.c.l.b16 %v48
  %v177 = vunpack.c.l.b16 %v49
  %v178 = vunpack.c.l.b16 %v50
  %v179 = vunpack.c.l.b16 %v51
  %v180 = vunpack.c.l.b16 %v52
  %v181 = vunpack.c.l.b16 %v53
  %v182 = vunpack.c.l.b16 %v54
  %v183 = vunpack.c.l.b16 %v55
  %v184 = vunpack.c.l.b16 %v56
  %v185 = vunpack.c.l.b16 %v57
  %v186 = vunpack.c.l.b16 %v58
  %v187 = vunpack.c.l.b16 %v59
  %v188 = vunpack.c.l.b16 %v60
  %v189 = vunpack.c.l.b16 %v61
  %v190 = vunpack.c.l.b16 %v62
  %v191 = vunpack.c.l.b16 %v63
  %v192 = vunpack.c.l.b16 %v64
  %v193 = vunpack.c.l.b16 %v65
  %v194 = vunpack.c.l.b16 %v66
  %v195 = vunpack.c.l.b16 %v67
  %v196 = vunpack.c.l.b16 %v68
  %v197 = vunpack.c.l.b16 %v69
  %v198 = vunpack.c.l.b16 %v70
  %v199 = vunpack.c.l.b16 %v71
  %v200 = vunpack.c.l.b16 %v72
  %v201 = vunpack.c.l.b16 %v73
  %v202 = vunpack.c.l.b16 %v74
  %v203 = vunpack.c.l.b16 %v75
  %v204 = vunpack.c.l.b16 %v76
  %v205 = vunpack.c.l.b16 %v77
  %v206 = vunpack.c.l.b16 %v78
  %v207 = vunpack.c.l.b16 %v79
  %v208 = vunpack.c.l.b16 %v80
  %v209 = vunpack.c.l.b16 %v81
  %v210 = vunpack.c.l.b16 %v82
  %v211 = vpack.c.b16 %v164, %v163
  %v212 = vpack.c.b16 %v166, %v165
  %v213 = vpack.c.b16 %v168, %v167
  %v214 = vpack.c.b16 %v170, %v169
  %v215 = vpack.c.b16 %v172, %v171
  %v216 = vpack.c.b16 %v174, %v173
  %v217 = vpack.c.b16 %v176, %v175
  %v218 = vpack.c.b16 %v178, %v177
  %v219 = vpack.c.b16 %v180, %v179
  %v220 = vpack.c.b16 %v182, %v181
  %v221 = vpack.c.b16 %v184, %v183
  %v222 = vpack.c.b16 %v186, %v185
  %v223 = vpack.c.b16 %v188, %v187
  %v224 = vpack.c.b16 %v190, %v189
  %v225 = vpack.c.b16 %v192, %v191
  %v226 = vpack.c.b16 %v194, %v193
  %v227 = vpack.c.b16 %v196, %v195
  %v228 = vpack.c.b16 %v198, %v197
  %v229 = vpack.c.b16 %v200, %v199
  %v230 = vpack.c.b16 %v202, %v201
  %v231 = vpack.c.b16 %v204, %v203
  %v232 = vpack.c.b16 %v206, %v205
  %v233 = vpack.c.b16 %v208, %v207
  %v234 = vpack.c.b16 %v210, %v209
  %259 = vmatprep.subr.bf16.mxu0 0
  %260 = vmatpush1.bf16.msra.mxu0 %v211
  %261 = vmatprep.subr.bf16.mxu0 0
  %262 = vmatpush1.bf16.msra.mxu0 %v212
  %263 = vmatprep.subr.bf16.mxu0 0
  %264 = vmatpush1.bf16.msra.mxu0 %v213
  %265 = vmatprep.subr.bf16.mxu0 0
  %266 = vmatpush1.bf16.msra.mxu0 %v214
  %267 = vmatprep.subr.bf16.mxu0 0
  %268 = vmatpush1.bf16.msra.mxu0 %v215
  %269 = vmatprep.subr.bf16.mxu0 0
  %270 = vmatpush1.bf16.msra.mxu0 %v216
  %271 = vmatprep.subr.bf16.mxu0 0
  %272 = vmatpush1.bf16.msra.mxu0 %v217
  %273 = vmatprep.subr.bf16.mxu0 0
  %274 = vmatpush1.bf16.msra.mxu0 %v218
  %275 = vmatprep.subr.bf16.mxu0 0
  %276 = vmatpush1.bf16.msra.mxu0 %v219
  %277 = vmatprep.subr.bf16.mxu0 0
  %278 = vmatpush1.bf16.msra.mxu0 %v220
  %279 = vmatprep.subr.bf16.mxu0 0
  %280 = vmatpush1.bf16.msra.mxu0 %v221
  %281 = vmatprep.subr.bf16.mxu0 0
  %282 = vmatpush1.bf16.msra.mxu0 %v222
  %283 = vmatprep.subr.bf16.mxu0 0
  %284 = vmatpush1.bf16.msra.mxu0 %v223
  %285 = vmatprep.subr.bf16.mxu0 0
  %286 = vmatpush1.bf16.msra.mxu0 %v224
  %287 = vmatprep.subr.bf16.mxu0 0
  %288 = vmatpush1.bf16.msra.mxu0 %v225
  %289 = vmatprep.subr.bf16.mxu0 0
  %290 = vmatpush1.bf16.msra.mxu0 %v226
  %291 = vmatprep.mubr.bf16.mxu0 %v104
  %292 = vmatmul.mubr.bf16.gmra.mrb[0].mxu0 %v103
  %v293 = vpop.f32.mrb[0].mxu0
  %v294 = vadd.f32 0.0, %v293
  %v295 = vpop.f32.mrb[0].mxu0
  %v296 = vpop.f32.mrb[0].mxu0
  %v297 = vadd.f32 0.0, %v296
  %v298 = vpop.f32.mrb[0].mxu0
  %299 = vmatprep.mubr.bf16.mxu0 %v107
  %300 = vmatmul.mubr.bf16.gmra.mrb[0].mxu0 %v106
  %v301 = vpop.f32.mrb[0].mxu0
  %v302 = vadd.f32 0.0, %v301
  %v303 = vpop.f32.mrb[0].mxu0
  %v304 = vpop.f32.mrb[0].mxu0
  %v305 = vadd.f32 0.0, %v304
  %v306 = vpop.f32.mrb[0].mxu0
  %307 = vdwg.mxu0
  %308 = vmatprep.subr.bf16.mxu0 0
  %309 = vmatpush1.bf16.msra.mxu0 %v227
  %310 = vmatprep.subr.bf16.mxu0 0
  %311 = vmatpush1.bf16.msra.mxu0 %v228
  %312 = vmatprep.subr.bf16.mxu0 0
  %313 = vmatpush1.bf16.msra.mxu0 %v229
  %314 = vmatprep.subr.bf16.mxu0 0
  %315 = vmatpush1.bf16.msra.mxu0 %v230
  %316 = vmatprep.subr.bf16.mxu0 0
  %317 = vmatpush1.bf16.msra.mxu0 %v231
  %318 = vmatprep.subr.bf16.mxu0 0
  %319 = vmatpush1.bf16.msra.mxu0 %v232
  %320 = vmatprep.subr.bf16.mxu0 0
  %321 = vmatpush1.bf16.msra.mxu0 %v233
  %322 = vmatprep.subr.bf16.mxu0 0
  %323 = vmatpush1.bf16.msra.mxu0 %v234
  %324 = vmatprep.subr.bf16.mxu0 0
  %325 = vmatpush1.bf16.msra.mxu0 0
  %326 = vmatprep.subr.bf16.mxu0 0
  %327 = vmatpush1.bf16.msra.mxu0 0
  %328 = vmatprep.subr.bf16.mxu0 0
  %329 = vmatpush1.bf16.msra.mxu0 0
  %330 = vmatprep.subr.bf16.mxu0 0
  %331 = vmatpush1.bf16.msra.mxu0 0
  %332 = vmatprep.subr.bf16.mxu0 0
  %333 = vmatpush1.bf16.msra.mxu0 0
  %334 = vmatprep.subr.bf16.mxu0 0
  %335 = vmatpush1.bf16.msra.mxu0 0
  %336 = vmatprep.subr.bf16.mxu0 0
  %337 = vmatpush1.bf16.msra.mxu0 0
  %338 = vmatprep.subr.bf16.mxu0 0
  %339 = vmatpush1.bf16.msra.mxu0 0
  %340 = vmatprep.mubr.bf16.mxu0 0
  %341 = vmatmul.mubr.bf16.gmra.mrb[0].mxu0 %v105
  %v342 = vpop.f32.mrb[0].mxu0
  %v343 = vadd.f32 %v294, %v342
  %v344 = vpop.f32.mrb[0].mxu0
  %v345 = vpop.f32.mrb[0].mxu0
  %v346 = vadd.f32 %v297, %v345
  %v347 = vpop.f32.mrb[0].mxu0
  %348 = vmatprep.mubr.bf16.mxu0 0
  %349 = vmatmul.mubr.bf16.gmra.mrb[0].mxu0 %v108
  %v350 = vpop.f32.mrb[0].mxu0
  %v351 = vadd.f32 %v302, %v350
  %v352 = vpop.f32.mrb[0].mxu0
  %v353 = vpop.f32.mrb[0].mxu0
  %v354 = vadd.f32 %v305, %v353
  %v355 = vpop.f32.mrb[0].mxu0
  %356 = vdwg.mxu0
  %v357 = vadd.f32 %v23, %v343
  %v358 = vadd.f32 %v24, %v346
  %v359 = vadd.f32 %v25, %v351
  %v360 = vadd.f32 %v26, %v354
  %361 = vst [vmem:[#allocation2] sm:$0xff] %v357
  %362 = vst [vmem:[#allocation2 + $0x8] sm:$0xff] %v358
  %363 = vst [vmem:[#allocation2 + $0x10] sm:$0xff] %v359
  %364 = vst [vmem:[#allocation2 + $0x18] sm:$0xff] %v360
  // Predicated region
  $region18: #{vqvae_forward.23} parent=0 // pred_check
    %p365 = pneg %p15
  $region19: #{vqvae_forward.23} parent=0 // pred_check_branch
    %367 = sbr.rel (%p365) target = $region21
  $region20: #{vqvae_forward.23} parent=0 // pred_region
    %v368 = vld [vmem:[#allocation2] sm:$0xff]
    %v369 = vld [vmem:[#allocation2 + $0x8] sm:$0xff]
    %v370 = vld [vmem:[#allocation2 + $0x10] sm:$0xff]
    %v371 = vld [vmem:[#allocation2 + $0x18] sm:$0xff]
    %v372 = vld [vmem:[%s2] sm:$0x1]
    %v374 = vlaneseq
    %v375 = vshrl.u32 %v374, 7
    %v376 = vsub.s32 0, %v375
    %v377 = vrot.slane %v372, %v376
    %v379 = vadd.f32 %v368, %v377
    %v380 = vadd.f32 %v369, %v377
    %v381 = vadd.f32 %v370, %v377
    %v382 = vadd.f32 %v371, %v377
    %v383 = vmax.f32 %v379, 0.0
    %v384 = vmax.f32 %v380, 0.0
    %v385 = vmax.f32 %v381, 0.0
    %v386 = vmax.f32 %v382, 0.0
    %v387 = vpack.c.bf16 %v384, %v383
    %v388 = vpack.c.bf16 %v386, %v385
    %v391 = vunpack.c.l.b16 %v387
    %v392 = vunpack.c.h.b16 %v387
    %v393 = vunpack.c.l.b16 %v388
    %v394 = vunpack.c.h.b16 %v388
    %v395 = vpack.c.b16 %v391, %v391
    %v396 = vpack.c.b16 %v392, %v392
    %v397 = vpack.c.b16 %v393, %v393
    %v398 = vpack.c.b16 %v394, %v394
    %403 = vst [vmem:[%s3] sm:$0xf] %v395
    %404 = vst [vmem:[%s3 + $0x4] sm:$0xf] %v396
    %405 = vst [vmem:[%s3 + $0x8] sm:$0xf] %v397
    %406 = vst [vmem:[%s3 + $0xc] sm:$0xf] %v398
  $region21: #{vqvae_forward.23} parent=0 // pred_fallthru
    _
  // Predicated region
  $region22: #{vqvae_forward.23} parent=0 // pred_check
    _
  $region23: #{vqvae_forward.23} parent=0 // pred_check_branch
    %408 = sbr.rel (0) target = $region25
  $region24: #{vqvae_forward.23} parent=0 // pred_region
    _
  $region25: #{vqvae_forward.23} parent=0 // pred_fallthru
    _
  // Predicated region
  $region26: #{vqvae_forward.23} parent=0 // pred_check
    _
  $region27: #{vqvae_forward.23} parent=0 // pred_check_branch
    %410 = sbr.rel (0) target = $region29
  $region28: #{vqvae_forward.23} parent=0 // pred_region
    _
  $region29: #{vqvae_forward.23} parent=0 // pred_fallthru
    _

// kernel: vqvae_forward.24
$region0: #{vqvae_forward.24}
  #allocation0 [shape = 'u32[]', space=smem, size = 0x4, offset = 0x4, fixed_abs, tag = 'smem constant byte address 0x4 - core index']
  #allocation1 [shape = 'u32[144,128]{1,0:T(1,128)}', space=vmem, size = 0x12000, scoped, tag = 'internal scratch']
  #allocation2 [shape = 'f32[32,128]{1,0:T(8,128)}', space=vmem, size = 0x4000, scoped, tag = 'scratch operand']
  %s0 = inlined_call_operand.vmem [shape: bf16[32,640], index: 0, kind: input, shape index: {}]
  %s1 = inlined_call_operand.vmem [shape: bf16[640,128], index: 1, kind: input, shape index: {}]
  %s2 = inlined_call_operand.vmem [shape: f32[1,128], index: 2, kind: input, shape index: {}]
  %s3 = inlined_call_operand.vmem [shape: bf16[32,128], index: 3, kind: output, shape index: {}]
  %s4 = sld [smem:[#allocation0]]
  $region94: #{vqvae_forward.24} parent=0
    _
  %s6 = ssub.s32 1, %s4
  %s7 = scalar_select 0, %s6, %s4
  $region1: #{vqvae_forward.24} parent=0
    #allocation3 [shape = 'u8[16384]{0}', space=vmem, size = 0x4000, scoped, tag = 'input window, operand 0']
    loop: start=0, step=1, limit=7
    $region2: #{vqvae_forward.24} parent=1 // loop_pre_header
      _
    $region3: #{vqvae_forward.24} parent=1 // loop_header
      %s9 = sphi 0, %s13
      %p10 = scmp.ge.s32.totalorder %s9, 7
      %s16 = sphi 0, %s35
      %s17 = sphi 0, %s31
      %s18 = sphi 0, %s27
      %s19 = sphi 0, %s16
      %s20 = sphi 0, %s17
      %s21 = sphi 0, %s18
      %s22 = sphi 0, %s19
      %s23 = sphi 0, %s20
      %s24 = sphi 0, %s21
      %s40 = sphi 0, %s42
      %s43 = sphi 0, %s40
      %s44 = sphi 0, %s43
      %s60 = sphi 0, %s44
      %s68 = sphi 0, %s70
      %s71 = sphi 0, %s68
      %s72 = sphi 0, %s71
      %s88 = sphi 0, %s72
      %s94 = sphi 0, %s96
      %s97 = sphi 0, %s94
      %s98 = sphi 0, %s97
      %s114 = sphi 0, %s98
      %s122 = sphi 0, %s124
      %s125 = sphi 0, %s122
      %s126 = sphi 0, %s125
      %s142 = sphi 0, %s126
    $region4: #{vqvae_forward.24} parent=1 // loop_header_branch
      %12 = sbr.rel (%p10) target = $region8
    $region5: #{vqvae_forward.24} parent=1 // loop_body
      %s14 = ssub.s32 %s9, 1
      %s15 = ssub.s32 %s9, 2
      %s25 = sadd.s32 1, %s18
      %p26 = scmp.ge.s32.totalorder %s25, 5
      %s27 = scalar_select %p26, 0, %s25
      %s28 = sadd.s32 1, %s17
      %s29 = scalar_select %p26, %s28, %s17
      %p30 = scmp.ge.s32.totalorder %s29, 1
      %s31 = scalar_select %p30, 0, %s29
      %s32 = sadd.s32 1, %s16
      %s33 = scalar_select %p30, %s32, %s16
      %p34 = scmp.ge.s32.totalorder %s33, 1
      %s35 = scalar_select %p34, 0, %s33
      %s36 = ssub.s32 %s16, %s35
      %s37 = ssub.s32 %s18, %s27
      %s38 = sor.u32 %s36, %s37
      %p39 = scmp.eq.s32.totalorder %s38, 0
      %s41 = sadd.s32 %s40, 1
      %s42 = scalar_select %p39, %s40, %s41
      %p45 = pneg %p39
      %p46 = scmp.eq.s32.totalorder %s9, 4
      %p47 = por %p45, %p46
      %p48 = scmp.ne.s32.totalorder %s40, %s43
      %p49 = scmp.eq.s32.totalorder %s9, 0
      %p50 = por %p48, %p49
      %p51 = scmp.ne.s32.totalorder %s40, %s43
      %p52 = scmp.eq.s32.totalorder %s14, 4
      %p53 = por %p51, %p52
      %p54 = scmp.ne.s32.totalorder %s43, %s44
      %p55 = scmp.eq.s32.totalorder %s14, 0
      %p56 = por %p54, %p55
      %p57 = scmp.ne.s32.totalorder %s43, %s44
      %p58 = scmp.eq.s32.totalorder %s15, 4
      %p59 = por %p57, %p58
      %p61 = scmp.ne.s32.totalorder %s44, %s60
      %p62 = scmp.eq.s32.totalorder %s15, 0
      %p63 = por %p61, %p62
      %s64 = ssub.s32 %s18, %s27
      %s65 = ssub.s32 %s17, %s31
      %s66 = sor.u32 %s64, %s65
      %p67 = scmp.eq.s32.totalorder %s66, 0
      %s69 = sadd.s32 %s68, 1
      %s70 = scalar_select %p67, %s68, %s69
      %p73 = pneg %p67
      %p74 = scmp.eq.s32.totalorder %s9, 4
      %p75 = por %p73, %p74
      %p76 = scmp.ne.s32.totalorder %s68, %s71
      %p77 = scmp.eq.s32.totalorder %s9, 0
      %p78 = por %p76, %p77
      %p79 = scmp.ne.s32.totalorder %s68, %s71
      %p80 = scmp.eq.s32.totalorder %s14, 4
      %p81 = por %p79, %p80
      %p82 = scmp.ne.s32.totalorder %s71, %s72
      %p83 = scmp.eq.s32.totalorder %s14, 0
      %p84 = por %p82, %p83
      %p85 = scmp.ne.s32.totalorder %s71, %s72
      %p86 = scmp.eq.s32.totalorder %s15, 4
      %p87 = por %p85, %p86
      %p89 = scmp.ne.s32.totalorder %s72, %s88
      %p90 = scmp.eq.s32.totalorder %s15, 0
      %p91 = por %p89, %p90
      %s92 = ssub.s32 %s17, %s31
      %p93 = scmp.eq.s32.totalorder %s92, 0
      %s95 = sadd.s32 %s94, 1
      %s96 = scalar_select %p93, %s94, %s95
      %p99 = pneg %p93
      %p100 = scmp.eq.s32.totalorder %s9, 4
      %p101 = por %p99, %p100
      %p102 = scmp.ne.s32.totalorder %s94, %s97
      %p103 = scmp.eq.s32.totalorder %s9, 0
      %p104 = por %p102, %p103
      %p105 = scmp.ne.s32.totalorder %s94, %s97
      %p106 = scmp.eq.s32.totalorder %s14, 4
      %p107 = por %p105, %p106
      %p108 = scmp.ne.s32.totalorder %s97, %s98
      %p109 = scmp.eq.s32.totalorder %s14, 0
      %p110 = por %p108, %p109
      %p111 = scmp.ne.s32.totalorder %s97, %s98
      %p112 = scmp.eq.s32.totalorder %s15, 4
      %p113 = por %p111, %p112
      %p115 = scmp.ne.s32.totalorder %s98, %s114
      %p116 = scmp.eq.s32.totalorder %s15, 0
      %p117 = por %p115, %p116
      %s118 = ssub.s32 %s16, %s35
      %s119 = ssub.s32 %s17, %s31
      %s120 = sor.u32 %s118, %s119
      %p121 = scmp.eq.s32.totalorder %s120, 0
      %s123 = sadd.s32 %s122, 1
      %s124 = scalar_select %p121, %s122, %s123
      %p127 = pneg %p121
      %p128 = scmp.eq.s32.totalorder %s9, 4
      %p129 = por %p127, %p128
      %p130 = scmp.ne.s32.totalorder %s122, %s125
      %p131 = scmp.eq.s32.totalorder %s9, 0
      %p132 = por %p130, %p131
      %p133 = scmp.ne.s32.totalorder %s122, %s125
      %p134 = scmp.eq.s32.totalorder %s14, 4
      %p135 = por %p133, %p134
      %p136 = scmp.ne.s32.totalorder %s125, %s126
      %p137 = scmp.eq.s32.totalorder %s14, 0
      %p138 = por %p136, %p137
      %p139 = scmp.ne.s32.totalorder %s125, %s126
      %p140 = scmp.eq.s32.totalorder %s15, 4
      %p141 = por %p139, %p140
      %p143 = scmp.ne.s32.totalorder %s126, %s142
      %p144 = scmp.eq.s32.totalorder %s15, 0
      %p145 = por %p143, %p144
      %p146 = scmp.le.s32.totalorder 1, %s9
      %p147 = scmp.lt.s32.totalorder %s9, 6
      %p148 = pnand %p146, %p147
      %p149 = pneg %p148
      // Predicated region
      $region9: #{vqvae_forward.24} parent=5 // pred_check
        _
      $region10: #{vqvae_forward.24} parent=5 // pred_check_branch
        %151 = sbr.rel (%p148) target = $region12
      $region11: #{vqvae_forward.24} parent=5 // pred_region
        %s152 = ssub.s32 %s9, 1
        // Predicated region
        $region13: #{vqvae_forward.24} parent=11 // pred_check
          %p153 = pneg %p110
        $region14: #{vqvae_forward.24} parent=11 // pred_check_branch
          %155 = sbr.rel (%p153) target = $region16
        $region15: #{vqvae_forward.24} parent=11 // pred_region
          %p156 = scmp.lt.s32.totalorder %s20, 0
          %s157 = scalar_select %p156, %s20, 0
          %s158 = scalar_lea.vmem %s2, %s157
        $region16: #{vqvae_forward.24} parent=11 // pred_fallthru
          _
      $region12: #{vqvae_forward.24} parent=5 // pred_fallthru
        _
      %p159 = scmp.lt.s32.totalorder %s9, 5
      // Predicated region
      $region17: #{vqvae_forward.24} parent=5 // pred_check
        %p160 = pneg %p159
      $region18: #{vqvae_forward.24} parent=5 // pred_check_branch
        %162 = sbr.rel (%p160) target = $region20
      $region19: #{vqvae_forward.24} parent=5 // pred_region
        // Predicated region
        $region21: #{vqvae_forward.24} parent=19 // pred_check
          %p163 = pneg %p50
        $region22: #{vqvae_forward.24} parent=19 // pred_check_branch
          %165 = sbr.rel (%p163) target = $region24
        $region23: #{vqvae_forward.24} parent=19 // pred_region
          %s166 = sand.u32 %s40, 1
          %s167 = sand.u32 %s40, 1
          %s168 = smul.addr %s167, 16
          %s169 = scalar_lea.vmem [#allocation3], %s168
          %s170 = smul.u32 4, %s16
          %s171 = smul.addr %s170, 5
          %s172 = sadd.s32 %s18, %s171
          %s173 = smul.addr %s172, 4
          %s174 = scalar_lea.vmem %s0, %s173
          // Predicated region
          $region25: #{vqvae_forward.24} parent=23 // pred_check
            _
          $region26: #{vqvae_forward.24} parent=23 // pred_check_branch
            %176 = sbr.rel (0) target = $region28
          $region27: #{vqvae_forward.24} parent=23 // pred_region
            // Predicated region
            $region29: #{vqvae_forward.24} parent=27 // pred_check
              _
            $region30: #{vqvae_forward.24} parent=27 // pred_check_branch
              %178 = sbr.rel target = $region32
            $region31: #{vqvae_forward.24} parent=27 // pred_region
              // Predicated region
              $region44: #{vqvae_forward.24} parent=31 // pred_check
                _
              $region45: #{vqvae_forward.24} parent=31 // pred_check_branch
                %199 = sbr.rel (0) target = $region47
              $region46: #{vqvae_forward.24} parent=31 // pred_region
                loop: start=0, step=1, limit=1
                $region48: #{vqvae_forward.24} parent=46 // loop_pre_header
                  _
                $region49: #{vqvae_forward.24} parent=46 // loop_header
                  %s201 = sphi 0, %s205
                  %p202 = scmp.ge.s32.totalorder %s201, 1
                  %s206 = sphi %s174, %s174
                  %s207 = sphi %s169, %s169
                $region50: #{vqvae_forward.24} parent=46 // loop_header_branch
                  %204 = sbr.rel (%p202) target = $region54
                $region51: #{vqvae_forward.24} parent=46 // loop_body
                  _
                $region52: #{vqvae_forward.24} parent=46 // loop_footer
                  %s205 = sadd.s32 1, %s201
                $region53: #{vqvae_forward.24} parent=46 // loop_footer_branch
                  %200 = sbr.rel target = $region49
                $region54: #{vqvae_forward.24} parent=46 // loop_exit
                  _
                loop: start=0, step=1, limit=1
                $region55: #{vqvae_forward.24} parent=46 // loop_pre_header
                  _
                $region56: #{vqvae_forward.24} parent=46 // loop_header
                  %s210 = sphi 0, %s214
                  %p211 = scmp.ge.s32.totalorder %s210, 1
                  %s215 = sphi %s174, %s174
                  %s216 = sphi %s169, %s169
                $region57: #{vqvae_forward.24} parent=46 // loop_header_branch
                  %213 = sbr.rel (%p211) target = $region61
                $region58: #{vqvae_forward.24} parent=46 // loop_body
                  %v217 = vld [vmem:[%s215] sm:$0xf]
                  %218 = vst [vmem:[%s216] sm:$0xf] %v217
                  %v219 = vld [vmem:[%s215 + $0x14] sm:$0xf]
                  %220 = vst [vmem:[%s216 + $0x4] sm:$0xf] %v219
                  %v221 = vld [vmem:[%s215 + $0x28] sm:$0xf]
                  %222 = vst [vmem:[%s216 + $0x8] sm:$0xf] %v221
                  %v223 = vld [vmem:[%s215 + $0x3c] sm:$0xf]
                  %224 = vst [vmem:[%s216 + $0xc] sm:$0xf] %v223
                $region59: #{vqvae_forward.24} parent=46 // loop_footer
                  %s214 = sadd.s32 1, %s210
                $region60: #{vqvae_forward.24} parent=46 // loop_footer_branch
                  %209 = sbr.rel target = $region56
                $region61: #{vqvae_forward.24} parent=46 // loop_exit
                  _
              $region47: #{vqvae_forward.24} parent=31 // pred_fallthru
                _
            $region32: #{vqvae_forward.24} parent=27 // pred_fallthru
              _
            // Predicated region
            $region33: #{vqvae_forward.24} parent=27 // pred_check
              _
            $region34: #{vqvae_forward.24} parent=27 // pred_check_branch
              %180 = sbr.rel (0) target = $region36
            $region35: #{vqvae_forward.24} parent=27 // pred_region
              loop: start=0, step=1, limit=1
              $region37: #{vqvae_forward.24} parent=35 // loop_pre_header
                _
              $region38: #{vqvae_forward.24} parent=35 // loop_header
                %s183 = sphi 0, %s187
                %p184 = scmp.ge.s32.totalorder %s183, 1
                %s188 = sphi %s174, %s174
                %s189 = sphi %s169, %s169
              $region39: #{vqvae_forward.24} parent=35 // loop_header_branch
                %186 = sbr.rel (%p184) target = $region43
              $region40: #{vqvae_forward.24} parent=35 // loop_body
                %v190 = vld [vmem:[%s188] sm:$0xf]
                %191 = vst [vmem:[%s189] sm:$0xf] %v190
                %v192 = vld [vmem:[%s188 + $0x14] sm:$0xf]
                %193 = vst [vmem:[%s189 + $0x4] sm:$0xf] %v192
                %v194 = vld [vmem:[%s188 + $0x28] sm:$0xf]
                %195 = vst [vmem:[%s189 + $0x8] sm:$0xf] %v194
                %v196 = vld [vmem:[%s188 + $0x3c] sm:$0xf]
                %197 = vst [vmem:[%s189 + $0xc] sm:$0xf] %v196
              $region41: #{vqvae_forward.24} parent=35 // loop_footer
                %s187 = sadd.s32 1, %s183
              $region42: #{vqvae_forward.24} parent=35 // loop_footer_branch
                %182 = sbr.rel target = $region38
              $region43: #{vqvae_forward.24} parent=35 // loop_exit
                _
            $region36: #{vqvae_forward.24} parent=27 // pred_fallthru
              _
          $region28: #{vqvae_forward.24} parent=23 // pred_fallthru
            _
          %225 = vnop
        $region24: #{vqvae_forward.24} parent=19 // pred_fallthru
          _
        // Predicated region
        $region62: #{vqvae_forward.24} parent=19 // pred_check
          %p226 = pneg %p78
        $region63: #{vqvae_forward.24} parent=19 // pred_check_branch
          %228 = sbr.rel (%p226) target = $region65
        $region64: #{vqvae_forward.24} parent=19 // pred_region
          %s229 = smul.u32 16, %s18
          %p230 = scmp.lt.s32.totalorder %s229, 79
          %s231 = scalar_select %p230, %s229, 79
          %p232 = scmp.lt.s32.totalorder %s17, 0
          %s233 = scalar_select %p232, %s17, 0
          %s234 = sadd.s32 %s233, %s231
          %s235 = smul.addr %s234, 4
          %s236 = scalar_lea.vmem %s1, %s235
          %s237 = smul.u32 16, %s18
        $region65: #{vqvae_forward.24} parent=19 // pred_fallthru
          _
      $region20: #{vqvae_forward.24} parent=5 // pred_fallthru
        _
      %p238 = scmp.le.s32.totalorder 1, %s9
      %p239 = scmp.lt.s32.totalorder %s9, 6
      %p240 = pnand %p238, %p239
      %p241 = pneg %p240
      // Predicated region
      $region66: #{vqvae_forward.24} parent=5 // pred_check
        _
      $region67: #{vqvae_forward.24} parent=5 // pred_check_branch
        %243 = sbr.rel (%p240) target = $region69
      $region68: #{vqvae_forward.24} parent=5 // pred_region
        %s244 = ssub.s32 %s9, 1
        %s245 = sand.u32 %s43, 1
        %s246 = sand.u32 %s43, 1
        %s247 = smul.addr %s246, 16
        %s248 = scalar_lea.vmem [#allocation3], %s247
        // Predicated region
        $region70: #{vqvae_forward.24} parent=68 // pred_check
          %p249 = pneg %p56
        $region71: #{vqvae_forward.24} parent=68 // pred_check_branch
          %251 = sbr.rel (%p249) target = $region73
        $region72: #{vqvae_forward.24} parent=68 // pred_region
          _
        $region73: #{vqvae_forward.24} parent=68 // pred_fallthru
          _
        %s252 = sand.u32 %s43, 1
        %s253 = sand.u32 %s43, 1
        %s254 = smul.addr %s253, 16
        %s255 = scalar_lea.vmem [#allocation3], %s254
        %p256 = pneg %p56
        %p257 = pneg %p53
        %s258 = smul.u32 16, %s21
        %p259 = scmp.lt.s32.totalorder %s258, 79
        %s260 = scalar_select %p259, %s258, 79
        %p261 = scmp.lt.s32.totalorder %s20, 0
        %s262 = scalar_select %p261, %s20, 0
        %s263 = sadd.s32 %s262, %s260
        %s264 = smul.addr %s263, 4
        %s265 = scalar_lea.vmem %s1, %s264
        %p266 = pneg %p84
        %p267 = pneg %p81
        %p268 = scmp.lt.s32.totalorder %s20, 0
        %s269 = scalar_select %p268, %s20, 0
        %s270 = scalar_lea.vmem %s2, %s269
        %p271 = pneg %p110
        %p272 = pneg %p107
        %p273 = pneg %p138
        %p274 = pneg %p135
        %s275 = smul.u32 4, %s19
        %p276 = scmp.lt.s32.totalorder %s275, 3
        %s277 = scalar_select %p276, %s275, 3
        %p278 = scmp.lt.s32.totalorder %s20, 0
        %s279 = scalar_select %p278, %s20, 0
        %s280 = sadd.s32 %s279, %s277
        %s281 = smul.addr %s280, 4
        %s282 = scalar_lea.vmem %s3, %s281
        %s283 = smul.u32 4, %s19
        %s284 = smul.u32 16, %s21
        %p285 = scmp.lt.s32.totalorder %s284, 79
        %s286 = scalar_select %p285, %s284, 79
        %p287 = scmp.lt.s32.totalorder %s20, 0
        %s288 = scalar_select %p287, %s20, 0
        %s289 = sadd.s32 %s288, %s286
        %s290 = smul.addr %s289, 4
        %s291 = scalar_lea.vmem %s1, %s290
        %s292 = smul.u32 16, %s21
        %p293 = scmp.lt.s32.totalorder %s20, 0
        %s294 = scalar_select %p293, %s20, 0
        %s295 = scalar_lea.vmem %s2, %s294
        %s296 = smul.u32 4, %s19
        %p297 = scmp.lt.s32.totalorder %s296, 3
        %s298 = scalar_select %p297, %s296, 3
        %p299 = scmp.lt.s32.totalorder %s20, 0
        %s300 = scalar_select %p299, %s20, 0
        %s301 = sadd.s32 %s300, %s298
        %s302 = smul.addr %s301, 4
        %s303 = scalar_lea.vmem %s3, %s302
        %s304 = smul.u32 4, %s19
        %p306 = scmp.eq.s32.totalorder %s21, 0
        // Predicated region
        $region74: #{vqvae_forward.24} parent=68 // pred_check
          %p307 = pneg %p306
        $region75: #{vqvae_forward.24} parent=68 // pred_check_branch
          %309 = sbr.rel (%p307) target = $region77
        $region76: #{vqvae_forward.24} parent=68 // pred_region
          %310 = vst [vmem:[#allocation2] sm:$0xff] 0.0
          %311 = vst [vmem:[#allocation2 + $0x8] sm:$0xff] 0.0
          %312 = vst [vmem:[#allocation2 + $0x10] sm:$0xff] 0.0
          %313 = vst [vmem:[#allocation2 + $0x18] sm:$0xff] 0.0
        $region77: #{vqvae_forward.24} parent=68 // pred_fallthru
          _
        %v314 = vld [vmem:[#allocation2] sm:$0xff]
        %v315 = vld [vmem:[#allocation2 + $0x8] sm:$0xff]
        %v316 = vld [vmem:[#allocation2 + $0x10] sm:$0xff]
        %v317 = vld [vmem:[#allocation2 + $0x18] sm:$0xff]
        %v318 = vld [vmem:[%s248] sm:$0xf]
        %v319 = vld [vmem:[%s248 + $0x4] sm:$0xf]
        %v320 = vld [vmem:[%s248 + $0x8] sm:$0xf]
        %v321 = vld [vmem:[%s248 + $0xc] sm:$0xf]
        %v322 = vld [vmem:[%s291] sm:$0xf]
        %v323 = vld [vmem:[%s291 + $0x4] sm:$0xf]
        %v324 = vld [vmem:[%s291 + $0x8] sm:$0xf]
        %v325 = vld [vmem:[%s291 + $0xc] sm:$0xf]
        %v326 = vld [vmem:[%s291 + $0x10] sm:$0xf]
        %v327 = vld [vmem:[%s291 + $0x14] sm:$0xf]
        %v328 = vld [vmem:[%s291 + $0x18] sm:$0xf]
        %v329 = vld [vmem:[%s291 + $0x1c] sm:$0xf]
        %v330 = vld [vmem:[%s291 + $0x20] sm:$0xf]
        %v331 = vld [vmem:[%s291 + $0x24] sm:$0xf]
        %v332 = vld [vmem:[%s291 + $0x28] sm:$0xf]
        %v333 = vld [vmem:[%s291 + $0x2c] sm:$0xf]
        %v334 = vld [vmem:[%s291 + $0x30] sm:$0xf]
        %v335 = vld [vmem:[%s291 + $0x34] sm:$0xf]
        %v336 = vld [vmem:[%s291 + $0x38] sm:$0xf]
        %v337 = vld [vmem:[%s291 + $0x3c] sm:$0xf]
        %v342 = vunpack.c.l.b16 %v318
        %v343 = vunpack.c.l.b16 %v319
        %v344 = vunpack.c.l.b16 %v320
        %v345 = vunpack.c.l.b16 %v321
        %v346 = vpack.c.b16 %v343, %v342
        %v347 = vpack.c.b16 %v345, %v344
        %v366 = vunpack.c.l.b16 %v322
        %v367 = vunpack.c.l.b16 %v323
        %v368 = vunpack.c.l.b16 %v324
        %v369 = vunpack.c.l.b16 %v325
        %v370 = vunpack.c.l.b16 %v326
        %v371 = vunpack.c.l.b16 %v327
        %v372 = vunpack.c.l.b16 %v328
        %v373 = vunpack.c.l.b16 %v329
        %v374 = vunpack.c.l.b16 %v330
        %v375 = vunpack.c.l.b16 %v331
        %v376 = vunpack.c.l.b16 %v332
        %v377 = vunpack.c.l.b16 %v333
        %v378 = vunpack.c.l.b16 %v334
        %v379 = vunpack.c.l.b16 %v335
        %v380 = vunpack.c.l.b16 %v336
        %v381 = vunpack.c.l.b16 %v337
        %v382 = vpack.c.b16 %v367, %v366
        %v383 = vpack.c.b16 %v369, %v368
        %v384 = vpack.c.b16 %v371, %v370
        %v385 = vpack.c.b16 %v373, %v372
        %v386 = vpack.c.b16 %v375, %v374
        %v387 = vpack.c.b16 %v377, %v376
        %v388 = vpack.c.b16 %v379, %v378
        %v389 = vpack.c.b16 %v381, %v380
        %398 = vmatprep.subr.bf16.mxu0 0
        %399 = vmatpush1.bf16.msra.mxu0 %v382
        %400 = vmatprep.subr.bf16.mxu0 0
        %401 = vmatpush1.bf16.msra.mxu0 %v383
        %402 = vmatprep.subr.bf16.mxu0 0
        %403 = vmatpush1.bf16.msra.mxu0 %v384
        %404 = vmatprep.subr.bf16.mxu0 0
        %405 = vmatpush1.bf16.msra.mxu0 %v385
        %406 = vmatprep.subr.bf16.mxu0 0
        %407 = vmatpush1.bf16.msra.mxu0 %v386
        %408 = vmatprep.subr.bf16.mxu0 0
        %409 = vmatpush1.bf16.msra.mxu0 %v387
        %410 = vmatprep.subr.bf16.mxu0 0
        %411 = vmatpush1.bf16.msra.mxu0 %v388
        %412 = vmatprep.subr.bf16.mxu0 0
        %413 = vmatpush1.bf16.msra.mxu0 %v389
        %414 = vmatprep.subr.bf16.mxu0 0
        %415 = vmatpush1.bf16.msra.mxu0 0
        %416 = vmatprep.subr.bf16.mxu0 0
        %417 = vmatpush1.bf16.msra.mxu0 0
        %418 = vmatprep.subr.bf16.mxu0 0
        %419 = vmatpush1.bf16.msra.mxu0 0
        %420 = vmatprep.subr.bf16.mxu0 0
        %421 = vmatpush1.bf16.msra.mxu0 0
        %422 = vmatprep.subr.bf16.mxu0 0
        %423 = vmatpush1.bf16.msra.mxu0 0
        %424 = vmatprep.subr.bf16.mxu0 0
        %425 = vmatpush1.bf16.msra.mxu0 0
        %426 = vmatprep.subr.bf16.mxu0 0
        %427 = vmatpush1.bf16.msra.mxu0 0
        %428 = vmatprep.subr.bf16.mxu0 0
        %429 = vmatpush1.bf16.msra.mxu0 0
        %430 = vmatprep.mubr.bf16.mxu0 0
        %431 = vmatmul.mubr.bf16.gmra.mrb[0].mxu0 %v346
        %v432 = vpop.f32.mrb[0].mxu0
        %v433 = vadd.f32 0.0, %v432
        %v434 = vpop.f32.mrb[0].mxu0
        %v435 = vpop.f32.mrb[0].mxu0
        %v436 = vadd.f32 0.0, %v435
        %v437 = vpop.f32.mrb[0].mxu0
        %438 = vmatprep.mubr.bf16.mxu0 0
        %439 = vmatmul.mubr.bf16.gmra.mrb[0].mxu0 %v347
        %v440 = vpop.f32.mrb[0].mxu0
        %v441 = vadd.f32 0.0, %v440
        %v442 = vpop.f32.mrb[0].mxu0
        %v443 = vpop.f32.mrb[0].mxu0
        %v444 = vadd.f32 0.0, %v443
        %v445 = vpop.f32.mrb[0].mxu0
        %446 = vdwg.mxu0
        %v447 = vadd.f32 %v314, %v433
        %v448 = vadd.f32 %v315, %v436
        %v449 = vadd.f32 %v316, %v441
        %v450 = vadd.f32 %v317, %v444
        %451 = vst [vmem:[#allocation2] sm:$0xff] %v447
        %452 = vst [vmem:[#allocation2 + $0x8] sm:$0xff] %v448
        %453 = vst [vmem:[#allocation2 + $0x10] sm:$0xff] %v449
        %454 = vst [vmem:[#allocation2 + $0x18] sm:$0xff] %v450
        %p455 = scmp.eq.s32.totalorder %s21, 4
        // Predicated region
        $region78: #{vqvae_forward.24} parent=68 // pred_check
          %p456 = pneg %p455
        $region79: #{vqvae_forward.24} parent=68 // pred_check_branch
          %458 = sbr.rel (%p456) target = $region81
        $region80: #{vqvae_forward.24} parent=68 // pred_region
          %v459 = vld [vmem:[#allocation2] sm:$0xff]
          %v460 = vld [vmem:[#allocation2 + $0x8] sm:$0xff]
          %v461 = vld [vmem:[#allocation2 + $0x10] sm:$0xff]
          %v462 = vld [vmem:[#allocation2 + $0x18] sm:$0xff]
          %v463 = vld [vmem:[%s295] sm:$0x1]
          %v465 = vlaneseq
          %v466 = vshrl.u32 %v465, 7
          %v467 = vsub.s32 0, %v466
          %v468 = vrot.slane %v463, %v467
          %v470 = vadd.f32 %v459, %v468
          %v471 = vadd.f32 %v460, %v468
          %v472 = vadd.f32 %v461, %v468
          %v473 = vadd.f32 %v462, %v468
          %v474 = vmax.f32 %v470, 0.0
          %v475 = vmax.f32 %v471, 0.0
          %v476 = vmax.f32 %v472, 0.0
          %v477 = vmax.f32 %v473, 0.0
          %v478 = vpack.c.bf16 %v475, %v474
          %v479 = vpack.c.bf16 %v477, %v476
          %v482 = vunpack.c.l.b16 %v478
          %v483 = vunpack.c.h.b16 %v478
          %v484 = vunpack.c.l.b16 %v479
          %v485 = vunpack.c.h.b16 %v479
          %v486 = vpack.c.b16 %v482, %v482
          %v487 = vpack.c.b16 %v483, %v483
          %v488 = vpack.c.b16 %v484, %v484
          %v489 = vpack.c.b16 %v485, %v485
          %494 = vst [vmem:[%s303] sm:$0xf] %v486
          %495 = vst [vmem:[%s303 + $0x4] sm:$0xf] %v487
          %496 = vst [vmem:[%s303 + $0x8] sm:$0xf] %v488
          %497 = vst [vmem:[%s303 + $0xc] sm:$0xf] %v489
        $region81: #{vqvae_forward.24} parent=68 // pred_fallthru
          _
        %s498 = smul.u32 4, %s19
        %p499 = scmp.lt.s32.totalorder %s498, 3
        %s500 = scalar_select %p499, %s498, 3
        %p501 = scmp.lt.s32.totalorder %s20, 0
        %s502 = scalar_select %p501, %s20, 0
        %s503 = sadd.s32 %s502, %s500
        %s504 = smul.addr %s503, 4
        %s505 = scalar_lea.vmem %s3, %s504
        // Predicated region
        $region82: #{vqvae_forward.24} parent=68 // pred_check
          %p506 = pneg %p135
        $region83: #{vqvae_forward.24} parent=68 // pred_check_branch
          %508 = sbr.rel (%p506) target = $region85
        $region84: #{vqvae_forward.24} parent=68 // pred_region
          %s509 = smul.u32 4, %s19
        $region85: #{vqvae_forward.24} parent=68 // pred_fallthru
          _
        // Predicated region
        $region86: #{vqvae_forward.24} parent=68 // pred_check
          %p510 = pneg %p135
        $region87: #{vqvae_forward.24} parent=68 // pred_check_branch
          %512 = sbr.rel (%p510) target = $region89
        $region88: #{vqvae_forward.24} parent=68 // pred_region
          %s513 = smul.u32 4, %s19
          %p514 = scmp.lt.s32.totalorder %s513, 3
          %s515 = scalar_select %p514, %s513, 3
          %p516 = scmp.lt.s32.totalorder %s20, 0
          %s517 = scalar_select %p516, %s20, 0
          %s518 = sadd.s32 %s517, %s515
          %s519 = smul.addr %s518, 4
          %s520 = scalar_lea.vmem %s3, %s519
        $region89: #{vqvae_forward.24} parent=68 // pred_fallthru
          _
      $region69: #{vqvae_forward.24} parent=5 // pred_fallthru
        _
      %p521 = scmp.le.s32.totalorder 2, %s9
      // Predicated region
      $region90: #{vqvae_forward.24} parent=5 // pred_check
        %p522 = pneg %p521
      $region91: #{vqvae_forward.24} parent=5 // pred_check_branch
        %524 = sbr.rel (%p522) target = $region93
      $region92: #{vqvae_forward.24} parent=5 // pred_region
        %s525 = ssub.s32 %s9, 2
      $region93: #{vqvae_forward.24} parent=5 // pred_fallthru
        _
    $region6: #{vqvae_forward.24} parent=1 // loop_footer
      %s13 = sadd.s32 1, %s9
    $region7: #{vqvae_forward.24} parent=1 // loop_footer_branch
      %8 = sbr.rel target = $region3
    $region8: #{vqvae_forward.24} parent=1 // loop_exit
      _

// kernel: vqvae_forward.25
$region0: #{vqvae_forward.25}
  #allocation0 [shape = 'u32[]', space=smem, size = 0x4, offset = 0x4, fixed_abs, tag = 'smem constant byte address 0x4 - core index']
  #allocation1 [shape = 'u32[144,128]{1,0:T(1,128)}', space=vmem, size = 0x12000, scoped, tag = 'internal scratch']
  #allocation2 [shape = 'f32[32,128]{1,0:T(8,128)}', space=vmem, size = 0x4000, scoped, tag = 'scratch operand']
  %s0 = inlined_call_operand.vmem [shape: bf16[32,128], index: 0, kind: input, shape index: {}]
  %s1 = inlined_call_operand.vmem [shape: bf16[128,128], index: 1, kind: input, shape index: {}]
  %s2 = inlined_call_operand.vmem [shape: f32[1,128], index: 2, kind: input, shape index: {}]
  %s3 = inlined_call_operand.vmem [shape: bf16[32,128], index: 3, kind: input, shape index: {}]
  %s4 = inlined_call_operand.vmem [shape: bf16[32,128], index: 4, kind: output, shape index: {}]
  %s5 = sld [smem:[#allocation0]]
  $region34: #{vqvae_forward.25} parent=0
    _
  %s7 = ssub.s32 1, %s5
  %s8 = scalar_select 0, %s7, %s5
  // Predicated region
  $region2: #{vqvae_forward.25} parent=0 // pred_check
    _
  $region3: #{vqvae_forward.25} parent=0 // pred_check_branch
    %10 = sbr.rel (0) target = $region5
  $region4: #{vqvae_forward.25} parent=0 // pred_region
    _
  $region5: #{vqvae_forward.25} parent=0 // pred_fallthru
    _
  // Predicated region
  $region6: #{vqvae_forward.25} parent=0 // pred_check
    _
  $region7: #{vqvae_forward.25} parent=0 // pred_check_branch
    %12 = sbr.rel (0) target = $region9
  $region8: #{vqvae_forward.25} parent=0 // pred_region
    _
  $region9: #{vqvae_forward.25} parent=0 // pred_fallthru
    _
  // Predicated region
  $region10: #{vqvae_forward.25} parent=0 // pred_check
    _
  $region11: #{vqvae_forward.25} parent=0 // pred_check_branch
    %14 = sbr.rel (0) target = $region13
  $region12: #{vqvae_forward.25} parent=0 // pred_region
    _
  $region13: #{vqvae_forward.25} parent=0 // pred_fallthru
    _
  // Predicated region
  $region14: #{vqvae_forward.25} parent=0 // pred_check
    _
  $region15: #{vqvae_forward.25} parent=0 // pred_check_branch
    %16 = sbr.rel (0) target = $region17
  $region16: #{vqvae_forward.25} parent=0 // pred_region
    _
  $region17: #{vqvae_forward.25} parent=0 // pred_fallthru
    _
  %p18 = scmp.eq.s32.totalorder 0, 0
  // Predicated region
  $region18: #{vqvae_forward.25} parent=0 // pred_check
    %p19 = pneg %p18
  $region19: #{vqvae_forward.25} parent=0 // pred_check_branch
    %21 = sbr.rel (%p19) target = $region21
  $region20: #{vqvae_forward.25} parent=0 // pred_region
    %22 = vst [vmem:[#allocation2] sm:$0xff] 0.0
    %23 = vst [vmem:[#allocation2 + $0x8] sm:$0xff] 0.0
    %24 = vst [vmem:[#allocation2 + $0x10] sm:$0xff] 0.0
    %25 = vst [vmem:[#allocation2 + $0x18] sm:$0xff] 0.0
  $region21: #{vqvae_forward.25} parent=0 // pred_fallthru
    _
  %v26 = vld [vmem:[#allocation2] sm:$0xff]
  %v27 = vld [vmem:[#allocation2 + $0x8] sm:$0xff]
  %v28 = vld [vmem:[#allocation2 + $0x10] sm:$0xff]
  %v29 = vld [vmem:[#allocation2 + $0x18] sm:$0xff]
  %v30 = vld [vmem:[%s0] sm:$0xf]
  %v31 = vld [vmem:[%s0 + $0x4] sm:$0xf]
  %v32 = vld [vmem:[%s0 + $0x8] sm:$0xf]
  %v33 = vld [vmem:[%s0 + $0xc] sm:$0xf]
  %v34 = vld [vmem:[%s1] sm:$0xf]
  %v35 = vld [vmem:[%s1 + $0x4] sm:$0xf]
  %v36 = vld [vmem:[%s1 + $0x8] sm:$0xf]
  %v37 = vld [vmem:[%s1 + $0xc] sm:$0xf]
  %v38 = vld [vmem:[%s1 + $0x10] sm:$0xf]
  %v39 = vld [vmem:[%s1 + $0x14] sm:$0xf]
  %v40 = vld [vmem:[%s1 + $0x18] sm:$0xf]
  %v41 = vld [vmem:[%s1 + $0x1c] sm:$0xf]
  %v42 = vld [vmem:[%s1 + $0x20] sm:$0xf]
  %v43 = vld [vmem:[%s1 + $0x24] sm:$0xf]
  %v44 = vld [vmem:[%s1 + $0x28] sm:$0xf]
  %v45 = vld [vmem:[%s1 + $0x2c] sm:$0xf]
  %v46 = vld [vmem:[%s1 + $0x30] sm:$0xf]
  %v47 = vld [vmem:[%s1 + $0x34] sm:$0xf]
  %v48 = vld [vmem:[%s1 + $0x38] sm:$0xf]
  %v49 = vld [vmem:[%s1 + $0x3c] sm:$0xf]
  %v54 = vunpack.c.l.b16 %v30
  %v55 = vunpack.c.l.b16 %v31
  %v56 = vunpack.c.l.b16 %v32
  %v57 = vunpack.c.l.b16 %v33
  %v58 = vpack.c.b16 %v55, %v54
  %v59 = vpack.c.b16 %v57, %v56
  %v78 = vunpack.c.l.b16 %v34
  %v79 = vunpack.c.l.b16 %v35
  %v80 = vunpack.c.l.b16 %v36
  %v81 = vunpack.c.l.b16 %v37
  %v82 = vunpack.c.l.b16 %v38
  %v83 = vunpack.c.l.b16 %v39
  %v84 = vunpack.c.l.b16 %v40
  %v85 = vunpack.c.l.b16 %v41
  %v86 = vunpack.c.l.b16 %v42
  %v87 = vunpack.c.l.b16 %v43
  %v88 = vunpack.c.l.b16 %v44
  %v89 = vunpack.c.l.b16 %v45
  %v90 = vunpack.c.l.b16 %v46
  %v91 = vunpack.c.l.b16 %v47
  %v92 = vunpack.c.l.b16 %v48
  %v93 = vunpack.c.l.b16 %v49
  %v94 = vpack.c.b16 %v79, %v78
  %v95 = vpack.c.b16 %v81, %v80
  %v96 = vpack.c.b16 %v83, %v82
  %v97 = vpack.c.b16 %v85, %v84
  %v98 = vpack.c.b16 %v87, %v86
  %v99 = vpack.c.b16 %v89, %v88
  %v100 = vpack.c.b16 %v91, %v90
  %v101 = vpack.c.b16 %v93, %v92
  %110 = vmatprep.subr.bf16.mxu0 0
  %111 = vmatpush1.bf16.msra.mxu0 %v94
  %112 = vmatprep.subr.bf16.mxu0 0
  %113 = vmatpush1.bf16.msra.mxu0 %v95
  %114 = vmatprep.subr.bf16.mxu0 0
  %115 = vmatpush1.bf16.msra.mxu0 %v96
  %116 = vmatprep.subr.bf16.mxu0 0
  %117 = vmatpush1.bf16.msra.mxu0 %v97
  %118 = vmatprep.subr.bf16.mxu0 0
  %119 = vmatpush1.bf16.msra.mxu0 %v98
  %120 = vmatprep.subr.bf16.mxu0 0
  %121 = vmatpush1.bf16.msra.mxu0 %v99
  %122 = vmatprep.subr.bf16.mxu0 0
  %123 = vmatpush1.bf16.msra.mxu0 %v100
  %124 = vmatprep.subr.bf16.mxu0 0
  %125 = vmatpush1.bf16.msra.mxu0 %v101
  %126 = vmatprep.subr.bf16.mxu0 0
  %127 = vmatpush1.bf16.msra.mxu0 0
  %128 = vmatprep.subr.bf16.mxu0 0
  %129 = vmatpush1.bf16.msra.mxu0 0
  %130 = vmatprep.subr.bf16.mxu0 0
  %131 = vmatpush1.bf16.msra.mxu0 0
  %132 = vmatprep.subr.bf16.mxu0 0
  %133 = vmatpush1.bf16.msra.mxu0 0
  %134 = vmatprep.subr.bf16.mxu0 0
  %135 = vmatpush1.bf16.msra.mxu0 0
  %136 = vmatprep.subr.bf16.mxu0 0
  %137 = vmatpush1.bf16.msra.mxu0 0
  %138 = vmatprep.subr.bf16.mxu0 0
  %139 = vmatpush1.bf16.msra.mxu0 0
  %140 = vmatprep.subr.bf16.mxu0 0
  %141 = vmatpush1.bf16.msra.mxu0 0
  %142 = vmatprep.mubr.bf16.mxu0 0
  %143 = vmatmul.mubr.bf16.gmra.mrb[0].mxu0 %v58
  %v144 = vpop.f32.mrb[0].mxu0
  %v145 = vadd.f32 0.0, %v144
  %v146 = vpop.f32.mrb[0].mxu0
  %v147 = vpop.f32.mrb[0].mxu0
  %v148 = vadd.f32 0.0, %v147
  %v149 = vpop.f32.mrb[0].mxu0
  %150 = vmatprep.mubr.bf16.mxu0 0
  %151 = vmatmul.mubr.bf16.gmra.mrb[0].mxu0 %v59
  %v152 = vpop.f32.mrb[0].mxu0
  %v153 = vadd.f32 0.0, %v152
  %v154 = vpop.f32.mrb[0].mxu0
  %v155 = vpop.f32.mrb[0].mxu0
  %v156 = vadd.f32 0.0, %v155
  %v157 = vpop.f32.mrb[0].mxu0
  %158 = vdwg.mxu0
  %v159 = vadd.f32 %v26, %v145
  %v160 = vadd.f32 %v27, %v148
  %v161 = vadd.f32 %v28, %v153
  %v162 = vadd.f32 %v29, %v156
  %163 = vst [vmem:[#allocation2] sm:$0xff] %v159
  %164 = vst [vmem:[#allocation2 + $0x8] sm:$0xff] %v160
  %165 = vst [vmem:[#allocation2 + $0x10] sm:$0xff] %v161
  %166 = vst [vmem:[#allocation2 + $0x18] sm:$0xff] %v162
  // Predicated region
  $region22: #{vqvae_forward.25} parent=0 // pred_check
    %p167 = pneg %p18
  $region23: #{vqvae_forward.25} parent=0 // pred_check_branch
    %169 = sbr.rel (%p167) target = $region25
  $region24: #{vqvae_forward.25} parent=0 // pred_region
    %v170 = vld [vmem:[#allocation2] sm:$0xff]
    %v171 = vld [vmem:[#allocation2 + $0x8] sm:$0xff]
    %v172 = vld [vmem:[#allocation2 + $0x10] sm:$0xff]
    %v173 = vld [vmem:[#allocation2 + $0x18] sm:$0xff]
    %v174 = vld [vmem:[%s2] sm:$0x1]
    %v176 = vlaneseq
    %v177 = vshrl.u32 %v176, 7
    %v178 = vsub.s32 0, %v177
    %v179 = vrot.slane %v174, %v178
    %v181 = vadd.f32 %v170, %v179
    %v182 = vadd.f32 %v171, %v179
    %v183 = vadd.f32 %v172, %v179
    %v184 = vadd.f32 %v173, %v179
    %v185 = vld [vmem:[%s3] sm:$0xf]
    %v186 = vld [vmem:[%s3 + $0x4] sm:$0xf]
    %v187 = vld [vmem:[%s3 + $0x8] sm:$0xf]
    %v188 = vld [vmem:[%s3 + $0xc] sm:$0xf]
    %v189 = vunpack.c.l.bf16 %v185
    %v190 = vunpack.c.l.bf16 %v186
    %v191 = vunpack.c.l.bf16 %v187
    %v192 = vunpack.c.l.bf16 %v188
    %v193 = vadd.f32 %v181, %v189
    %v194 = vadd.f32 %v182, %v190
    %v195 = vadd.f32 %v183, %v191
    %v196 = vadd.f32 %v184, %v192
    %v197 = vpack.c.bf16 %v194, %v193
    %v198 = vpack.c.bf16 %v196, %v195
    %v201 = vunpack.c.l.b16 %v197
    %v202 = vunpack.c.h.b16 %v197
    %v203 = vunpack.c.l.b16 %v198
    %v204 = vunpack.c.h.b16 %v198
    %v205 = vpack.c.b16 %v201, %v201
    %v206 = vpack.c.b16 %v202, %v202
    %v207 = vpack.c.b16 %v203, %v203
    %v208 = vpack.c.b16 %v204, %v204
    %213 = vst [vmem:[%s4] sm:$0xf] %v205
    %214 = vst [vmem:[%s4 + $0x4] sm:$0xf] %v206
    %215 = vst [vmem:[%s4 + $0x8] sm:$0xf] %v207
    %216 = vst [vmem:[%s4 + $0xc] sm:$0xf] %v208
  $region25: #{vqvae_forward.25} parent=0 // pred_fallthru
    _
  // Predicated region
  $region26: #{vqvae_forward.25} parent=0 // pred_check
    _
  $region27: #{vqvae_forward.25} parent=0 // pred_check_branch
    %218 = sbr.rel (0) target = $region29
  $region28: #{vqvae_forward.25} parent=0 // pred_region
    _
  $region29: #{vqvae_forward.25} parent=0 // pred_fallthru
    _
  // Predicated region
  $region30: #{vqvae_forward.25} parent=0 // pred_check
    _
  $region31: #{vqvae_forward.25} parent=0 // pred_check_branch
    %220 = sbr.rel (0) target = $region33
  $region32: #{vqvae_forward.25} parent=0 // pred_region
    _
  $region33: #{vqvae_forward.25} parent=0 // pred_fallthru
    _

// kernel: vqvae_forward.28
$region0: #{vqvae_forward.28}
  #allocation0 [shape = 'u32[]', space=smem, size = 0x4, offset = 0x4, fixed_abs, tag = 'smem constant byte address 0x4 - core index']
  #allocation1 [shape = 'u32[144,128]{1,0:T(1,128)}', space=vmem, size = 0x12000, scoped, tag = 'internal scratch']
  %s0 = inlined_call_operand.vmem [shape: bf16[32,128], index: 0, kind: input, shape index: {}]
  %s1 = inlined_call_operand.vmem [shape: bf16[128,128], index: 1, kind: input, shape index: {}]
  %s2 = inlined_call_operand.vmem [shape: f32[1,128], index: 2, kind: input, shape index: {}]
  %s3 = inlined_call_operand.vmem [shape: f32[128,128], index: 3, kind: input, shape index: {}]
  %s4 = inlined_call_operand.vmem [shape: f32[1,128], index: 4, kind: input, shape index: {}]
  %s5 = inlined_call_operand.vmem [shape: bf16[32,128], index: 5, kind: output, shape index: {0}]
  %s6 = inlined_call_operand.hbm [shape: f32[1,1], index: 6, kind: output, shape index: {1}]
  %7 = xla_tuple %s5, %s6
  %s8 = sld [smem:[#allocation0]]
  $region42: #{vqvae_forward.28} parent=0
    _
  %s10 = ssub.s32 1, %s8
  %s11 = scalar_select 0, %s10, %s8
  $region1: #{vqvae_forward.28} parent=0
    #allocation2 [shape = 'u8[512]{0}', space=vmem, size = 0x400, scoped, tag = 'output window, operand 1, single buffered']
    #allocation3 [shape = 's32[1]{0}', space=sflag, size = 0x4, scoped, tag = 'scoped memory for vqvae_forward.28']
    %12 = vsyncpa [#allocation3], 0
    // Predicated region
    $region2: #{vqvae_forward.28} parent=1 // pred_check
      _
    $region3: #{vqvae_forward.28} parent=1 // pred_check_branch
      %14 = sbr.rel (0) target = $region5
    $region4: #{vqvae_forward.28} parent=1 // pred_region
      _
    $region5: #{vqvae_forward.28} parent=1 // pred_fallthru
      _
    // Predicated region
    $region6: #{vqvae_forward.28} parent=1 // pred_check
      _
    $region7: #{vqvae_forward.28} parent=1 // pred_check_branch
      %16 = sbr.rel (0) target = $region9
    $region8: #{vqvae_forward.28} parent=1 // pred_region
      _
    $region9: #{vqvae_forward.28} parent=1 // pred_fallthru
      _
    // Predicated region
    $region10: #{vqvae_forward.28} parent=1 // pred_check
      _
    $region11: #{vqvae_forward.28} parent=1 // pred_check_branch
      %18 = sbr.rel (0) target = $region13
    $region12: #{vqvae_forward.28} parent=1 // pred_region
      _
    $region13: #{vqvae_forward.28} parent=1 // pred_fallthru
      _
    // Predicated region
    $region14: #{vqvae_forward.28} parent=1 // pred_check
      _
    $region15: #{vqvae_forward.28} parent=1 // pred_check_branch
      %20 = sbr.rel (0) target = $region17
    $region16: #{vqvae_forward.28} parent=1 // pred_region
      _
    $region17: #{vqvae_forward.28} parent=1 // pred_fallthru
      _
    // Predicated region
    $region18: #{vqvae_forward.28} parent=1 // pred_check
      _
    $region19: #{vqvae_forward.28} parent=1 // pred_check_branch
      %22 = sbr.rel (0) target = $region21
    $region20: #{vqvae_forward.28} parent=1 // pred_region
      _
    $region21: #{vqvae_forward.28} parent=1 // pred_fallthru
      _
    %v24 = vld [vmem:[%s0] sm:$0xf]
    %v25 = vld [vmem:[%s0 + $0x4] sm:$0xf]
    %v26 = vld [vmem:[%s0 + $0x8] sm:$0xf]
    %v27 = vld [vmem:[%s0 + $0xc] sm:$0xf]
    %v28 = vld [vmem:[%s1] sm:$0xf]
    %v29 = vld [vmem:[%s1 + $0x4] sm:$0xf]
    %v30 = vld [vmem:[%s1 + $0x8] sm:$0xf]
    %v31 = vld [vmem:[%s1 + $0xc] sm:$0xf]
    %v32 = vld [vmem:[%s1 + $0x10] sm:$0xf]
    %v33 = vld [vmem:[%s1 + $0x14] sm:$0xf]
    %v34 = vld [vmem:[%s1 + $0x18] sm:$0xf]
    %v35 = vld [vmem:[%s1 + $0x1c] sm:$0xf]
    %v36 = vld [vmem:[%s1 + $0x20] sm:$0xf]
    %v37 = vld [vmem:[%s1 + $0x24] sm:$0xf]
    %v38 = vld [vmem:[%s1 + $0x28] sm:$0xf]
    %v39 = vld [vmem:[%s1 + $0x2c] sm:$0xf]
    %v40 = vld [vmem:[%s1 + $0x30] sm:$0xf]
    %v41 = vld [vmem:[%s1 + $0x34] sm:$0xf]
    %v42 = vld [vmem:[%s1 + $0x38] sm:$0xf]
    %v43 = vld [vmem:[%s1 + $0x3c] sm:$0xf]
    %v44 = vld [vmem:[%s2] sm:$0x1]
    %v46 = vlaneseq
    %v47 = vshrl.u32 %v46, 7
    %v48 = vsub.s32 0, %v47
    %v49 = vrot.slane %v44, %v48
    %v55 = vunpack.c.l.b16 %v24
    %v56 = vunpack.c.l.b16 %v25
    %v57 = vunpack.c.l.b16 %v26
    %v58 = vunpack.c.l.b16 %v27
    %v59 = vpack.c.b16 %v56, %v55
    %v60 = vpack.c.b16 %v58, %v57
    %v79 = vunpack.c.l.b16 %v28
    %v80 = vunpack.c.l.b16 %v29
    %v81 = vunpack.c.l.b16 %v30
    %v82 = vunpack.c.l.b16 %v31
    %v83 = vunpack.c.l.b16 %v32
    %v84 = vunpack.c.l.b16 %v33
    %v85 = vunpack.c.l.b16 %v34
    %v86 = vunpack.c.l.b16 %v35
    %v87 = vunpack.c.l.b16 %v36
    %v88 = vunpack.c.l.b16 %v37
    %v89 = vunpack.c.l.b16 %v38
    %v90 = vunpack.c.l.b16 %v39
    %v91 = vunpack.c.l.b16 %v40
    %v92 = vunpack.c.l.b16 %v41
    %v93 = vunpack.c.l.b16 %v42
    %v94 = vunpack.c.l.b16 %v43
    %v95 = vpack.c.b16 %v80, %v79
    %v96 = vpack.c.b16 %v82, %v81
    %v97 = vpack.c.b16 %v84, %v83
    %v98 = vpack.c.b16 %v86, %v85
    %v99 = vpack.c.b16 %v88, %v87
    %v100 = vpack.c.b16 %v90, %v89
    %v101 = vpack.c.b16 %v92, %v91
    %v102 = vpack.c.b16 %v94, %v93
    %111 = vmatprep.subr.bf16.mxu0 0
    %112 = vmatpush1.bf16.msra.mxu0 %v95
    %113 = vmatprep.subr.bf16.mxu0 0
    %114 = vmatpush1.bf16.msra.mxu0 %v96
    %115 = vmatprep.subr.bf16.mxu0 0
    %116 = vmatpush1.bf16.msra.mxu0 %v97
    %117 = vmatprep.subr.bf16.mxu0 0
    %118 = vmatpush1.bf16.msra.mxu0 %v98
    %119 = vmatprep.subr.bf16.mxu0 0
    %120 = vmatpush1.bf16.msra.mxu0 %v99
    %121 = vmatprep.subr.bf16.mxu0 0
    %122 = vmatpush1.bf16.msra.mxu0 %v100
    %123 = vmatprep.subr.bf16.mxu0 0
    %124 = vmatpush1.bf16.msra.mxu0 %v101
    %125 = vmatprep.subr.bf16.mxu0 0
    %126 = vmatpush1.bf16.msra.mxu0 %v102
    %127 = vmatprep.subr.bf16.mxu0 0
    %128 = vmatpush1.bf16.msra.mxu0 0
    %129 = vmatprep.subr.bf16.mxu0 0
    %130 = vmatpush1.bf16.msra.mxu0 0
    %131 = vmatprep.subr.bf16.mxu0 0
    %132 = vmatpush1.bf16.msra.mxu0 0
    %133 = vmatprep.subr.bf16.mxu0 0
    %134 = vmatpush1.bf16.msra.mxu0 0
    %135 = vmatprep.subr.bf16.mxu0 0
    %136 = vmatpush1.bf16.msra.mxu0 0
    %137 = vmatprep.subr.bf16.mxu0 0
    %138 = vmatpush1.bf16.msra.mxu0 0
    %139 = vmatprep.subr.bf16.mxu0 0
    %140 = vmatpush1.bf16.msra.mxu0 0
    %141 = vmatprep.subr.bf16.mxu0 0
    %142 = vmatpush1.bf16.msra.mxu0 0
    %143 = vmatprep.mubr.bf16.mxu0 0
    %144 = vmatmul.mubr.bf16.gmra.mrb[0].mxu0 %v59
    %v145 = vpop.f32.mrb[0].mxu0
    %v146 = vadd.f32 %v49, %v145
    %v147 = vpop.f32.mrb[0].mxu0
    %v148 = vpop.f32.mrb[0].mxu0
    %v149 = vadd.f32 %v49, %v148
    %v150 = vpop.f32.mrb[0].mxu0
    %151 = vmatprep.mubr.bf16.mxu0 0
    %152 = vmatmul.mubr.bf16.gmra.mrb[0].mxu0 %v60
    %v153 = vpop.f32.mrb[0].mxu0
    %v154 = vadd.f32 %v49, %v153
    %v155 = vpop.f32.mrb[0].mxu0
    %v156 = vpop.f32.mrb[0].mxu0
    %v157 = vadd.f32 %v49, %v156
    %v158 = vpop.f32.mrb[0].mxu0
    %159 = vdwg.mxu0
    %v160 = vld [vmem:[%s3] sm:$0xff]
    %v161 = vld [vmem:[%s3 + $0x8] sm:$0xff]
    %v162 = vld [vmem:[%s3 + $0x10] sm:$0xff]
    %v163 = vld [vmem:[%s3 + $0x18] sm:$0xff]
    %v164 = vld [vmem:[%s3 + $0x20] sm:$0xff]
    %v165 = vld [vmem:[%s3 + $0x28] sm:$0xff]
    %v166 = vld [vmem:[%s3 + $0x30] sm:$0xff]
    %v167 = vld [vmem:[%s3 + $0x38] sm:$0xff]
    %v168 = vld [vmem:[%s3 + $0x40] sm:$0xff]
    %v169 = vld [vmem:[%s3 + $0x48] sm:$0xff]
    %v170 = vld [vmem:[%s3 + $0x50] sm:$0xff]
    %v171 = vld [vmem:[%s3 + $0x58] sm:$0xff]
    %v172 = vld [vmem:[%s3 + $0x60] sm:$0xff]
    %v173 = vld [vmem:[%s3 + $0x68] sm:$0xff]
    %v174 = vld [vmem:[%s3 + $0x70] sm:$0xff]
    %v175 = vld [vmem:[%s3 + $0x78] sm:$0xff]
    %176 = vmatprep.subr.mxu0 0.0
    %177 = vmatpush1.xpose.msra.mxu0 %v160
    %178 = vmatprep.subr.mxu0 0.0
    %179 = vmatpush1.xpose.msra.mxu0 %v161
    %180 = vmatprep.subr.mxu0 0.0
    %181 = vmatpush1.xpose.msra.mxu0 %v162
    %182 = vmatprep.subr.mxu0 0.0
    %183 = vmatpush1.xpose.msra.mxu0 %v163
    %184 = vmatprep.subr.mxu0 0.0
    %185 = vmatpush1.xpose.msra.mxu0 %v164
    %186 = vmatprep.subr.mxu0 0.0
    %187 = vmatpush1.xpose.msra.mxu0 %v165
    %188 = vmatprep.subr.mxu0 0.0
    %189 = vmatpush1.xpose.msra.mxu0 %v166
    %190 = vmatprep.subr.mxu0 0.0
    %191 = vmatpush1.xpose.msra.mxu0 %v167
    %192 = vmatprep.subr.mxu0 0.0
    %193 = vmatpush1.xpose.msra.mxu0 %v168
    %194 = vmatprep.subr.mxu0 0.0
    %195 = vmatpush1.xpose.msra.mxu0 %v169
    %196 = vmatprep.subr.mxu0 0.0
    %197 = vmatpush1.xpose.msra.mxu0 %v170
    %198 = vmatprep.subr.mxu0 0.0
    %199 = vmatpush1.xpose.msra.mxu0 %v171
    %200 = vmatprep.subr.mxu0 0.0
    %201 = vmatpush1.xpose.msra.mxu0 %v172
    %202 = vmatprep.subr.mxu0 0.0
    %203 = vmatpush1.xpose.msra.mxu0 %v173
    %204 = vmatprep.subr.mxu0 0.0
    %205 = vmatpush1.xpose.msra.mxu0 %v174
    %206 = vmatprep.subr.mxu0 0.0
    %207 = vmatpush1.xpose.msra.mxu0 %v175
    %208 = vmatprep.subr.mxu0 0.0
    %209 = vmatpush1.xpose.msra.mxu0 0.0
    %210 = vmatprep.subr.mxu0 0.0
    %211 = vmatpush1.xpose.msra.mxu0 0.0
    %212 = vmatprep.subr.mxu0 0.0
    %213 = vmatpush1.xpose.msra.mxu0 0.0
    %214 = vmatprep.subr.mxu0 0.0
    %215 = vmatpush1.xpose.msra.mxu0 0.0
    %216 = vmatprep.subr.mxu0 0.0
    %217 = vmatpush1.xpose.msra.mxu0 0.0
    %218 = vmatprep.subr.mxu0 0.0
    %219 = vmatpush1.xpose.msra.mxu0 0.0
    %220 = vmatprep.subr.mxu0 0.0
    %221 = vmatpush1.xpose.msra.mxu0 0.0
    %222 = vmatprep.subr.mxu0 0.0
    %223 = vmatpush1.xpose.msra.mxu0 0.0
    %224 = vmatprep.subr.mxu0 0.0
    %225 = vmatpush1.xpose.msra.mxu0 0.0
    %226 = vmatprep.subr.mxu0 0.0
    %227 = vmatpush1.xpose.msra.mxu0 0.0
    %228 = vmatprep.subr.mxu0 0.0
    %229 = vmatpush1.xpose.msra.mxu0 0.0
    %230 = vmatprep.subr.mxu0 0.0
    %231 = vmatpush1.xpose.msra.mxu0 0.0
    %232 = vmatprep.subr.mxu0 0.0
    %233 = vmatpush1.xpose.msra.mxu0 0.0
    %234 = vmatprep.subr.mxu0 0.0
    %235 = vmatpush1.xpose.msra.mxu0 0.0
    %236 = vmatprep.subr.mxu0 0.0
    %237 = vmatpush1.xpose.msra.mxu0 0.0
    %238 = vmatprep.subr.mxu0 0.0
    %239 = vmatpush1.xpose.msra.mxu0 0.0
    %240 = vmatprep.mubr.f32.mxu0 0.0
    %241 = vmatmul.mubr.f32.gmra.mrb[0].mxu0 %v146
    %v242 = vpop.f32.mrb[0].mxu0
    %v243 = vadd.f32 0.0, %v242
    %v244 = vpop.f32.mrb[0].mxu0
    %245 = vmatprep.mubr.f32.mxu0 0.0
    %246 = vmatmul.mubr.f32.gmra.mrb[0].mxu0 %v149
    %v247 = vpop.f32.mrb[0].mxu0
    %v248 = vadd.f32 0.0, %v247
    %v249 = vpop.f32.mrb[0].mxu0
    %250 = vmatprep.mubr.f32.mxu0 0.0
    %251 = vmatmul.mubr.f32.gmra.mrb[0].mxu0 %v154
    %v252 = vpop.f32.mrb[0].mxu0
    %v253 = vadd.f32 0.0, %v252
    %v254 = vpop.f32.mrb[0].mxu0
    %255 = vmatprep.mubr.f32.mxu0 0.0
    %256 = vmatmul.mubr.f32.gmra.mrb[0].mxu0 %v157
    %v257 = vpop.f32.mrb[0].mxu0
    %v258 = vadd.f32 0.0, %v257
    %v259 = vpop.f32.mrb[0].mxu0
    %260 = vdwg.mxu0
    %v261 = vld [vmem:[%s4] sm:$0x1]
    %v262 = vmul.f32 %v243, 2.0
    %v263 = vmul.f32 %v248, 2.0
    %v264 = vmul.f32 %v253, 2.0
    %v265 = vmul.f32 %v258, 2.0
    %v267 = vlaneseq
    %v268 = vshrl.u32 %v267, 7
    %v269 = vsub.s32 0, %v268
    %v270 = vrot.slane %v261, %v269
    %v272 = vsub.f32 %v270, %v262
    %v273 = vsub.f32 %v270, %v263
    %v274 = vsub.f32 %v270, %v264
    %v275 = vsub.f32 %v270, %v265
    %v276 = vlaneseq
    %v277 = vand.u32 %v276, 127
    %278 = vmin.xlane.f32.xlu0 %v272
    %v279 = vpop.xlane.xlu0 %278
    %280 = vmin.xlane.f32.xlu0 %v273
    %v281 = vpop.xlane.xlu0 %280
    %282 = vmin.xlane.f32.xlu0 %v274
    %v283 = vpop.xlane.xlu0 %282
    %284 = vmin.xlane.f32.xlu0 %v275
    %v285 = vpop.xlane.xlu0 %284
    %vm286 = vcmp.le.f32.partialorder %v272, %v279
    %vm287 = vcmp.le.f32.partialorder %v273, %v281
    %vm288 = vcmp.le.f32.partialorder %v274, %v283
    %vm289 = vcmp.le.f32.partialorder %v275, %v285
    %v290 = vsel %vm286, %v277, 128
    %v291 = vsel %vm287, %v277, 128
    %v292 = vsel %vm288, %v277, 128
    %v293 = vsel %vm289, %v277, 128
    %v294 = vand.u32 %v290, 65535
    %v295 = vshra.s32 %v290, 16
    %v296 = vcvt.s32.f32 %v294
    %v297 = vcvt.s32.f32 %v295
    %298 = vmin.xlane.f32.xlu0 %v297
    %v299 = vpop.xlane.xlu0 %298
    %vm300 = vcmp.eq.f32.partialorder %v297, %v299
    %v301 = vsel %vm300, %v296, inf
    %302 = vmin.xlane.f32.xlu0 %v301
    %v303 = vpop.xlane.xlu0 %302
    %v304 = vcvt.f32.s32 %v303
    %v305 = vcvt.f32.s32 %v299
    %v306 = vshll.u32 %v305, 16
    %v307 = vadd.s32 %v306, %v304
    %v308 = vand.u32 %v291, 65535
    %v309 = vshra.s32 %v291, 16
    %v310 = vcvt.s32.f32 %v308
    %v311 = vcvt.s32.f32 %v309
    %312 = vmin.xlane.f32.xlu0 %v311
    %v313 = vpop.xlane.xlu0 %312
    %vm314 = vcmp.eq.f32.partialorder %v311, %v313
    %v315 = vsel %vm314, %v310, inf
    %316 = vmin.xlane.f32.xlu0 %v315
    %v317 = vpop.xlane.xlu0 %316
    %v318 = vcvt.f32.s32 %v317
    %v319 = vcvt.f32.s32 %v313
    %v320 = vshll.u32 %v319, 16
    %v321 = vadd.s32 %v320, %v318
    %v322 = vand.u32 %v292, 65535
    %v323 = vshra.s32 %v292, 16
    %v324 = vcvt.s32.f32 %v322
    %v325 = vcvt.s32.f32 %v323
    %326 = vmin.xlane.f32.xlu0 %v325
    %v327 = vpop.xlane.xlu0 %326
    %vm328 = vcmp.eq.f32.partialorder %v325, %v327
    %v329 = vsel %vm328, %v324, inf
    %330 = vmin.xlane.f32.xlu0 %v329
    %v331 = vpop.xlane.xlu0 %330
    %v332 = vcvt.f32.s32 %v331
    %v333 = vcvt.f32.s32 %v327
    %v334 = vshll.u32 %v333, 16
    %v335 = vadd.s32 %v334, %v332
    %v336 = vand.u32 %v293, 65535
    %v337 = vshra.s32 %v293, 16
    %v338 = vcvt.s32.f32 %v336
    %v339 = vcvt.s32.f32 %v337
    %340 = vmin.xlane.f32.xlu0 %v339
    %v341 = vpop.xlane.xlu0 %340
    %vm342 = vcmp.eq.f32.partialorder %v339, %v341
    %v343 = vsel %vm342, %v338, inf
    %344 = vmin.xlane.f32.xlu0 %v343
    %v345 = vpop.xlane.xlu0 %344
    %v346 = vcvt.f32.s32 %v345
    %v347 = vcvt.f32.s32 %v341
    %v348 = vshll.u32 %v347, 16
    %v349 = vadd.s32 %v348, %v346
    %vm350 = vcmp.eq.s32.totalorder %v277, %v307
    %vm351 = vcmp.eq.s32.totalorder %v277, %v321
    %vm352 = vcmp.eq.s32.totalorder %v277, %v335
    %vm353 = vcmp.eq.s32.totalorder %v277, %v349
    %v354 = vsel %vm350, 1, 0
    %v355 = vsel %vm351, 1, 0
    %v356 = vsel %vm352, 1, 0
    %v357 = vsel %vm353, 1, 0
    %v358 = vcvt.s32.f32 %v354
    %v359 = vcvt.s32.f32 %v355
    %v360 = vcvt.s32.f32 %v356
    %v361 = vcvt.s32.f32 %v357
    %362 = vmatprep.subr.mxu0 0.0
    %363 = vmatpush1.msra.mxu0 %v160
    %364 = vmatprep.subr.mxu0 0.0
    %365 = vmatpush1.msra.mxu0 %v161
    %366 = vmatprep.subr.mxu0 0.0
    %367 = vmatpush1.msra.mxu0 %v162
    %368 = vmatprep.subr.mxu0 0.0
    %369 = vmatpush1.msra.mxu0 %v163
    %370 = vmatprep.subr.mxu0 0.0
    %371 = vmatpush1.msra.mxu0 %v164
    %372 = vmatprep.subr.mxu0 0.0
    %373 = vmatpush1.msra.mxu0 %v165
    %374 = vmatprep.subr.mxu0 0.0
    %375 = vmatpush1.msra.mxu0 %v166
    %376 = vmatprep.subr.mxu0 0.0
    %377 = vmatpush1.msra.mxu0 %v167
    %378 = vmatprep.subr.mxu0 0.0
    %379 = vmatpush1.msra.mxu0 %v168
    %380 = vmatprep.subr.mxu0 0.0
    %381 = vmatpush1.msra.mxu0 %v169
    %382 = vmatprep.subr.mxu0 0.0
    %383 = vmatpush1.msra.mxu0 %v170
    %384 = vmatprep.subr.mxu0 0.0
    %385 = vmatpush1.msra.mxu0 %v171
    %386 = vmatprep.subr.mxu0 0.0
    %387 = vmatpush1.msra.mxu0 %v172
    %388 = vmatprep.subr.mxu0 0.0
    %389 = vmatpush1.msra.mxu0 %v173
    %390 = vmatprep.subr.mxu0 0.0
    %391 = vmatpush1.msra.mxu0 %v174
    %392 = vmatprep.subr.mxu0 0.0
    %393 = vmatpush1.msra.mxu0 %v175
    %394 = vmatprep.subr.mxu0 0.0
    %395 = vmatpush1.msra.mxu0 0.0
    %396 = vmatprep.subr.mxu0 0.0
    %397 = vmatpush1.msra.mxu0 0.0
    %398 = vmatprep.subr.mxu0 0.0
    %399 = vmatpush1.msra.mxu0 0.0
    %400 = vmatprep.subr.mxu0 0.0
    %401 = vmatpush1.msra.mxu0 0.0
    %402 = vmatprep.subr.mxu0 0.0
    %403 = vmatpush1.msra.mxu0 0.0
    %404 = vmatprep.subr.mxu0 0.0
    %405 = vmatpush1.msra.mxu0 0.0
    %406 = vmatprep.subr.mxu0 0.0
    %407 = vmatpush1.msra.mxu0 0.0
    %408 = vmatprep.subr.mxu0 0.0
    %409 = vmatpush1.msra.mxu0 0.0
    %410 = vmatprep.subr.mxu0 0.0
    %411 = vmatpush1.msra.mxu0 0.0
    %412 = vmatprep.subr.mxu0 0.0
    %413 = vmatpush1.msra.mxu0 0.0
    %414 = vmatprep.subr.mxu0 0.0
    %415 = vmatpush1.msra.mxu0 0.0
    %416 = vmatprep.subr.mxu0 0.0
    %417 = vmatpush1.msra.mxu0 0.0
    %418 = vmatprep.subr.mxu0 0.0
    %419 = vmatpush1.msra.mxu0 0.0
    %420 = vmatprep.subr.mxu0 0.0
    %421 = vmatpush1.msra.mxu0 0.0
    %422 = vmatprep.subr.mxu0 0.0
    %423 = vmatpush1.msra.mxu0 0.0
    %424 = vmatprep.subr.mxu0 0.0
    %425 = vmatpush1.msra.mxu0 0.0
    %426 = vmatprep.mubr.f32.mxu0 0.0
    %427 = vmatmul.mubr.f32.gmra.mrb[0].mxu0 %v358
    %v428 = vpop.f32.mrb[0].mxu0
    %v429 = vadd.f32 0.0, %v428
    %v430 = vpop.f32.mrb[0].mxu0
    %431 = vmatprep.mubr.f32.mxu0 0.0
    %432 = vmatmul.mubr.f32.gmra.mrb[0].mxu0 %v359
    %v433 = vpop.f32.mrb[0].mxu0
    %v434 = vadd.f32 0.0, %v433
    %v435 = vpop.f32.mrb[0].mxu0
    %436 = vmatprep.mubr.f32.mxu0 0.0
    %437 = vmatmul.mubr.f32.gmra.mrb[0].mxu0 %v360
    %v438 = vpop.f32.mrb[0].mxu0
    %v439 = vadd.f32 0.0, %v438
    %v440 = vpop.f32.mrb[0].mxu0
    %441 = vmatprep.mubr.f32.mxu0 0.0
    %442 = vmatmul.mubr.f32.gmra.mrb[0].mxu0 %v361
    %v443 = vpop.f32.mrb[0].mxu0
    %v444 = vadd.f32 0.0, %v443
    %v445 = vpop.f32.mrb[0].mxu0
    %446 = vdwg.mxu0
    %v447 = vpack.c.bf16 %v434, %v429
    %v448 = vpack.c.bf16 %v444, %v439
    %v451 = vunpack.c.l.b16 %v447
    %v452 = vunpack.c.h.b16 %v447
    %v453 = vunpack.c.l.b16 %v448
    %v454 = vunpack.c.h.b16 %v448
    %v455 = vpack.c.b16 %v451, %v451
    %v456 = vpack.c.b16 %v452, %v452
    %v457 = vpack.c.b16 %v453, %v453
    %v458 = vpack.c.b16 %v454, %v454
    %463 = vst [vmem:[%s5] sm:$0xf] %v455
    %464 = vst [vmem:[%s5 + $0x4] sm:$0xf] %v456
    %465 = vst [vmem:[%s5 + $0x8] sm:$0xf] %v457
    %466 = vst [vmem:[%s5 + $0xc] sm:$0xf] %v458
    %s467 = smul.u32 0, 32
    %v468 = vlaneseq
    %v469 = vshrl.u32 %v468, 7
    %v470 = vadd.s32 %v469, 8
    %v471 = vadd.s32 %v469, 16
    %v472 = vadd.s32 %v469, 24
    %v473 = vstv %s467
    %v474 = vadd.s32 %v473, %v469
    %v475 = vadd.s32 %v473, %v470
    %v476 = vadd.s32 %v473, %v471
    %v477 = vadd.s32 %v473, %v472
    %vm478 = vcmp.lt.s32.totalorder %v474, 32
    %vm479 = vcmp.lt.s32.totalorder %v475, 32
    %vm480 = vcmp.lt.s32.totalorder %v476, 32
    %vm481 = vcmp.lt.s32.totalorder %v477, 32
    %v482 = vsel %vm478, 1, 0
    %v483 = vsel %vm479, 1, 0
    %v484 = vsel %vm480, 1, 0
    %v485 = vsel %vm481, 1, 0
    %v486 = vcvt.s32.f32 %v482
    %v487 = vcvt.s32.f32 %v483
    %v488 = vcvt.s32.f32 %v484
    %v489 = vcvt.s32.f32 %v485
    %v490 = vsub.f32 %v429, %v146
    %v491 = vsub.f32 %v434, %v149
    %v492 = vsub.f32 %v439, %v154
    %v493 = vsub.f32 %v444, %v157
    %v494 = vmul.f32 %v490, %v490
    %v495 = vmul.f32 %v491, %v491
    %v496 = vmul.f32 %v492, %v492
    %v497 = vmul.f32 %v493, %v493
    %v498 = vmul.f32 %v494, %v486
    %v499 = vmul.f32 %v495, %v487
    %v500 = vmul.f32 %v496, %v488
    %v501 = vmul.f32 %v497, %v489
    %v502 = vadd.f32 %v498, %v499
    %v503 = vadd.f32 %v502, %v500
    %v504 = vadd.f32 %v503, %v501
    %505 = vadd.xlane.f32.xlu0 %v504
    %v506 = vpop.xlane.xlu0 %505
    %v507 = vrot.slane %v506, 4
    %v508 = vadd.f32 %v506, %v507
    %v509 = vrot.slane %v508, 2
    %v510 = vadd.f32 %v508, %v509
    %v511 = vrot.slane %v510, 1
    %v512 = vadd.f32 %v510, %v511
    %s513 = vtos %v512
    %p514 = scmp.eq.s32.totalorder 0, 0
    // Predicated region
    $region22: #{vqvae_forward.28} parent=1 // pred_check
      %p515 = pneg %p514
    $region23: #{vqvae_forward.28} parent=1 // pred_check_branch
      %517 = sbr.rel (%p515) target = $region25
    $region24: #{vqvae_forward.28} parent=1 // pred_region
      %vm518 = vcmask 0
      %519 = vst.msk [vmem:[#allocation2] sm:$0x1] %vm518, 0.0
    $region25: #{vqvae_forward.28} parent=1 // pred_fallthru
      _
    %v520 = vld [vmem:[#allocation2] sm:$0x1]
    %v521 = vstv %s513
    %v522 = vadd.f32 %v520, %v521
    %vm523 = vcmask 0
    %524 = vst.msk [vmem:[#allocation2] sm:$0x1] %vm523, %v522
    // Predicated region
    $region26: #{vqvae_forward.28} parent=1 // pred_check
      _
    $region27: #{vqvae_forward.28} parent=1 // pred_check_branch
      %526 = sbr.rel (0) target = $region29
    $region28: #{vqvae_forward.28} parent=1 // pred_region
      _
    $region29: #{vqvae_forward.28} parent=1 // pred_fallthru
      _
    // Predicated region
    $region30: #{vqvae_forward.28} parent=1 // pred_check
      _
    $region31: #{vqvae_forward.28} parent=1 // pred_check_branch
      %528 = sbr.rel (0) target = $region33
    $region32: #{vqvae_forward.28} parent=1 // pred_region
      %s530 = ssub.s32 16, 16
      %531 = vsyncadd [#allocation3], %s530
      %s533 = sshll.u32 [#allocation2], 4
      %s534 = int_to_ptr.vmem [resolvable:$true] %s533
      %536 = dma.vmem_to_hbm [thread:$0]  %s534, 16, %s6, [#allocation3]
    $region33: #{vqvae_forward.28} parent=1 // pred_fallthru
      _
    // Predicated region
    $region34: #{vqvae_forward.28} parent=1 // pred_check
      _
    $region35: #{vqvae_forward.28} parent=1 // pred_check_branch
      %538 = sbr.rel (0) target = $region37
    $region36: #{vqvae_forward.28} parent=1 // pred_region
      _
    $region37: #{vqvae_forward.28} parent=1 // pred_fallthru
      _
    // Predicated region
    $region38: #{vqvae_forward.28} parent=1 // pred_check
      _
    $region39: #{vqvae_forward.28} parent=1 // pred_check_branch
      %540 = sbr.rel (0) target = $region41
    $region40: #{vqvae_forward.28} parent=1 // pred_region
      %541 = dma.done [#allocation3], 16
    $region41: #{vqvae_forward.28} parent=1 // pred_fallthru
      _
    %542 = vsyncpa [#allocation3], 1

// kernel: vqvae_forward.38
$region0: #{vqvae_forward.38}
  #allocation0 [shape = 'u32[]', space=smem, size = 0x4, offset = 0x4, fixed_abs, tag = 'smem constant byte address 0x4 - core index']
  #allocation1 [shape = 'u32[144,128]{1,0:T(1,128)}', space=vmem, size = 0x12000, scoped, tag = 'internal scratch']
  #allocation2 [shape = 'f32[128,128]{1,0:T(8,128)}', space=vmem, size = 0x10000, scoped, tag = 'scratch operand']
  %s0 = inlined_call_operand.vmem [shape: bf16[128,128], index: 0, kind: input, shape index: {}]
  %s1 = inlined_call_operand.vmem [shape: bf16[128,128], index: 1, kind: input, shape index: {}]
  %s2 = inlined_call_operand.vmem [shape: f32[1,128], index: 2, kind: input, shape index: {}]
  %s3 = inlined_call_operand.vmem [shape: bf16[128,128], index: 3, kind: output, shape index: {}]
  %s4 = sld [smem:[#allocation0]]
  $region30: #{vqvae_forward.38} parent=0
    _
  %s6 = ssub.s32 1, %s4
  %s7 = scalar_select 0, %s6, %s4
  // Predicated region
  $region2: #{vqvae_forward.38} parent=0 // pred_check
    _
  $region3: #{vqvae_forward.38} parent=0 // pred_check_branch
    %9 = sbr.rel (0) target = $region5
  $region4: #{vqvae_forward.38} parent=0 // pred_region
    _
  $region5: #{vqvae_forward.38} parent=0 // pred_fallthru
    _
  // Predicated region
  $region6: #{vqvae_forward.38} parent=0 // pred_check
    _
  $region7: #{vqvae_forward.38} parent=0 // pred_check_branch
    %11 = sbr.rel (0) target = $region9
  $region8: #{vqvae_forward.38} parent=0 // pred_region
    _
  $region9: #{vqvae_forward.38} parent=0 // pred_fallthru
    _
  // Predicated region
  $region10: #{vqvae_forward.38} parent=0 // pred_check
    _
  $region11: #{vqvae_forward.38} parent=0 // pred_check_branch
    %13 = sbr.rel (0) target = $region13
  $region12: #{vqvae_forward.38} parent=0 // pred_region
    _
  $region13: #{vqvae_forward.38} parent=0 // pred_fallthru
    _
  %p15 = scmp.eq.s32.totalorder 0, 0
  // Predicated region
  $region14: #{vqvae_forward.38} parent=0 // pred_check
    %p16 = pneg %p15
  $region15: #{vqvae_forward.38} parent=0 // pred_check_branch
    %18 = sbr.rel (%p16) target = $region17
  $region16: #{vqvae_forward.38} parent=0 // pred_region
    %19 = vst [vmem:[#allocation2] sm:$0xff] 0.0
    %20 = vst [vmem:[#allocation2 + $0x8] sm:$0xff] 0.0
    %21 = vst [vmem:[#allocation2 + $0x10] sm:$0xff] 0.0
    %22 = vst [vmem:[#allocation2 + $0x18] sm:$0xff] 0.0
    %23 = vst [vmem:[#allocation2 + $0x20] sm:$0xff] 0.0
    %24 = vst [vmem:[#allocation2 + $0x28] sm:$0xff] 0.0
    %25 = vst [vmem:[#allocation2 + $0x30] sm:$0xff] 0.0
    %26 = vst [vmem:[#allocation2 + $0x38] sm:$0xff] 0.0
    %27 = vst [vmem:[#allocation2 + $0x40] sm:$0xff] 0.0
    %28 = vst [vmem:[#allocation2 + $0x48] sm:$0xff] 0.0
    %29 = vst [vmem:[#allocation2 + $0x50] sm:$0xff] 0.0
    %30 = vst [vmem:[#allocation2 + $0x58] sm:$0xff] 0.0
    %31 = vst [vmem:[#allocation2 + $0x60] sm:$0xff] 0.0
    %32 = vst [vmem:[#allocation2 + $0x68] sm:$0xff] 0.0
    %33 = vst [vmem:[#allocation2 + $0x70] sm:$0xff] 0.0
    %34 = vst [vmem:[#allocation2 + $0x78] sm:$0xff] 0.0
  $region17: #{vqvae_forward.38} parent=0 // pred_fallthru
    _
  %v35 = vld [vmem:[#allocation2] sm:$0xff]
  %v36 = vld [vmem:[#allocation2 + $0x8] sm:$0xff]
  %v37 = vld [vmem:[#allocation2 + $0x10] sm:$0xff]
  %v38 = vld [vmem:[#allocation2 + $0x18] sm:$0xff]
  %v39 = vld [vmem:[#allocation2 + $0x20] sm:$0xff]
  %v40 = vld [vmem:[#allocation2 + $0x28] sm:$0xff]
  %v41 = vld [vmem:[#allocation2 + $0x30] sm:$0xff]
  %v42 = vld [vmem:[#allocation2 + $0x38] sm:$0xff]
  %v43 = vld [vmem:[#allocation2 + $0x40] sm:$0xff]
  %v44 = vld [vmem:[#allocation2 + $0x48] sm:$0xff]
  %v45 = vld [vmem:[#allocation2 + $0x50] sm:$0xff]
  %v46 = vld [vmem:[#allocation2 + $0x58] sm:$0xff]
  %v47 = vld [vmem:[#allocation2 + $0x60] sm:$0xff]
  %v48 = vld [vmem:[#allocation2 + $0x68] sm:$0xff]
  %v49 = vld [vmem:[#allocation2 + $0x70] sm:$0xff]
  %v50 = vld [vmem:[#allocation2 + $0x78] sm:$0xff]
  %v51 = vld [vmem:[%s0] sm:$0xf]
  %v52 = vld [vmem:[%s0 + $0x4] sm:$0xf]
  %v53 = vld [vmem:[%s0 + $0x8] sm:$0xf]
  %v54 = vld [vmem:[%s0 + $0xc] sm:$0xf]
  %v55 = vld [vmem:[%s0 + $0x10] sm:$0xf]
  %v56 = vld [vmem:[%s0 + $0x14] sm:$0xf]
  %v57 = vld [vmem:[%s0 + $0x18] sm:$0xf]
  %v58 = vld [vmem:[%s0 + $0x1c] sm:$0xf]
  %v59 = vld [vmem:[%s0 + $0x20] sm:$0xf]
  %v60 = vld [vmem:[%s0 + $0x24] sm:$0xf]
  %v61 = vld [vmem:[%s0 + $0x28] sm:$0xf]
  %v62 = vld [vmem:[%s0 + $0x2c] sm:$0xf]
  %v63 = vld [vmem:[%s0 + $0x30] sm:$0xf]
  %v64 = vld [vmem:[%s0 + $0x34] sm:$0xf]
  %v65 = vld [vmem:[%s0 + $0x38] sm:$0xf]
  %v66 = vld [vmem:[%s0 + $0x3c] sm:$0xf]
  %v67 = vld [vmem:[%s1] sm:$0xf]
  %v68 = vld [vmem:[%s1 + $0x4] sm:$0xf]
  %v69 = vld [vmem:[%s1 + $0x8] sm:$0xf]
  %v70 = vld [vmem:[%s1 + $0xc] sm:$0xf]
  %v71 = vld [vmem:[%s1 + $0x10] sm:$0xf]
  %v72 = vld [vmem:[%s1 + $0x14] sm:$0xf]
  %v73 = vld [vmem:[%s1 + $0x18] sm:$0xf]
  %v74 = vld [vmem:[%s1 + $0x1c] sm:$0xf]
  %v75 = vld [vmem:[%s1 + $0x20] sm:$0xf]
  %v76 = vld [vmem:[%s1 + $0x24] sm:$0xf]
  %v77 = vld [vmem:[%s1 + $0x28] sm:$0xf]
  %v78 = vld [vmem:[%s1 + $0x2c] sm:$0xf]
  %v79 = vld [vmem:[%s1 + $0x30] sm:$0xf]
  %v80 = vld [vmem:[%s1 + $0x34] sm:$0xf]
  %v81 = vld [vmem:[%s1 + $0x38] sm:$0xf]
  %v82 = vld [vmem:[%s1 + $0x3c] sm:$0xf]
  %v99 = vunpack.c.l.b16 %v51
  %v100 = vunpack.c.l.b16 %v52
  %v101 = vunpack.c.l.b16 %v53
  %v102 = vunpack.c.l.b16 %v54
  %v103 = vunpack.c.l.b16 %v55
  %v104 = vunpack.c.l.b16 %v56
  %v105 = vunpack.c.l.b16 %v57
  %v106 = vunpack.c.l.b16 %v58
  %v107 = vunpack.c.l.b16 %v59
  %v108 = vunpack.c.l.b16 %v60
  %v109 = vunpack.c.l.b16 %v61
  %v110 = vunpack.c.l.b16 %v62
  %v111 = vunpack.c.l.b16 %v63
  %v112 = vunpack.c.l.b16 %v64
  %v113 = vunpack.c.l.b16 %v65
  %v114 = vunpack.c.l.b16 %v66
  %v115 = vpack.c.b16 %v100, %v99
  %v116 = vpack.c.b16 %v102, %v101
  %v117 = vpack.c.b16 %v104, %v103
  %v118 = vpack.c.b16 %v106, %v105
  %v119 = vpack.c.b16 %v108, %v107
  %v120 = vpack.c.b16 %v110, %v109
  %v121 = vpack.c.b16 %v112, %v111
  %v122 = vpack.c.b16 %v114, %v113
  %v147 = vunpack.c.l.b16 %v67
  %v148 = vunpack.c.l.b16 %v68
  %v149 = vunpack.c.l.b16 %v69
  %v150 = vunpack.c.l.b16 %v70
  %v151 = vunpack.c.l.b16 %v71
  %v152 = vunpack.c.l.b16 %v72
  %v153 = vunpack.c.l.b16 %v73
  %v154 = vunpack.c.l.b16 %v74
  %v155 = vunpack.c.l.b16 %v75
  %v156 = vunpack.c.l.b16 %v76
  %v157 = vunpack.c.l.b16 %v77
  %v158 = vunpack.c.l.b16 %v78
  %v159 = vunpack.c.l.b16 %v79
  %v160 = vunpack.c.l.b16 %v80
  %v161 = vunpack.c.l.b16 %v81
  %v162 = vunpack.c.l.b16 %v82
  %v163 = vpack.c.b16 %v148, %v147
  %v164 = vpack.c.b16 %v150, %v149
  %v165 = vpack.c.b16 %v152, %v151
  %v166 = vpack.c.b16 %v154, %v153
  %v167 = vpack.c.b16 %v156, %v155
  %v168 = vpack.c.b16 %v158, %v157
  %v169 = vpack.c.b16 %v160, %v159
  %v170 = vpack.c.b16 %v162, %v161
  %179 = vmatprep.subr.bf16.mxu0 0
  %180 = vmatpush1.bf16.msra.mxu0 %v163
  %181 = vmatprep.subr.bf16.mxu0 0
  %182 = vmatpush1.bf16.msra.mxu0 %v164
  %183 = vmatprep.subr.bf16.mxu0 0
  %184 = vmatpush1.bf16.msra.mxu0 %v165
  %185 = vmatprep.subr.bf16.mxu0 0
  %186 = vmatpush1.bf16.msra.mxu0 %v166
  %187 = vmatprep.subr.bf16.mxu0 0
  %188 = vmatpush1.bf16.msra.mxu0 %v167
  %189 = vmatprep.subr.bf16.mxu0 0
  %190 = vmatpush1.bf16.msra.mxu0 %v168
  %191 = vmatprep.subr.bf16.mxu0 0
  %192 = vmatpush1.bf16.msra.mxu0 %v169
  %193 = vmatprep.subr.bf16.mxu0 0
  %194 = vmatpush1.bf16.msra.mxu0 %v170
  %195 = vmatprep.subr.bf16.mxu0 0
  %196 = vmatpush1.bf16.msra.mxu0 0
  %197 = vmatprep.subr.bf16.mxu0 0
  %198 = vmatpush1.bf16.msra.mxu0 0
  %199 = vmatprep.subr.bf16.mxu0 0
  %200 = vmatpush1.bf16.msra.mxu0 0
  %201 = vmatprep.subr.bf16.mxu0 0
  %202 = vmatpush1.bf16.msra.mxu0 0
  %203 = vmatprep.subr.bf16.mxu0 0
  %204 = vmatpush1.bf16.msra.mxu0 0
  %205 = vmatprep.subr.bf16.mxu0 0
  %206 = vmatpush1.bf16.msra.mxu0 0
  %207 = vmatprep.subr.bf16.mxu0 0
  %208 = vmatpush1.bf16.msra.mxu0 0
  %209 = vmatprep.subr.bf16.mxu0 0
  %210 = vmatpush1.bf16.msra.mxu0 0
  %211 = vmatprep.mubr.bf16.mxu0 0
  %212 = vmatmul.mubr.bf16.gmra.mrb[0].mxu0 %v115
  %v213 = vpop.f32.mrb[0].mxu0
  %v214 = vadd.f32 0.0, %v213
  %v215 = vpop.f32.mrb[0].mxu0
  %v216 = vpop.f32.mrb[0].mxu0
  %v217 = vadd.f32 0.0, %v216
  %v218 = vpop.f32.mrb[0].mxu0
  %219 = vmatprep.mubr.bf16.mxu0 0
  %220 = vmatmul.mubr.bf16.gmra.mrb[0].mxu0 %v116
  %v221 = vpop.f32.mrb[0].mxu0
  %v222 = vadd.f32 0.0, %v221
  %v223 = vpop.f32.mrb[0].mxu0
  %v224 = vpop.f32.mrb[0].mxu0
  %v225 = vadd.f32 0.0, %v224
  %v226 = vpop.f32.mrb[0].mxu0
  %227 = vmatprep.mubr.bf16.mxu0 0
  %228 = vmatmul.mubr.bf16.gmra.mrb[0].mxu0 %v117
  %v229 = vpop.f32.mrb[0].mxu0
  %v230 = vadd.f32 0.0, %v229
  %v231 = vpop.f32.mrb[0].mxu0
  %v232 = vpop.f32.mrb[0].mxu0
  %v233 = vadd.f32 0.0, %v232
  %v234 = vpop.f32.mrb[0].mxu0
  %235 = vmatprep.mubr.bf16.mxu0 0
  %236 = vmatmul.mubr.bf16.gmra.mrb[0].mxu0 %v118
  %v237 = vpop.f32.mrb[0].mxu0
  %v238 = vadd.f32 0.0, %v237
  %v239 = vpop.f32.mrb[0].mxu0
  %v240 = vpop.f32.mrb[0].mxu0
  %v241 = vadd.f32 0.0, %v240
  %v242 = vpop.f32.mrb[0].mxu0
  %243 = vmatprep.mubr.bf16.mxu0 0
  %244 = vmatmul.mubr.bf16.gmra.mrb[0].mxu0 %v119
  %v245 = vpop.f32.mrb[0].mxu0
  %v246 = vadd.f32 0.0, %v245
  %v247 = vpop.f32.mrb[0].mxu0
  %v248 = vpop.f32.mrb[0].mxu0
  %v249 = vadd.f32 0.0, %v248
  %v250 = vpop.f32.mrb[0].mxu0
  %251 = vmatprep.mubr.bf16.mxu0 0
  %252 = vmatmul.mubr.bf16.gmra.mrb[0].mxu0 %v120
  %v253 = vpop.f32.mrb[0].mxu0
  %v254 = vadd.f32 0.0, %v253
  %v255 = vpop.f32.mrb[0].mxu0
  %v256 = vpop.f32.mrb[0].mxu0
  %v257 = vadd.f32 0.0, %v256
  %v258 = vpop.f32.mrb[0].mxu0
  %259 = vmatprep.mubr.bf16.mxu0 0
  %260 = vmatmul.mubr.bf16.gmra.mrb[0].mxu0 %v121
  %v261 = vpop.f32.mrb[0].mxu0
  %v262 = vadd.f32 0.0, %v261
  %v263 = vpop.f32.mrb[0].mxu0
  %v264 = vpop.f32.mrb[0].mxu0
  %v265 = vadd.f32 0.0, %v264
  %v266 = vpop.f32.mrb[0].mxu0
  %267 = vmatprep.mubr.bf16.mxu0 0
  %268 = vmatmul.mubr.bf16.gmra.mrb[0].mxu0 %v122
  %v269 = vpop.f32.mrb[0].mxu0
  %v270 = vadd.f32 0.0, %v269
  %v271 = vpop.f32.mrb[0].mxu0
  %v272 = vpop.f32.mrb[0].mxu0
  %v273 = vadd.f32 0.0, %v272
  %v274 = vpop.f32.mrb[0].mxu0
  %275 = vdwg.mxu0
  %v276 = vadd.f32 %v35, %v214
  %v277 = vadd.f32 %v36, %v217
  %v278 = vadd.f32 %v37, %v222
  %v279 = vadd.f32 %v38, %v225
  %v280 = vadd.f32 %v39, %v230
  %v281 = vadd.f32 %v40, %v233
  %v282 = vadd.f32 %v41, %v238
  %v283 = vadd.f32 %v42, %v241
  %v284 = vadd.f32 %v43, %v246
  %v285 = vadd.f32 %v44, %v249
  %v286 = vadd.f32 %v45, %v254
  %v287 = vadd.f32 %v46, %v257
  %v288 = vadd.f32 %v47, %v262
  %v289 = vadd.f32 %v48, %v265
  %v290 = vadd.f32 %v49, %v270
  %v291 = vadd.f32 %v50, %v273
  %292 = vst [vmem:[#allocation2] sm:$0xff] %v276
  %293 = vst [vmem:[#allocation2 + $0x8] sm:$0xff] %v277
  %294 = vst [vmem:[#allocation2 + $0x10] sm:$0xff] %v278
  %295 = vst [vmem:[#allocation2 + $0x18] sm:$0xff] %v279
  %296 = vst [vmem:[#allocation2 + $0x20] sm:$0xff] %v280
  %297 = vst [vmem:[#allocation2 + $0x28] sm:$0xff] %v281
  %298 = vst [vmem:[#allocation2 + $0x30] sm:$0xff] %v282
  %299 = vst [vmem:[#allocation2 + $0x38] sm:$0xff] %v283
  %300 = vst [vmem:[#allocation2 + $0x40] sm:$0xff] %v284
  %301 = vst [vmem:[#allocation2 + $0x48] sm:$0xff] %v285
  %302 = vst [vmem:[#allocation2 + $0x50] sm:$0xff] %v286
  %303 = vst [vmem:[#allocation2 + $0x58] sm:$0xff] %v287
  %304 = vst [vmem:[#allocation2 + $0x60] sm:$0xff] %v288
  %305 = vst [vmem:[#allocation2 + $0x68] sm:$0xff] %v289
  %306 = vst [vmem:[#allocation2 + $0x70] sm:$0xff] %v290
  %307 = vst [vmem:[#allocation2 + $0x78] sm:$0xff] %v291
  // Predicated region
  $region18: #{vqvae_forward.38} parent=0 // pred_check
    %p308 = pneg %p15
  $region19: #{vqvae_forward.38} parent=0 // pred_check_branch
    %310 = sbr.rel (%p308) target = $region21
  $region20: #{vqvae_forward.38} parent=0 // pred_region
    %v311 = vld [vmem:[#allocation2] sm:$0xff]
    %v312 = vld [vmem:[#allocation2 + $0x8] sm:$0xff]
    %v313 = vld [vmem:[#allocation2 + $0x10] sm:$0xff]
    %v314 = vld [vmem:[#allocation2 + $0x18] sm:$0xff]
    %v315 = vld [vmem:[#allocation2 + $0x20] sm:$0xff]
    %v316 = vld [vmem:[#allocation2 + $0x28] sm:$0xff]
    %v317 = vld [vmem:[#allocation2 + $0x30] sm:$0xff]
    %v318 = vld [vmem:[#allocation2 + $0x38] sm:$0xff]
    %v319 = vld [vmem:[#allocation2 + $0x40] sm:$0xff]
    %v320 = vld [vmem:[#allocation2 + $0x48] sm:$0xff]
    %v321 = vld [vmem:[#allocation2 + $0x50] sm:$0xff]
    %v322 = vld [vmem:[#allocation2 + $0x58] sm:$0xff]
    %v323 = vld [vmem:[#allocation2 + $0x60] sm:$0xff]
    %v324 = vld [vmem:[#allocation2 + $0x68] sm:$0xff]
    %v325 = vld [vmem:[#allocation2 + $0x70] sm:$0xff]
    %v326 = vld [vmem:[#allocation2 + $0x78] sm:$0xff]
    %v327 = vld [vmem:[%s2] sm:$0x1]
    %v329 = vlaneseq
    %v330 = vshrl.u32 %v329, 7
    %v331 = vsub.s32 0, %v330
    %v332 = vrot.slane %v327, %v331
    %v334 = vadd.f32 %v311, %v332
    %v335 = vadd.f32 %v312, %v332
    %v336 = vadd.f32 %v313, %v332
    %v337 = vadd.f32 %v314, %v332
    %v338 = vadd.f32 %v315, %v332
    %v339 = vadd.f32 %v316, %v332
    %v340 = vadd.f32 %v317, %v332
    %v341 = vadd.f32 %v318, %v332
    %v342 = vadd.f32 %v319, %v332
    %v343 = vadd.f32 %v320, %v332
    %v344 = vadd.f32 %v321, %v332
    %v345 = vadd.f32 %v322, %v332
    %v346 = vadd.f32 %v323, %v332
    %v347 = vadd.f32 %v324, %v332
    %v348 = vadd.f32 %v325, %v332
    %v349 = vadd.f32 %v326, %v332
    %v350 = vxor.u32 %v334, 2147483648
    %v351 = vxor.u32 %v335, 2147483648
    %v352 = vxor.u32 %v336, 2147483648
    %v353 = vxor.u32 %v337, 2147483648
    %v354 = vxor.u32 %v338, 2147483648
    %v355 = vxor.u32 %v339, 2147483648
    %v356 = vxor.u32 %v340, 2147483648
    %v357 = vxor.u32 %v341, 2147483648
    %v358 = vxor.u32 %v342, 2147483648
    %v359 = vxor.u32 %v343, 2147483648
    %v360 = vxor.u32 %v344, 2147483648
    %v361 = vxor.u32 %v345, 2147483648
    %v362 = vxor.u32 %v346, 2147483648
    %v363 = vxor.u32 %v347, 2147483648
    %v364 = vxor.u32 %v348, 2147483648
    %v365 = vxor.u32 %v349, 2147483648
    %v366 = vmul.f32 %v350, 1.442695
    %v367 = vpow.pop %v366
    %v368 = vmul.f32 %v351, 1.442695
    %v369 = vpow.pop %v368
    %v370 = vmul.f32 %v352, 1.442695
    %v371 = vpow.pop %v370
    %v372 = vmul.f32 %v353, 1.442695
    %v373 = vpow.pop %v372
    %v374 = vmul.f32 %v354, 1.442695
    %v375 = vpow.pop %v374
    %v376 = vmul.f32 %v355, 1.442695
    %v377 = vpow.pop %v376
    %v378 = vmul.f32 %v356, 1.442695
    %v379 = vpow.pop %v378
    %v380 = vmul.f32 %v357, 1.442695
    %v381 = vpow.pop %v380
    %v382 = vmul.f32 %v358, 1.442695
    %v383 = vpow.pop %v382
    %v384 = vmul.f32 %v359, 1.442695
    %v385 = vpow.pop %v384
    %v386 = vmul.f32 %v360, 1.442695
    %v387 = vpow.pop %v386
    %v388 = vmul.f32 %v361, 1.442695
    %v389 = vpow.pop %v388
    %v390 = vmul.f32 %v362, 1.442695
    %v391 = vpow.pop %v390
    %v392 = vmul.f32 %v363, 1.442695
    %v393 = vpow.pop %v392
    %v394 = vmul.f32 %v364, 1.442695
    %v395 = vpow.pop %v394
    %v396 = vmul.f32 %v365, 1.442695
    %v397 = vpow.pop %v396
    %v398 = vadd.f32 %v367, 1.0
    %v399 = vadd.f32 %v369, 1.0
    %v400 = vadd.f32 %v371, 1.0
    %v401 = vadd.f32 %v373, 1.0
    %v402 = vadd.f32 %v375, 1.0
    %v403 = vadd.f32 %v377, 1.0
    %v404 = vadd.f32 %v379, 1.0
    %v405 = vadd.f32 %v381, 1.0
    %v406 = vadd.f32 %v383, 1.0
    %v407 = vadd.f32 %v385, 1.0
    %v408 = vadd.f32 %v387, 1.0
    %v409 = vadd.f32 %v389, 1.0
    %v410 = vadd.f32 %v391, 1.0
    %v411 = vadd.f32 %v393, 1.0
    %v412 = vadd.f32 %v395, 1.0
    %v413 = vadd.f32 %v397, 1.0
    %v414 = vrcp.pop %v398
    %v415 = vmul.f32 1.0, %v414
    %v416 = vrcp.pop %v399
    %v417 = vmul.f32 1.0, %v416
    %v418 = vrcp.pop %v400
    %v419 = vmul.f32 1.0, %v418
    %v420 = vrcp.pop %v401
    %v421 = vmul.f32 1.0, %v420
    %v422 = vrcp.pop %v402
    %v423 = vmul.f32 1.0, %v422
    %v424 = vrcp.pop %v403
    %v425 = vmul.f32 1.0, %v424
    %v426 = vrcp.pop %v404
    %v427 = vmul.f32 1.0, %v426
    %v428 = vrcp.pop %v405
    %v429 = vmul.f32 1.0, %v428
    %v430 = vrcp.pop %v406
    %v431 = vmul.f32 1.0, %v430
    %v432 = vrcp.pop %v407
    %v433 = vmul.f32 1.0, %v432
    %v434 = vrcp.pop %v408
    %v435 = vmul.f32 1.0, %v434
    %v436 = vrcp.pop %v409
    %v437 = vmul.f32 1.0, %v436
    %v438 = vrcp.pop %v410
    %v439 = vmul.f32 1.0, %v438
    %v440 = vrcp.pop %v411
    %v441 = vmul.f32 1.0, %v440
    %v442 = vrcp.pop %v412
    %v443 = vmul.f32 1.0, %v442
    %v444 = vrcp.pop %v413
    %v445 = vmul.f32 1.0, %v444
    %v446 = vpack.c.bf16 %v417, %v415
    %v447 = vpack.c.bf16 %v421, %v419
    %v448 = vpack.c.bf16 %v425, %v423
    %v449 = vpack.c.bf16 %v429, %v427
    %v450 = vpack.c.bf16 %v433, %v431
    %v451 = vpack.c.bf16 %v437, %v435
    %v452 = vpack.c.bf16 %v441, %v439
    %v453 = vpack.c.bf16 %v445, %v443
    %v462 = vunpack.c.l.b16 %v446
    %v463 = vunpack.c.h.b16 %v446
    %v464 = vunpack.c.l.b16 %v447
    %v465 = vunpack.c.h.b16 %v447
    %v466 = vunpack.c.l.b16 %v448
    %v467 = vunpack.c.h.b16 %v448
    %v468 = vunpack.c.l.b16 %v449
    %v469 = vunpack.c.h.b16 %v449
    %v470 = vunpack.c.l.b16 %v450
    %v471 = vunpack.c.h.b16 %v450
    %v472 = vunpack.c.l.b16 %v451
    %v473 = vunpack.c.h.b16 %v451
    %v474 = vunpack.c.l.b16 %v452
    %v475 = vunpack.c.h.b16 %v452
    %v476 = vunpack.c.l.b16 %v453
    %v477 = vunpack.c.h.b16 %v453
    %v478 = vpack.c.b16 %v462, %v462
    %v479 = vpack.c.b16 %v463, %v463
    %v480 = vpack.c.b16 %v464, %v464
    %v481 = vpack.c.b16 %v465, %v465
    %v482 = vpack.c.b16 %v466, %v466
    %v483 = vpack.c.b16 %v467, %v467
    %v484 = vpack.c.b16 %v468, %v468
    %v485 = vpack.c.b16 %v469, %v469
    %v486 = vpack.c.b16 %v470, %v470
    %v487 = vpack.c.b16 %v471, %v471
    %v488 = vpack.c.b16 %v472, %v472
    %v489 = vpack.c.b16 %v473, %v473
    %v490 = vpack.c.b16 %v474, %v474
    %v491 = vpack.c.b16 %v475, %v475
    %v492 = vpack.c.b16 %v476, %v476
    %v493 = vpack.c.b16 %v477, %v477
    %510 = vst [vmem:[%s3] sm:$0xf] %v478
    %511 = vst [vmem:[%s3 + $0x4] sm:$0xf] %v479
    %512 = vst [vmem:[%s3 + $0x8] sm:$0xf] %v480
    %513 = vst [vmem:[%s3 + $0xc] sm:$0xf] %v481
    %514 = vst [vmem:[%s3 + $0x10] sm:$0xf] %v482
    %515 = vst [vmem:[%s3 + $0x14] sm:$0xf] %v483
    %516 = vst [vmem:[%s3 + $0x18] sm:$0xf] %v484
    %517 = vst [vmem:[%s3 + $0x1c] sm:$0xf] %v485
    %518 = vst [vmem:[%s3 + $0x20] sm:$0xf] %v486
    %519 = vst [vmem:[%s3 + $0x24] sm:$0xf] %v487
    %520 = vst [vmem:[%s3 + $0x28] sm:$0xf] %v488
    %521 = vst [vmem:[%s3 + $0x2c] sm:$0xf] %v489
    %522 = vst [vmem:[%s3 + $0x30] sm:$0xf] %v490
    %523 = vst [vmem:[%s3 + $0x34] sm:$0xf] %v491
    %524 = vst [vmem:[%s3 + $0x38] sm:$0xf] %v492
    %525 = vst [vmem:[%s3 + $0x3c] sm:$0xf] %v493
  $region21: #{vqvae_forward.38} parent=0 // pred_fallthru
    _
  // Predicated region
  $region22: #{vqvae_forward.38} parent=0 // pred_check
    _
  $region23: #{vqvae_forward.38} parent=0 // pred_check_branch
    %527 = sbr.rel (0) target = $region25
  $region24: #{vqvae_forward.38} parent=0 // pred_region
    _
  $region25: #{vqvae_forward.38} parent=0 // pred_fallthru
    _
  // Predicated region
  $region26: #{vqvae_forward.38} parent=0 // pred_check
    _
  $region27: #{vqvae_forward.38} parent=0 // pred_check_branch
    %529 = sbr.rel (0) target = $region29
  $region28: #{vqvae_forward.38} parent=0 // pred_region
    _
  $region29: #{vqvae_forward.38} parent=0 // pred_fallthru
    _

</llo_original>
